<compile_context>
chip_gen: v6e
topology: v6e:2x2x1
jax: 0.10.0
libtpu: 0.0.40
codegen_flags: <defaults>
</compile_context>

<pallas_src>
import functools

import numpy as np
import jax
import jax.numpy as jnp
from jax import lax
from jax.experimental import pallas as pl
from jax.experimental.pallas import tpu as pltpu


def _npair_kernel(anc_ref, pos_ref, neg_ref, batch_hbm, out_ref,
                  batch_vmem, acc_ref, dma_sem, *,
                  num_tuples, num_negs, tuples_per_step, l2_weight, batch_rows):
    """grid = (core_split, tuple_tile).  Each step scores `tuples_per_step` tuples.

    Total loss (matches the PyTorch forward, rows scaled by 1/4):
      (1/T) * sum_t log(1 + sum_j exp(a_t . (n_tj - p_t)))
      + l2_weight * mean_b ||batch_b / 4||_2
    """
    core = pl.program_id(0)          # parallel split (both TCs on v7x)
    step = pl.program_id(1)          # tuple-tile index within this split
    f32 = jnp.float32
    TT = tuples_per_step
    B = batch_rows

    # ---- once per core: land the batch in VMEM (single-buffered); core 0 also
    # seeds the L2 regularizer, other cores start from 0. ----
    @pl.when(step == 0)
    def _init():
        cp = pltpu.make_async_copy(batch_hbm, batch_vmem, dma_sem)
        cp.start()
        cp.wait()
        b = batch_vmem[...].astype(f32)
        norms = jnp.sqrt(jnp.sum(b * b, axis=1, keepdims=True))           # (B, 1)
        # mean ||batch/4|| == 0.25 * mean ||batch||  (scale folded once);
        # PyTorch adds l2_weight*mean/T on each of T tuples -> total l2_weight*mean.
        l2_mean = jnp.sum(norms, axis=0, keepdims=True) * (0.25 / B)      # (1, 1)
        acc_ref[...] = jnp.where(core == 0, l2_weight * l2_mean, 0.0)

    # ---- MXU score tile for this block of TT tuples ----
    bm = batch_vmem[...]                                                  # (B, D) f32
    anc = anc_ref[...]                                                    # (TT, 1) i32
    pos = pos_ref[...]                                                    # (TT, 1) i32
    neg = neg_ref[...]                                                    # (TT, N) i32; pad = -1

    b_iota = lax.broadcasted_iota(jnp.int32, (TT, B), 1)

    # Anchor row gather on the MXU: onehot(TT,B) @ batch(B,D) -> A(TT,D).
    a_onehot = (b_iota == anc).astype(f32)
    a_rows = jnp.dot(a_onehot, bm, preferred_element_type=f32,
                     precision=lax.Precision.HIGHEST)

    # Raw score matrix S[t, b] = <batch[anc_t], batch[b]>  (contract on D).
    s_full = lax.dot_general(a_rows, bm, (((1,), (1,)), ((), ())),
                             preferred_element_type=f32,
                             precision=lax.Precision.HIGHEST)             # (TT, B)

    # Positive column per tuple: S[t, pos_t].
    p_onehot = (b_iota == pos).astype(f32)
    s_pos = jnp.sum(s_full * p_onehot, axis=1, keepdims=True)             # (TT, 1)

    # Negative lane mask: mask[t, b] = (b in negatives of tuple t); -1 pads never match.
    # num_negs is static and small; the compares stay in vregs (no stores).
    nmask = (b_iota == neg[:, 0:1])
    for j in range(1, num_negs):
        nmask = nmask | (b_iota == neg[:, j:j + 1])

    # z[t,b] = (a_t/4).((batch_b - p_t)/4) = (S - S_pos)/16, restricted to negatives.
    z = jnp.where(nmask, (s_full - s_pos) * (1.0 / 16.0), -jnp.inf)       # (TT, B)

    # Stable log(1 + sum_j exp z): fully-masked (padded) tuples give log(1) = 0.
    m = jnp.maximum(jnp.max(z, axis=1, keepdims=True), 0.0)               # (TT, 1)
    esum = jnp.sum(jnp.exp(z - m), axis=1, keepdims=True)                 # (TT, 1)
    terms = m + jnp.log(esum + jnp.exp(-m))                               # (TT, 1)

    acc_ref[...] = acc_ref[...] + (
        jnp.sum(terms, axis=0, keepdims=True) * (1.0 / num_tuples))

    # ---- per-core partial written once, into this core's 128-lane block ----
    @pl.when(step == pl.num_programs(1) - 1)
    def _finalize():
        lane = lax.broadcasted_iota(jnp.int32, (1, 128), 1)
        out_ref[...] = jnp.where(lane == 0, acc_ref[...], 0.0)


def npair_loss_pallas(batch, anchors, positives, negatives, l2_weight,
                      tuples_per_step=128, core_splits=2):
    batch = batch.astype(jnp.float32)
    B, D = batch.shape
    T, N = negatives.shape
    TT = tuples_per_step
    total_tiles = max(1, pl.cdiv(T, TT))
    steps_per_core = max(1, (total_tiles + core_splits - 1) // core_splits)
    t_pad = core_splits * steps_per_core * TT

    # Host-side index preprocessing: pad tuple tables (padded tuples have all
    # negatives = -1 so their lane mask is empty and they contribute 0).
    anc = jnp.zeros((t_pad, 1), jnp.int32).at[:T, 0].set(anchors.astype(jnp.int32))
    pos = jnp.zeros((t_pad, 1), jnp.int32).at[:T, 0].set(positives.astype(jnp.int32))
    neg = jnp.full((t_pad, N), -1, jnp.int32).at[:T].set(negatives.astype(jnp.int32))

    kernel = functools.partial(
        _npair_kernel, num_tuples=T, num_negs=N, tuples_per_step=TT,
        l2_weight=float(l2_weight), batch_rows=B)

    # VMEM budget from the actual footprint (resident batch copy + pipelined
    # index blocks + score-tile temporaries), clamped to a window that is safe
    # on every generation (v7x has only 64 MiB physical per TensorCore).
    footprint = (B * D * 4                      # resident batch copy (single-buffered)
                 + 2 * TT * (2 + N) * 4         # double-buffered index blocks
                 + 8 * TT * max(B, D) * 4       # score / one-hot / mask temporaries
                 + (1 << 16))
    vmem_limit = int(min(max(2 * footprint, 16 * 1024 * 1024), 48 * 1024 * 1024))

    def tup_map(c, s):
        return (c * steps_per_core + s, 0)

    out = pl.pallas_call(
        kernel,
        out_shape=jax.ShapeDtypeStruct((1, core_splits * 128), jnp.float32),
        grid_spec=pltpu.PrefetchScalarGridSpec(
            num_scalar_prefetch=0,
            grid=(core_splits, steps_per_core),
            in_specs=[
                pl.BlockSpec((TT, 1), tup_map),          # anchor indices
                pl.BlockSpec((TT, 1), tup_map),          # positive indices
                pl.BlockSpec((TT, N), tup_map),          # negative indices (-1 pad)
                pl.BlockSpec(memory_space=pl.ANY),       # batch stays in HBM; DMA'd once per core
            ],
            out_specs=pl.BlockSpec((1, 128), lambda c, s: (0, c)),
            scratch_shapes=[
                pltpu.VMEM((B, D), jnp.float32),         # persistent batch copy
                pltpu.VMEM((1, 1), jnp.float32),         # per-core loss accumulator
                pltpu.SemaphoreType.DMA(()),             # batch-load semaphore
            ],
        ),
        compiler_params=pltpu.CompilerParams(
            dimension_semantics=("parallel", "arbitrary"),
            vmem_limit_bytes=vmem_limit),
    )(anc, pos, neg, batch)
    # Per-core partials live in lanes 0 and 128; everything else is zero.
    return jnp.sum(out)


def npair_loss_ref(batch, anchors, positives, negatives, l2_weight):
    """Pure-JAX reference matching the PyTorch forward semantics."""
    b = batch.astype(jnp.float32) / 4.0
    a = b[anchors]                                              # (T, D)
    p = b[positives]                                            # (T, D)
    n = b[negatives]                                            # (T, N, D)
    s = jnp.sum(a[:, None, :] * (n - p[:, None, :]), axis=-1)   # (T, N)
    loss = jnp.mean(jnp.log(jnp.sum(jnp.exp(s), axis=1) + 1.0))
    loss = loss + l2_weight * jnp.mean(jnp.linalg.norm(b, axis=1))
    return loss


def synthetic_npair_batchminer(labels):
    """Deterministic stand-in for the 'npair' batchminer.

    For each class: anchor = 1st sample, positive = 2nd sample,
    negatives = the 3rd sample of every OTHER class.
    """
    labels = np.asarray(labels)
    classes = np.unique(labels)
    anchors, positives, negatives = [], [], []
    for c in classes:
        idxs = np.where(labels == c)[0]
        anchors.append(int(idxs[0]))
        positives.append(int(idxs[1]))
        negs = [int(np.where(labels == oc)[0][2]) for oc in classes if oc != c]
        negatives.append(negs)
    return anchors, positives, negatives


if __name__ == "__main__":
    # Small synthetic problem: 4 classes x 4 samples, embedding dim 32.
    B, D = 16, 32
    n_classes, per_class = 4, 4
    labels = np.repeat(np.arange(n_classes), per_class)

    key = jax.random.PRNGKey(0)
    batch = jax.random.normal(key, (B, D), dtype=jnp.float32)

    anchors, positives, negatives = synthetic_npair_batchminer(labels)
    anc = jnp.asarray(anchors, dtype=jnp.int32)        # (T,)   = (4,)
    pos = jnp.asarray(positives, dtype=jnp.int32)      # (T,)   = (4,)
    neg = jnp.asarray(negatives, dtype=jnp.int32)      # (T, N) = (4, 3)

    l2_weight = 0.005  # opt.loss_npair_l2 (deterministic in-script constant)

    loss = npair_loss_pallas(batch, anc, pos, neg, l2_weight)
    loss = jax.block_until_ready(loss)

    ref = npair_loss_ref(batch, anc, pos, neg, l2_weight)
    # Tolerance covers the MXU f32 matmul path (HIGHEST precision requested).
    assert np.allclose(np.asarray(loss), np.asarray(ref), rtol=1e-3, atol=1e-3), (loss, ref)
    print("KERNEL_OK")
</pallas_src>

<mosaic_0001>
module attributes {stable_mosaic.version = 11 : i64} {
  func.func @_npair_kernel(%arg0: i32, %arg1: i32, %arg2: memref<128x1xi32, #tpu.memory_space<vmem>>, %arg3: memref<128x1xi32, #tpu.memory_space<vmem>>, %arg4: memref<128x3xi32, #tpu.memory_space<vmem>>, %arg5: memref<16x32xf32, #tpu.memory_space<any>>, %arg6: memref<1x128xf32, #tpu.memory_space<vmem>>, %arg7: memref<16x32xf32, #tpu.memory_space<vmem>>, %arg8: memref<1x1xf32, #tpu.memory_space<vmem>>, %arg9: memref<!tpu.dma_semaphore, #tpu.memory_space<semaphore_mem>>) attributes {dimension_semantics = [#tpu.dimension_semantics<parallel>, #tpu.dimension_semantics<arbitrary>], iteration_bounds = array<i64: 2, 1>, scalar_prefetch = 0 : i64, scratch_operands = 3 : i64, tpu.core_type = #tpu.core_type<tc>, window_params = [{transform_indices = @transform_0, window_bounds = array<i64: 128, 1>}, {transform_indices = @transform_1, window_bounds = array<i64: 128, 1>}, {transform_indices = @transform_2, window_bounds = array<i64: 128, 3>}, {}, {transform_indices = @transform_4, window_bounds = array<i64: 1, 128>}]} {
    %c0_i32 = arith.constant 0 : i32
    %0 = arith.cmpi eq, %arg1, %c0_i32 : i32
    %1 = arith.extui %0 : i1 to i32
    %c0_i32_0 = arith.constant 0 : i32
    %2 = arith.cmpi ne, %1, %c0_i32_0 : i32
    scf.if %2 {
      tpu.enqueue_dma source(%arg5 : memref<16x32xf32, #tpu.memory_space<any>>) target(%arg7 : memref<16x32xf32, #tpu.memory_space<vmem>>) target_semaphore(%arg9 : memref<!tpu.dma_semaphore, #tpu.memory_space<semaphore_mem>>)
      tpu.wait_dma2 semaphore(%arg9 : memref<!tpu.dma_semaphore, #tpu.memory_space<semaphore_mem>>) src(%arg5 : memref<16x32xf32, #tpu.memory_space<any>>) dst(%arg7 : memref<16x32xf32, #tpu.memory_space<vmem>>)
      %c0_24 = arith.constant 0 : index
      %c0_25 = arith.constant 0 : index
      %63 = vector.load %arg7[%c0_24, %c0_25] : memref<16x32xf32, #tpu.memory_space<vmem>>, vector<16x32xf32>
      %64 = arith.mulf %63, %63 : vector<16x32xf32>
      %cst_26 = arith.constant dense<0.000000e+00> : vector<16xf32>
      %65 = vector.multi_reduction <add>, %64, %cst_26 [1] : vector<16x32xf32> to vector<16xf32>
      %66 = vector.shape_cast %65 : vector<16xf32> to vector<16x1xf32>
      %67 = math.sqrt %66 : vector<16x1xf32>
      %cst_27 = arith.constant dense<0.000000e+00> : vector<1xf32>
      %68 = vector.multi_reduction <add>, %67, %cst_27 [0] : vector<16x1xf32> to vector<1xf32>
      %69 = vector.shape_cast %68 : vector<1xf32> to vector<1x1xf32>
      %cst_28 = arith.constant 1.562500e-02 : f32
      %70 = vector.broadcast %cst_28 : f32 to vector<1x1xf32>
      %71 = arith.mulf %69, %70 : vector<1x1xf32>
      %c0_i32_29 = arith.constant 0 : i32
      %72 = arith.cmpi eq, %arg0, %c0_i32_29 : i32
      %cst_30 = arith.constant 5.000000e-03 : f32
      %73 = vector.broadcast %cst_30 : f32 to vector<1x1xf32>
      %74 = arith.mulf %73, %71 : vector<1x1xf32>
      %cst_31 = arith.constant 0.000000e+00 : f32
      %75 = vector.broadcast %cst_31 : f32 to vector<1x1xf32>
      %76 = arith.select %72, %74, %75 : vector<1x1xf32>
      %c0_32 = arith.constant 0 : index
      %c0_33 = arith.constant 0 : index
      %77 = vector.load %arg8[%c0_32, %c0_33] : memref<1x1xf32, #tpu.memory_space<vmem>>, vector<1x1xf32>
      tpu.vector_store %arg8[%c0_32, %c0_33], %76 {strides = array<i32>} : memref<1x1xf32, #tpu.memory_space<vmem>>, vector<1x1xf32>,
    } else {
    }
    %c0 = arith.constant 0 : index
    %c0_1 = arith.constant 0 : index
    %3 = vector.load %arg7[%c0, %c0_1] : memref<16x32xf32, #tpu.memory_space<vmem>>, vector<16x32xf32>
    %c0_2 = arith.constant 0 : index
    %c0_3 = arith.constant 0 : index
    %4 = vector.load %arg2[%c0_2, %c0_3] : memref<128x1xi32, #tpu.memory_space<vmem>>, vector<128x1xi32>
    %c0_4 = arith.constant 0 : index
    %c0_5 = arith.constant 0 : index
    %5 = vector.load %arg3[%c0_4, %c0_5] : memref<128x1xi32, #tpu.memory_space<vmem>>, vector<128x1xi32>
    %c0_6 = arith.constant 0 : index
    %c0_7 = arith.constant 0 : index
    %6 = vector.load %arg4[%c0_6, %c0_7] : memref<128x3xi32, #tpu.memory_space<vmem>>, vector<128x3xi32>
    %7 = tpu.iota {dimensions = array<i32: 1>} : vector<128x16xi32>
    %8 = vector.broadcast %4 : vector<128x1xi32> to vector<128x16xi32>
    %9 = arith.cmpi eq, %7, %8 : vector<128x16xi32>
    %10 = arith.extui %9 : vector<128x16xi1> to vector<128x16xi32>
    %11 = arith.sitofp %10 : vector<128x16xi32> to vector<128x16xf32>
    %cst = arith.constant dense<0.000000e+00> : vector<128x32xf32>
    %12 = tpu.matmul %11, %3, %cst {dimension_numbers = #tpu.dot_dimension_numbers<[1], [0], [0], [1], [0, 0, 1, 1], [], []>, precision = #tpu.contract_precision<fp32>} : vector<128x16xf32>, vector<16x32xf32>, vector<128x32xf32> -> vector<128x32xf32>
    %cst_8 = arith.constant dense<0.000000e+00> : vector<128x16xf32>
    %13 = tpu.matmul %12, %3, %cst_8 {dimension_numbers = #tpu.dot_dimension_numbers<[1], [1], [0], [0], [0, 0, 1, 0], [], []>, precision = #tpu.contract_precision<fp32>} : vector<128x32xf32>, vector<16x32xf32>, vector<128x16xf32> -> vector<128x16xf32>
    %14 = vector.broadcast %5 : vector<128x1xi32> to vector<128x16xi32>
    %15 = arith.cmpi eq, %7, %14 : vector<128x16xi32>
    %16 = arith.extui %15 : vector<128x16xi1> to vector<128x16xi32>
    %17 = arith.sitofp %16 : vector<128x16xi32> to vector<128x16xf32>
    %18 = arith.mulf %13, %17 : vector<128x16xf32>
    %cst_9 = arith.constant dense<0.000000e+00> : vector<128xf32>
    %19 = vector.multi_reduction <add>, %18, %cst_9 [1] : vector<128x16xf32> to vector<128xf32>
    %20 = vector.shape_cast %19 : vector<128xf32> to vector<128x1xf32>
    %21 = vector.extract_strided_slice %6 {offsets = [0, 0], sizes = [128, 1], strides = [1, 1]} : vector<128x3xi32> to vector<128x1xi32>
    %22 = vector.broadcast %21 : vector<128x1xi32> to vector<128x16xi32>
    %23 = arith.cmpi eq, %7, %22 : vector<128x16xi32>
    %24 = vector.extract_strided_slice %6 {offsets = [0, 1], sizes = [128, 1], strides = [1, 1]} : vector<128x3xi32> to vector<128x1xi32>
    %25 = vector.broadcast %24 : vector<128x1xi32> to vector<128x16xi32>
    %26 = arith.cmpi eq, %7, %25 : vector<128x16xi32>
    %27 = arith.ori %23, %26 : vector<128x16xi1>
    %28 = vector.extract_strided_slice %6 {offsets = [0, 2], sizes = [128, 1], strides = [1, 1]} : vector<128x3xi32> to vector<128x1xi32>
    %29 = vector.broadcast %28 : vector<128x1xi32> to vector<128x16xi32>
    %30 = arith.cmpi eq, %7, %29 : vector<128x16xi32>
    %31 = arith.ori %27, %30 : vector<128x16xi1>
    %32 = vector.broadcast %20 : vector<128x1xf32> to vector<128x16xf32>
    %33 = arith.subf %13, %32 : vector<128x16xf32>
    %cst_10 = arith.constant 6.250000e-02 : f32
    %34 = vector.broadcast %cst_10 : f32 to vector<128x16xf32>
    %35 = arith.mulf %33, %34 : vector<128x16xf32>
    %cst_11 = arith.constant 0xFF800000 : f32
    %36 = vector.broadcast %cst_11 : f32 to vector<128x16xf32>
    %37 = arith.select %31, %35, %36 : vector<128x16xi1>, vector<128x16xf32>
    %cst_12 = arith.constant dense<0xFF800000> : vector<128xf32>
    %38 = vector.multi_reduction <maximumf>, %37, %cst_12 [1] : vector<128x16xf32> to vector<128xf32>
    %39 = vector.shape_cast %38 : vector<128xf32> to vector<128x1xf32>
    %cst_13 = arith.constant 0.000000e+00 : f32
    %40 = vector.broadcast %cst_13 : f32 to vector<128x1xf32>
    %41 = arith.maximumf %39, %40 : vector<128x1xf32>
    %42 = vector.broadcast %41 : vector<128x1xf32> to vector<128x16xf32>
    %43 = arith.subf %37, %42 : vector<128x16xf32>
    %44 = math.exp %43 : vector<128x16xf32>
    %cst_14 = arith.constant dense<0.000000e+00> : vector<128xf32>
    %45 = vector.multi_reduction <add>, %44, %cst_14 [1] : vector<128x16xf32> to vector<128xf32>
    %46 = vector.shape_cast %45 : vector<128xf32> to vector<128x1xf32>
    %cst_15 = arith.constant 0.000000e+00 : f32
    %47 = vector.broadcast %cst_15 : f32 to vector<128x1xf32>
    %48 = arith.subf %47, %41 : vector<128x1xf32>
    %49 = math.exp %48 : vector<128x1xf32>
    %50 = arith.addf %46, %49 : vector<128x1xf32>
    %51 = math.log %50 : vector<128x1xf32>
    %52 = arith.addf %41, %51 : vector<128x1xf32>
    %c0_16 = arith.constant 0 : index
    %c0_17 = arith.constant 0 : index
    %53 = vector.load %arg8[%c0_16, %c0_17] : memref<1x1xf32, #tpu.memory_space<vmem>>, vector<1x1xf32>
    %cst_18 = arith.constant dense<0.000000e+00> : vector<1xf32>
    %54 = vector.multi_reduction <add>, %52, %cst_18 [0] : vector<128x1xf32> to vector<1xf32>
    %55 = vector.shape_cast %54 : vector<1xf32> to vector<1x1xf32>
    %cst_19 = arith.constant 2.500000e-01 : f32
    %56 = vector.broadcast %cst_19 : f32 to vector<1x1xf32>
    %57 = arith.mulf %55, %56 : vector<1x1xf32>
    %58 = arith.addf %53, %57 : vector<1x1xf32>
    %c0_20 = arith.constant 0 : index
    %c0_21 = arith.constant 0 : index
    %59 = vector.load %arg8[%c0_20, %c0_21] : memref<1x1xf32, #tpu.memory_space<vmem>>, vector<1x1xf32>
    tpu.vector_store %arg8[%c0_20, %c0_21], %58 {strides = array<i32>} : memref<1x1xf32, #tpu.memory_space<vmem>>, vector<1x1xf32>,
    %c0_i32_22 = arith.constant 0 : i32
    %60 = arith.cmpi eq, %arg1, %c0_i32_22 : i32
    %61 = arith.extui %60 : i1 to i32
    %c0_i32_23 = arith.constant 0 : i32
    %62 = arith.cmpi ne, %61, %c0_i32_23 : i32
    scf.if %62 {
      %63 = tpu.iota {dimensions = array<i32: 1>} : vector<1x128xi32>
      %c0_i32_24 = arith.constant 0 : i32
      %64 = vector.broadcast %c0_i32_24 : i32 to vector<1x128xi32>
      %65 = arith.cmpi eq, %63, %64 : vector<1x128xi32>
      %c0_25 = arith.constant 0 : index
      %c0_26 = arith.constant 0 : index
      %66 = vector.load %arg8[%c0_25, %c0_26] : memref<1x1xf32, #tpu.memory_space<vmem>>, vector<1x1xf32>
      %cst_27 = arith.constant 0.000000e+00 : f32
      %67 = vector.shape_cast %66 : vector<1x1xf32> to vector<1x1xf32>
      %68 = vector.broadcast %67 : vector<1x1xf32> to vector<1x128xf32>
      %69 = vector.broadcast %cst_27 : f32 to vector<1x128xf32>
      %70 = arith.select %65, %68, %69 : vector<1x128xi1>, vector<1x128xf32>
      %c0_28 = arith.constant 0 : index
      %c0_29 = arith.constant 0 : index
      %71 = vector.load %arg6[%c0_28, %c0_29] : memref<1x128xf32, #tpu.memory_space<vmem>>, vector<1x128xf32>
      tpu.vector_store %arg6[%c0_28, %c0_29], %70 {strides = array<i32>} : memref<1x128xf32, #tpu.memory_space<vmem>>, vector<1x128xf32>,
    } else {
    }
    return
  }
  func.func @transform_0(%arg0: i32, %arg1: i32) -> (i32, i32) {
    %c1_i32 = arith.constant 1 : i32
    %0 = arith.muli %arg0, %c1_i32 : i32
    %1 = arith.addi %0, %arg1 : i32
    %c0_i32 = arith.constant 0 : i32
    %c0_i32_0 = arith.constant 0 : i32
    return %1, %c0_i32 : i32, i32
  }
  func.func @transform_1(%arg0: i32, %arg1: i32) -> (i32, i32) {
    %c1_i32 = arith.constant 1 : i32
    %0 = arith.muli %arg0, %c1_i32 : i32
    %1 = arith.addi %0, %arg1 : i32
    %c0_i32 = arith.constant 0 : i32
    %c0_i32_0 = arith.constant 0 : i32
    return %1, %c0_i32 : i32, i32
  }
  func.func @transform_2(%arg0: i32, %arg1: i32) -> (i32, i32) {
    %c1_i32 = arith.constant 1 : i32
    %0 = arith.muli %arg0, %c1_i32 : i32
    %1 = arith.addi %0, %arg1 : i32
    %c0_i32 = arith.constant 0 : i32
    %c0_i32_0 = arith.constant 0 : i32
    return %1, %c0_i32 : i32, i32
  }
  func.func @transform_4(%arg0: i32, %arg1: i32) -> (i32, i32) {
    %c0_i32 = arith.constant 0 : i32
    %c0_i32_0 = arith.constant 0 : i32
    return %c0_i32, %arg0 : i32, i32
  }
}

</mosaic_0001>

<llo_original>
// kernel: tpu_custom_call.1
$region0: #{tpu_custom_call.1}
  #allocation0 [shape = 'u32[]', space=smem, size = 0x4, offset = 0x4, fixed_abs, tag = 'smem constant byte address 0x4 - core index']
  #allocation1 [shape = 'u32[144,128]{1,0:T(1,128)}', space=vmem, size = 0x12000, scoped, tag = 'internal scratch']
  #allocation2 [shape = 'f32[16,32]{1,0:T(8,128)}', space=vmem, size = 0x2000, scoped, tag = 'scratch operand']
  #allocation3 [shape = 'f32[1,1]{1,0:T(1,128)}', space=vmem, size = 0x200, scoped, tag = 'scratch operand']
  #allocation4 [shape = 's32[1]{0}', space=sflag, size = 0x4, scoped, tag = 'scratch operand']
  #allocation7 [shape = 's32[]', space=sflag, size = 0x4, offset = 0, fixed_abs, tag = 'sflag constant byte address 0x0 - dummy sync flag']
  %s0 = inlined_call_operand.vmem [shape: s32[256,1], index: 0, kind: input, shape index: {}]
  %s1 = inlined_call_operand.vmem [shape: s32[256,1], index: 1, kind: input, shape index: {}]
  %s2 = inlined_call_operand.vmem [shape: s32[256,3], index: 2, kind: input, shape index: {}]
  %s3 = inlined_call_operand.vmem [shape: f32[16,32], index: 3, kind: input, shape index: {}]
  %s4 = inlined_call_operand.hbm [shape: f32[1,256], index: 4, kind: output, shape index: {}]
  %s5 = sld [smem:[#allocation0]]
  $region87: #{tpu_custom_call.1} parent=0
    _
  %s7 = ssub.s32 1, %s5
  %s8 = scalar_select 0, %s7, %s5
  $region1: #{tpu_custom_call.1} parent=0
    #allocation5 [shape = 'u8[1024]{0}', space=vmem, size = 0x400, scoped, tag = 'output window, operand 0']
    #allocation6 [shape = 's32[2]{0}', space=sflag, size = 0x8, scoped, tag = 'scoped memory for tpu_custom_call.1']
    %9 = vsyncpa [#allocation6], 0
    %s10 = scalar_lea.sflag [#allocation6], 1
    %11 = vsyncpa %s10, 0
    loop: start=0, step=1, limit=4
    $region2: #{tpu_custom_call.1} parent=1 // loop_pre_header
      _
    $region3: #{tpu_custom_call.1} parent=1 // loop_header
      %s13 = sphi 0, %s17
      %p14 = scmp.ge.s32.totalorder %s13, 4
      %s20 = sphi 0, %s32
      %s21 = sphi 0, %s28
      %s22 = sphi 0, %s20
      %s23 = sphi 0, %s21
      %s24 = sphi 0, %s22
      %s25 = sphi 0, %s23
      %s37 = sphi 0, %s39
      %s40 = sphi 0, %s37
      %s41 = sphi 0, %s40
      %s57 = sphi 0, %s41
      %s65 = sphi 0, %s67
      %s68 = sphi 0, %s65
      %s69 = sphi 0, %s68
      %s85 = sphi 0, %s69
      %s93 = sphi 0, %s95
      %s96 = sphi 0, %s93
      %s97 = sphi 0, %s96
      %s113 = sphi 0, %s97
      %s119 = sphi 0, %s121
      %s122 = sphi 0, %s119
      %s123 = sphi 0, %s122
      %s139 = sphi 0, %s123
    $region4: #{tpu_custom_call.1} parent=1 // loop_header_branch
      %16 = sbr.rel (%p14) target = $region8
    $region5: #{tpu_custom_call.1} parent=1 // loop_body
      %s18 = ssub.s32 %s13, 1
      %s19 = ssub.s32 %s13, 2
      %s26 = sadd.s32 1, %s21
      %p27 = scmp.ge.s32.totalorder %s26, 1
      %s28 = scalar_select %p27, 0, %s26
      %s29 = sadd.s32 1, %s20
      %s30 = scalar_select %p27, %s29, %s20
      %p31 = scmp.ge.s32.totalorder %s30, 2
      %s32 = scalar_select %p31, 0, %s30
      %s33 = sadd.s32 %s20, %s21
      %s34 = sadd.s32 %s32, %s28
      %s35 = ssub.s32 %s33, %s34
      %p36 = scmp.eq.s32.totalorder %s35, 0
      %s38 = sadd.s32 %s37, 1
      %s39 = scalar_select %p36, %s37, %s38
      %p42 = pneg %p36
      %p43 = scmp.eq.s32.totalorder %s13, 1
      %p44 = por %p42, %p43
      %p45 = scmp.ne.s32.totalorder %s37, %s40
      %p46 = scmp.eq.s32.totalorder %s13, 0
      %p47 = por %p45, %p46
      %p48 = scmp.ne.s32.totalorder %s37, %s40
      %p49 = scmp.eq.s32.totalorder %s18, 1
      %p50 = por %p48, %p49
      %p51 = scmp.ne.s32.totalorder %s40, %s41
      %p52 = scmp.eq.s32.totalorder %s18, 0
      %p53 = por %p51, %p52
      %p54 = scmp.ne.s32.totalorder %s40, %s41
      %p55 = scmp.eq.s32.totalorder %s19, 1
      %p56 = por %p54, %p55
      %p58 = scmp.ne.s32.totalorder %s41, %s57
      %p59 = scmp.eq.s32.totalorder %s19, 0
      %p60 = por %p58, %p59
      %s61 = sadd.s32 %s20, %s21
      %s62 = sadd.s32 %s32, %s28
      %s63 = ssub.s32 %s61, %s62
      %p64 = scmp.eq.s32.totalorder %s63, 0
      %s66 = sadd.s32 %s65, 1
      %s67 = scalar_select %p64, %s65, %s66
      %p70 = pneg %p64
      %p71 = scmp.eq.s32.totalorder %s13, 1
      %p72 = por %p70, %p71
      %p73 = scmp.ne.s32.totalorder %s65, %s68
      %p74 = scmp.eq.s32.totalorder %s13, 0
      %p75 = por %p73, %p74
      %p76 = scmp.ne.s32.totalorder %s65, %s68
      %p77 = scmp.eq.s32.totalorder %s18, 1
      %p78 = por %p76, %p77
      %p79 = scmp.ne.s32.totalorder %s68, %s69
      %p80 = scmp.eq.s32.totalorder %s18, 0
      %p81 = por %p79, %p80
      %p82 = scmp.ne.s32.totalorder %s68, %s69
      %p83 = scmp.eq.s32.totalorder %s19, 1
      %p84 = por %p82, %p83
      %p86 = scmp.ne.s32.totalorder %s69, %s85
      %p87 = scmp.eq.s32.totalorder %s19, 0
      %p88 = por %p86, %p87
      %s89 = sadd.s32 %s20, %s21
      %s90 = sadd.s32 %s32, %s28
      %s91 = ssub.s32 %s89, %s90
      %p92 = scmp.eq.s32.totalorder %s91, 0
      %s94 = sadd.s32 %s93, 1
      %s95 = scalar_select %p92, %s93, %s94
      %p98 = pneg %p92
      %p99 = scmp.eq.s32.totalorder %s13, 1
      %p100 = por %p98, %p99
      %p101 = scmp.ne.s32.totalorder %s93, %s96
      %p102 = scmp.eq.s32.totalorder %s13, 0
      %p103 = por %p101, %p102
      %p104 = scmp.ne.s32.totalorder %s93, %s96
      %p105 = scmp.eq.s32.totalorder %s18, 1
      %p106 = por %p104, %p105
      %p107 = scmp.ne.s32.totalorder %s96, %s97
      %p108 = scmp.eq.s32.totalorder %s18, 0
      %p109 = por %p107, %p108
      %p110 = scmp.ne.s32.totalorder %s96, %s97
      %p111 = scmp.eq.s32.totalorder %s19, 1
      %p112 = por %p110, %p111
      %p114 = scmp.ne.s32.totalorder %s97, %s113
      %p115 = scmp.eq.s32.totalorder %s19, 0
      %p116 = por %p114, %p115
      %s117 = ssub.s32 %s20, %s32
      %p118 = scmp.eq.s32.totalorder %s117, 0
      %s120 = sadd.s32 %s119, 1
      %s121 = scalar_select %p118, %s119, %s120
      %p124 = pneg %p118
      %p125 = scmp.eq.s32.totalorder %s13, 1
      %p126 = por %p124, %p125
      %p127 = scmp.ne.s32.totalorder %s119, %s122
      %p128 = scmp.eq.s32.totalorder %s13, 0
      %p129 = por %p127, %p128
      %p130 = scmp.ne.s32.totalorder %s119, %s122
      %p131 = scmp.eq.s32.totalorder %s18, 1
      %p132 = por %p130, %p131
      %p133 = scmp.ne.s32.totalorder %s122, %s123
      %p134 = scmp.eq.s32.totalorder %s18, 0
      %p135 = por %p133, %p134
      %p136 = scmp.ne.s32.totalorder %s122, %s123
      %p137 = scmp.eq.s32.totalorder %s19, 1
      %p138 = por %p136, %p137
      %p140 = scmp.ne.s32.totalorder %s123, %s139
      %p141 = scmp.eq.s32.totalorder %s19, 0
      %p142 = por %p140, %p141
      %p143 = scmp.le.s32.totalorder 1, %s13
      %p144 = scmp.lt.s32.totalorder %s13, 3
      %p145 = pnand %p143, %p144
      %p146 = pneg %p145
      // Predicated region
      $region9: #{tpu_custom_call.1} parent=5 // pred_check
        _
      $region10: #{tpu_custom_call.1} parent=5 // pred_check_branch
        %148 = sbr.rel (%p145) target = $region12
      $region11: #{tpu_custom_call.1} parent=5 // pred_region
        %s149 = ssub.s32 %s13, 1
      $region12: #{tpu_custom_call.1} parent=5 // pred_fallthru
        _
      %p150 = scmp.lt.s32.totalorder %s13, 2
      // Predicated region
      $region13: #{tpu_custom_call.1} parent=5 // pred_check
        %p151 = pneg %p150
      $region14: #{tpu_custom_call.1} parent=5 // pred_check_branch
        %153 = sbr.rel (%p151) target = $region16
      $region15: #{tpu_custom_call.1} parent=5 // pred_region
        // Predicated region
        $region17: #{tpu_custom_call.1} parent=15 // pred_check
          %p154 = pneg %p47
        $region18: #{tpu_custom_call.1} parent=15 // pred_check_branch
          %156 = sbr.rel (%p154) target = $region20
        $region19: #{tpu_custom_call.1} parent=15 // pred_region
          %s157 = sadd.s32 %s20, %s21
          %s158 = smul.u32 16, %s157
          %p159 = scmp.lt.s32.totalorder %s158, 31
          %s160 = scalar_select %p159, %s158, 31
          %s161 = smul.addr %s160, 8
          %s162 = scalar_lea.vmem %s0, %s161
          %s163 = sadd.s32 %s20, %s21
          %s164 = smul.u32 16, %s163
        $region20: #{tpu_custom_call.1} parent=15 // pred_fallthru
          _
        // Predicated region
        $region21: #{tpu_custom_call.1} parent=15 // pred_check
          %p165 = pneg %p75
        $region22: #{tpu_custom_call.1} parent=15 // pred_check_branch
          %167 = sbr.rel (%p165) target = $region24
        $region23: #{tpu_custom_call.1} parent=15 // pred_region
          %s168 = sadd.s32 %s20, %s21
          %s169 = smul.u32 16, %s168
          %p170 = scmp.lt.s32.totalorder %s169, 31
          %s171 = scalar_select %p170, %s169, 31
          %s172 = smul.addr %s171, 8
          %s173 = scalar_lea.vmem %s1, %s172
          %s174 = sadd.s32 %s20, %s21
          %s175 = smul.u32 16, %s174
        $region24: #{tpu_custom_call.1} parent=15 // pred_fallthru
          _
        // Predicated region
        $region25: #{tpu_custom_call.1} parent=15 // pred_check
          %p176 = pneg %p103
        $region26: #{tpu_custom_call.1} parent=15 // pred_check_branch
          %178 = sbr.rel (%p176) target = $region28
        $region27: #{tpu_custom_call.1} parent=15 // pred_region
          %s179 = sadd.s32 %s20, %s21
          %s180 = smul.u32 16, %s179
          %p181 = scmp.lt.s32.totalorder %s180, 31
          %s182 = scalar_select %p181, %s180, 31
          %s183 = smul.addr %s182, 8
          %s184 = scalar_lea.vmem %s2, %s183
          %s185 = sadd.s32 %s20, %s21
          %s186 = smul.u32 16, %s185
        $region28: #{tpu_custom_call.1} parent=15 // pred_fallthru
          _
      $region16: #{tpu_custom_call.1} parent=5 // pred_fallthru
        _
      %p187 = scmp.le.s32.totalorder 1, %s13
      %p188 = scmp.lt.s32.totalorder %s13, 3
      %p189 = pnand %p187, %p188
      %p190 = pneg %p189
      // Predicated region
      $region29: #{tpu_custom_call.1} parent=5 // pred_check
        _
      $region30: #{tpu_custom_call.1} parent=5 // pred_check_branch
        %192 = sbr.rel (%p189) target = $region32
      $region31: #{tpu_custom_call.1} parent=5 // pred_region
        %s193 = ssub.s32 %s13, 1
        %s194 = sadd.s32 %s22, %s23
        %s195 = smul.u32 16, %s194
        %p196 = scmp.lt.s32.totalorder %s195, 31
        %s197 = scalar_select %p196, %s195, 31
        %s198 = smul.addr %s197, 8
        %s199 = scalar_lea.vmem %s0, %s198
        %p200 = pneg %p53
        %p201 = pneg %p50
        %s202 = sadd.s32 %s22, %s23
        %s203 = smul.u32 16, %s202
        %p204 = scmp.lt.s32.totalorder %s203, 31
        %s205 = scalar_select %p204, %s203, 31
        %s206 = smul.addr %s205, 8
        %s207 = scalar_lea.vmem %s1, %s206
        %p208 = pneg %p81
        %p209 = pneg %p78
        %s210 = sadd.s32 %s22, %s23
        %s211 = smul.u32 16, %s210
        %p212 = scmp.lt.s32.totalorder %s211, 31
        %s213 = scalar_select %p212, %s211, 31
        %s214 = smul.addr %s213, 8
        %s215 = scalar_lea.vmem %s2, %s214
        %p216 = pneg %p109
        %p217 = pneg %p106
        %p218 = pneg %p135
        %p219 = pneg %p132
        %s220 = sand.u32 %s122, 1
        %s221 = scalar_lea.sflag [#allocation6], %s220
        %s222 = sand.u32 %s122, 1
        %s223 = scalar_lea.vmem [#allocation5], %s222
        %s224 = sadd.s32 %s22, %s23
        %s225 = smul.u32 16, %s224
        %p226 = scmp.lt.s32.totalorder %s225, 31
        %s227 = scalar_select %p226, %s225, 31
        %s228 = smul.addr %s227, 8
        %s229 = scalar_lea.vmem %s0, %s228
        %s230 = sadd.s32 %s22, %s23
        %s231 = smul.u32 16, %s230
        %s232 = sadd.s32 %s22, %s23
        %s233 = smul.u32 16, %s232
        %p234 = scmp.lt.s32.totalorder %s233, 31
        %s235 = scalar_select %p234, %s233, 31
        %s236 = smul.addr %s235, 8
        %s237 = scalar_lea.vmem %s1, %s236
        %s238 = sadd.s32 %s22, %s23
        %s239 = smul.u32 16, %s238
        %s240 = sadd.s32 %s22, %s23
        %s241 = smul.u32 16, %s240
        %p242 = scmp.lt.s32.totalorder %s241, 31
        %s243 = scalar_select %p242, %s241, 31
        %s244 = smul.addr %s243, 8
        %s245 = scalar_lea.vmem %s2, %s244
        %s246 = sadd.s32 %s22, %s23
        %s247 = smul.u32 16, %s246
        %p248 = scmp.eq.s32.totalorder %s23, 0
        // Predicated region
        $region33: #{tpu_custom_call.1} parent=31 // pred_check
          %p249 = pneg %p248
        $region34: #{tpu_custom_call.1} parent=31 // pred_check_branch
          %251 = sbr.rel (%p249) target = $region36
        $region35: #{tpu_custom_call.1} parent=31 // pred_region
          %p253 = scmp.lt.u32.totalorder 16, 8
          %p254 = pneg %p253
          // Predicated region
          $region37: #{tpu_custom_call.1} parent=35 // pred_check
            _
          $region38: #{tpu_custom_call.1} parent=35 // pred_check_branch
            %256 = sbr.rel (%p253) target = $region40
          $region39: #{tpu_custom_call.1} parent=35 // pred_region
            %s272 = sand.u32 16, 7
            %p273 = scmp.eq.s32.totalorder %s272, 0
            // Predicated region
            $region52: #{tpu_custom_call.1} parent=39 // pred_check
              %p274 = pneg %p273
            $region53: #{tpu_custom_call.1} parent=39 // pred_check_branch
              %276 = sbr.rel (%p274) target = $region55
            $region54: #{tpu_custom_call.1} parent=39 // pred_region
              loop: start=0, step=1, limit=1
              $region56: #{tpu_custom_call.1} parent=54 // loop_pre_header
                _
              $region57: #{tpu_custom_call.1} parent=54 // loop_header
                %s278 = sphi 0, %s282
                %p279 = scmp.ge.s32.totalorder %s278, 1
                %s283 = sphi %s3, %s3
                %s284 = sphi [#allocation2], [#allocation2]
              $region58: #{tpu_custom_call.1} parent=54 // loop_header_branch
                %281 = sbr.rel (%p279) target = $region62
              $region59: #{tpu_custom_call.1} parent=54 // loop_body
                %v285 = vld [vmem:[%s283] sm:$0xff]
                %286 = vst [vmem:[%s284] sm:$0xff] %v285
                %v287 = vld [vmem:[%s283 + $0x8] sm:$0xff]
                %288 = vst [vmem:[%s284 + $0x8] sm:$0xff] %v287
              $region60: #{tpu_custom_call.1} parent=54 // loop_footer
                %s282 = sadd.s32 1, %s278
              $region61: #{tpu_custom_call.1} parent=54 // loop_footer_branch
                %277 = sbr.rel target = $region57
              $region62: #{tpu_custom_call.1} parent=54 // loop_exit
                _
            $region55: #{tpu_custom_call.1} parent=39 // pred_fallthru
              _
            %p289 = pneg %p273
            // Predicated region
            $region63: #{tpu_custom_call.1} parent=39 // pred_check
              _
            $region64: #{tpu_custom_call.1} parent=39 // pred_check_branch
              %291 = sbr.rel (%p273) target = $region66
            $region65: #{tpu_custom_call.1} parent=39 // pred_region
              %s292 = sand.u32 16, 7
            $region66: #{tpu_custom_call.1} parent=39 // pred_fallthru
              _
          $region40: #{tpu_custom_call.1} parent=35 // pred_fallthru
            _
          // Predicated region
          $region41: #{tpu_custom_call.1} parent=35 // pred_check
            %p257 = pneg %p253
          $region42: #{tpu_custom_call.1} parent=35 // pred_check_branch
            %259 = sbr.rel (%p257) target = $region44
          $region43: #{tpu_custom_call.1} parent=35 // pred_region
            %s260 = sshll.u32 1, 16
            %s261 = ssub.s32 %s260, 1
            loop: start=0, step=1, limit=1
            $region45: #{tpu_custom_call.1} parent=43 // loop_pre_header
              _
            $region46: #{tpu_custom_call.1} parent=43 // loop_header
              %s263 = sphi 0, %s267
              %p264 = scmp.ge.s32.totalorder %s263, 1
              %s268 = sphi %s3, %s3
              %s269 = sphi [#allocation2], [#allocation2]
            $region47: #{tpu_custom_call.1} parent=43 // loop_header_branch
              %266 = sbr.rel (%p264) target = $region51
            $region48: #{tpu_custom_call.1} parent=43 // loop_body
              %v270 = vld [vmem:[%s268] sm:%s261]
              %271 = vst [vmem:[%s269] sm:%s261] %v270
            $region49: #{tpu_custom_call.1} parent=43 // loop_footer
              %s267 = sadd.s32 1, %s263
            $region50: #{tpu_custom_call.1} parent=43 // loop_footer_branch
              %262 = sbr.rel target = $region46
            $region51: #{tpu_custom_call.1} parent=43 // loop_exit
              _
          $region44: #{tpu_custom_call.1} parent=35 // pred_fallthru
            _
          // Predicated region
          $region67: #{tpu_custom_call.1} parent=35 // pred_check
            _
          $region68: #{tpu_custom_call.1} parent=35 // pred_check_branch
            %295 = sbr.rel (0) target = $region70
          $region69: #{tpu_custom_call.1} parent=35 // pred_region
            %296 = vsyncadd [#allocation4], 256
          $region70: #{tpu_custom_call.1} parent=35 // pred_fallthru
            _
          %s297 = smul.u32 16, 1
          %s298 = sshll.u32 %s297, 4
          %299 = dma.done [#allocation4], %s298
          %v300 = vld [vmem:[#allocation2] sm:$0xff]
          %v301 = vld [vmem:[#allocation2 + $0x8] sm:$0xff]
          %v302 = vmul.f32 %v300, %v300
          %v303 = vmul.f32 %v301, %v301
          %vm304 = vcmask 261120
          %v305 = vsel %vm304, %v302, 0.0
          %306 = vadd.xlane.f32.xlu0 %v305
          %v307 = vpop.xlane.xlu0 %306
          %v308 = vsel %vm304, %v303, 0.0
          %309 = vadd.xlane.f32.xlu0 %v308
          %v310 = vpop.xlane.xlu0 %309
          %v311 = vrsqrt.pop %v307
          %v312 = vmul.f32 %v307, %v311
          %vm313 = vcmp.eq.f32.partialorder %v307, inf
          %v314 = vsel %vm313, %v307, %v312
          %vm315 = vcmp.eq.f32.partialorder %v307, 0.0
          %v316 = vand.u32 %v307, 2147483648
          %v317 = vsel %vm315, %v316, %v314
          %v318 = vrsqrt.pop %v310
          %v319 = vmul.f32 %v310, %v318
          %vm320 = vcmp.eq.f32.partialorder %v310, inf
          %v321 = vsel %vm320, %v310, %v319
          %vm322 = vcmp.eq.f32.partialorder %v310, 0.0
          %v323 = vand.u32 %v310, 2147483648
          %v324 = vsel %vm322, %v323, %v321
          %v325 = vadd.f32 %v317, %v324
          %v326 = vrot.slane %v325, 4
          %v327 = vadd.f32 %v325, %v326
          %v328 = vrot.slane %v327, 2
          %v329 = vadd.f32 %v327, %v328
          %v330 = vrot.slane %v329, 1
          %v331 = vadd.f32 %v329, %v330
          %v332 = vmul.f32 %v331, 0.015625
          %p333 = scmp.eq.s32.totalorder %s22, 0
          %v334 = vmul.f32 %v332, 0.005
          %s335 = scalar_select %p333, 1, 0
          %v336 = vstv %s335
          %vm337 = vcmp.eq.s32.totalorder %v336, 1
          %v338 = vsel %vm337, %v334, 0.0
          %vm339 = vcmask 0
          %340 = vst.msk [vmem:[#allocation3] sm:$0x1] %vm339, %v338
        $region36: #{tpu_custom_call.1} parent=31 // pred_fallthru
          _
        %v341 = vld [vmem:[#allocation2] sm:$0xff]
        %v342 = vld [vmem:[#allocation2 + $0x8] sm:$0xff]
        %v343 = vld [vmem:[%s229] sm:$0xff]
        %v344 = vld [vmem:[%s229 + $0x8] sm:$0xff]
        %v345 = vld [vmem:[%s229 + $0x10] sm:$0xff]
        %v346 = vld [vmem:[%s229 + $0x18] sm:$0xff]
        %v347 = vld [vmem:[%s229 + $0x20] sm:$0xff]
        %v348 = vld [vmem:[%s229 + $0x28] sm:$0xff]
        %v349 = vld [vmem:[%s229 + $0x30] sm:$0xff]
        %v350 = vld [vmem:[%s229 + $0x38] sm:$0xff]
        %v351 = vld [vmem:[%s229 + $0x40] sm:$0xff]
        %v352 = vld [vmem:[%s229 + $0x48] sm:$0xff]
        %v353 = vld [vmem:[%s229 + $0x50] sm:$0xff]
        %v354 = vld [vmem:[%s229 + $0x58] sm:$0xff]
        %v355 = vld [vmem:[%s229 + $0x60] sm:$0xff]
        %v356 = vld [vmem:[%s229 + $0x68] sm:$0xff]
        %v357 = vld [vmem:[%s229 + $0x70] sm:$0xff]
        %v358 = vld [vmem:[%s229 + $0x78] sm:$0xff]
        %v359 = vld [vmem:[%s237] sm:$0xff]
        %v360 = vld [vmem:[%s237 + $0x8] sm:$0xff]
        %v361 = vld [vmem:[%s237 + $0x10] sm:$0xff]
        %v362 = vld [vmem:[%s237 + $0x18] sm:$0xff]
        %v363 = vld [vmem:[%s237 + $0x20] sm:$0xff]
        %v364 = vld [vmem:[%s237 + $0x28] sm:$0xff]
        %v365 = vld [vmem:[%s237 + $0x30] sm:$0xff]
        %v366 = vld [vmem:[%s237 + $0x38] sm:$0xff]
        %v367 = vld [vmem:[%s237 + $0x40] sm:$0xff]
        %v368 = vld [vmem:[%s237 + $0x48] sm:$0xff]
        %v369 = vld [vmem:[%s237 + $0x50] sm:$0xff]
        %v370 = vld [vmem:[%s237 + $0x58] sm:$0xff]
        %v371 = vld [vmem:[%s237 + $0x60] sm:$0xff]
        %v372 = vld [vmem:[%s237 + $0x68] sm:$0xff]
        %v373 = vld [vmem:[%s237 + $0x70] sm:$0xff]
        %v374 = vld [vmem:[%s237 + $0x78] sm:$0xff]
        %v375 = vld [vmem:[%s245] sm:$0xff]
        %v376 = vld [vmem:[%s245 + $0x8] sm:$0xff]
        %v377 = vld [vmem:[%s245 + $0x10] sm:$0xff]
        %v378 = vld [vmem:[%s245 + $0x18] sm:$0xff]
        %v379 = vld [vmem:[%s245 + $0x20] sm:$0xff]
        %v380 = vld [vmem:[%s245 + $0x28] sm:$0xff]
        %v381 = vld [vmem:[%s245 + $0x30] sm:$0xff]
        %v382 = vld [vmem:[%s245 + $0x38] sm:$0xff]
        %v383 = vld [vmem:[%s245 + $0x40] sm:$0xff]
        %v384 = vld [vmem:[%s245 + $0x48] sm:$0xff]
        %v385 = vld [vmem:[%s245 + $0x50] sm:$0xff]
        %v386 = vld [vmem:[%s245 + $0x58] sm:$0xff]
        %v387 = vld [vmem:[%s245 + $0x60] sm:$0xff]
        %v388 = vld [vmem:[%s245 + $0x68] sm:$0xff]
        %v389 = vld [vmem:[%s245 + $0x70] sm:$0xff]
        %v390 = vld [vmem:[%s245 + $0x78] sm:$0xff]
        %v391 = vlaneseq
        %v392 = vand.u32 %v391, 127
        %393 = vset.pattern.permute.xlu0 0
        %394 = vperm.xlu0 %393, %v343
        %v395 = vpop.permute.xlu0 %394
        %396 = vset.pattern.permute.xlu0 0
        %397 = vperm.xlu0 %396, %v344
        %v398 = vpop.permute.xlu0 %397
        %399 = vset.pattern.permute.xlu0 0
        %400 = vperm.xlu0 %399, %v345
        %v401 = vpop.permute.xlu0 %400
        %402 = vset.pattern.permute.xlu0 0
        %403 = vperm.xlu0 %402, %v346
        %v404 = vpop.permute.xlu0 %403
        %405 = vset.pattern.permute.xlu0 0
        %406 = vperm.xlu0 %405, %v347
        %v407 = vpop.permute.xlu0 %406
        %408 = vset.pattern.permute.xlu0 0
        %409 = vperm.xlu0 %408, %v348
        %v410 = vpop.permute.xlu0 %409
        %411 = vset.pattern.permute.xlu0 0
        %412 = vperm.xlu0 %411, %v349
        %v413 = vpop.permute.xlu0 %412
        %414 = vset.pattern.permute.xlu0 0
        %415 = vperm.xlu0 %414, %v350
        %v416 = vpop.permute.xlu0 %415
        %417 = vset.pattern.permute.xlu0 0
        %418 = vperm.xlu0 %417, %v351
        %v419 = vpop.permute.xlu0 %418
        %420 = vset.pattern.permute.xlu0 0
        %421 = vperm.xlu0 %420, %v352
        %v422 = vpop.permute.xlu0 %421
        %423 = vset.pattern.permute.xlu0 0
        %424 = vperm.xlu0 %423, %v353
        %v425 = vpop.permute.xlu0 %424
        %426 = vset.pattern.permute.xlu0 0
        %427 = vperm.xlu0 %426, %v354
        %v428 = vpop.permute.xlu0 %427
        %429 = vset.pattern.permute.xlu0 0
        %430 = vperm.xlu0 %429, %v355
        %v431 = vpop.permute.xlu0 %430
        %432 = vset.pattern.permute.xlu0 0
        %433 = vperm.xlu0 %432, %v356
        %v434 = vpop.permute.xlu0 %433
        %435 = vset.pattern.permute.xlu0 0
        %436 = vperm.xlu0 %435, %v357
        %v437 = vpop.permute.xlu0 %436
        %438 = vset.pattern.permute.xlu0 0
        %439 = vperm.xlu0 %438, %v358
        %v440 = vpop.permute.xlu0 %439
        %vm441 = vcmp.eq.s32.totalorder %v392, %v395
        %vm442 = vcmp.eq.s32.totalorder %v392, %v398
        %vm443 = vcmp.eq.s32.totalorder %v392, %v401
        %vm444 = vcmp.eq.s32.totalorder %v392, %v404
        %vm445 = vcmp.eq.s32.totalorder %v392, %v407
        %vm446 = vcmp.eq.s32.totalorder %v392, %v410
        %vm447 = vcmp.eq.s32.totalorder %v392, %v413
        %vm448 = vcmp.eq.s32.totalorder %v392, %v416
        %vm449 = vcmp.eq.s32.totalorder %v392, %v419
        %vm450 = vcmp.eq.s32.totalorder %v392, %v422
        %vm451 = vcmp.eq.s32.totalorder %v392, %v425
        %vm452 = vcmp.eq.s32.totalorder %v392, %v428
        %vm453 = vcmp.eq.s32.totalorder %v392, %v431
        %vm454 = vcmp.eq.s32.totalorder %v392, %v434
        %vm455 = vcmp.eq.s32.totalorder %v392, %v437
        %vm456 = vcmp.eq.s32.totalorder %v392, %v440
        %v457 = vsel %vm441, 1, 0
        %v458 = vsel %vm442, 1, 0
        %v459 = vsel %vm443, 1, 0
        %v460 = vsel %vm444, 1, 0
        %v461 = vsel %vm445, 1, 0
        %v462 = vsel %vm446, 1, 0
        %v463 = vsel %vm447, 1, 0
        %v464 = vsel %vm448, 1, 0
        %v465 = vsel %vm449, 1, 0
        %v466 = vsel %vm450, 1, 0
        %v467 = vsel %vm451, 1, 0
        %v468 = vsel %vm452, 1, 0
        %v469 = vsel %vm453, 1, 0
        %v470 = vsel %vm454, 1, 0
        %v471 = vsel %vm455, 1, 0
        %v472 = vsel %vm456, 1, 0
        %v473 = vcvt.s32.f32 %v457
        %v474 = vcvt.s32.f32 %v458
        %v475 = vcvt.s32.f32 %v459
        %v476 = vcvt.s32.f32 %v460
        %v477 = vcvt.s32.f32 %v461
        %v478 = vcvt.s32.f32 %v462
        %v479 = vcvt.s32.f32 %v463
        %v480 = vcvt.s32.f32 %v464
        %v481 = vcvt.s32.f32 %v465
        %v482 = vcvt.s32.f32 %v466
        %v483 = vcvt.s32.f32 %v467
        %v484 = vcvt.s32.f32 %v468
        %v485 = vcvt.s32.f32 %v469
        %v486 = vcvt.s32.f32 %v470
        %v487 = vcvt.s32.f32 %v471
        %v488 = vcvt.s32.f32 %v472
        %vm489 = vcmask 130048
        %v491 = vsel %vm489, %v473, 0
        %v494 = vsel %vm489, %v474, 0
        %v497 = vsel %vm489, %v475, 0
        %v500 = vsel %vm489, %v476, 0
        %v503 = vsel %vm489, %v477, 0
        %v506 = vsel %vm489, %v478, 0
        %v509 = vsel %vm489, %v479, 0
        %v512 = vsel %vm489, %v480, 0
        %v515 = vsel %vm489, %v481, 0
        %v518 = vsel %vm489, %v482, 0
        %v521 = vsel %vm489, %v483, 0
        %v524 = vsel %vm489, %v484, 0
        %v527 = vsel %vm489, %v485, 0
        %v530 = vsel %vm489, %v486, 0
        %v533 = vsel %vm489, %v487, 0
        %v536 = vsel %vm489, %v488, 0
        %538 = vmatprep.subr.mxu0 0.0
        %539 = vmatpush1.msra.mxu0 0.0
        %540 = vmatprep.subr.mxu0 0.0
        %541 = vmatpush1.msra.mxu0 0.0
        %542 = vmatprep.subr.mxu0 0.0
        %543 = vmatpush1.msra.mxu0 0.0
        %544 = vmatprep.subr.mxu0 0.0
        %545 = vmatpush1.msra.mxu0 0.0
        %546 = vmatprep.subr.mxu0 0.0
        %547 = vmatpush1.msra.mxu0 0.0
        %548 = vmatprep.subr.mxu0 0.0
        %549 = vmatpush1.msra.mxu0 0.0
        %550 = vmatprep.subr.mxu0 0.0
        %551 = vmatpush1.msra.mxu0 0.0
        %552 = vmatprep.subr.mxu0 0.0
        %553 = vmatpush1.msra.mxu0 0.0
        %554 = vmatprep.subr.mxu0 0.0
        %555 = vmatpush1.msra.mxu0 0.0
        %556 = vmatprep.subr.mxu0 0.0
        %557 = vmatpush1.msra.mxu0 0.0
        %558 = vmatprep.subr.mxu0 0.0
        %559 = vmatpush1.msra.mxu0 0.0
        %560 = vmatprep.subr.mxu0 0.0
        %561 = vmatpush1.msra.mxu0 0.0
        %562 = vmatprep.subr.mxu0 0.0
        %563 = vmatpush1.msra.mxu0 0.0
        %564 = vmatprep.subr.mxu0 0.0
        %565 = vmatpush1.msra.mxu0 0.0
        %566 = vmatprep.subr.mxu0 0.0
        %v567 = vand.u32 %v342, 4294901760
        %568 = vmatpush1.msra.mxu0 %v567
        %569 = vmatprep.subr.mxu0 0.0
        %v570 = vand.u32 %v341, 4294901760
        %571 = vmatpush1.msra.mxu0 %v570
        %572 = vmatprep.subr.mxu0 0.0
        %573 = vmatpush2.msra.mxu0 0.0
        %574 = vmatprep.subr.mxu0 0.0
        %575 = vmatpush2.msra.mxu0 0.0
        %576 = vmatprep.subr.mxu0 0.0
        %577 = vmatpush2.msra.mxu0 0.0
        %578 = vmatprep.subr.mxu0 0.0
        %579 = vmatpush2.msra.mxu0 0.0
        %580 = vmatprep.subr.mxu0 0.0
        %581 = vmatpush2.msra.mxu0 0.0
        %582 = vmatprep.subr.mxu0 0.0
        %583 = vmatpush2.msra.mxu0 0.0
        %584 = vmatprep.subr.mxu0 0.0
        %585 = vmatpush2.msra.mxu0 0.0
        %586 = vmatprep.subr.mxu0 0.0
        %587 = vmatpush2.msra.mxu0 0.0
        %588 = vmatprep.subr.mxu0 0.0
        %589 = vmatpush2.msra.mxu0 0.0
        %590 = vmatprep.subr.mxu0 0.0
        %591 = vmatpush2.msra.mxu0 0.0
        %592 = vmatprep.subr.mxu0 0.0
        %593 = vmatpush2.msra.mxu0 0.0
        %594 = vmatprep.subr.mxu0 0.0
        %595 = vmatpush2.msra.mxu0 0.0
        %596 = vmatprep.subr.mxu0 0.0
        %597 = vmatpush2.msra.mxu0 0.0
        %598 = vmatprep.subr.mxu0 0.0
        %599 = vmatpush2.msra.mxu0 0.0
        %600 = vmatprep.subr.mxu0 0.0
        %601 = vmatpush2.msra.mxu0 0.0
        %602 = vmatprep.subr.mxu0 0.0
        %603 = vmatpush2.msra.mxu0 0.0
        %604 = vmatprep.mubr.f32.mxu0 0.0
        %v605 = vand.u32 %v491, 4294901760
        %v606 = vsub.f32 %v491, %v605
        %v607 = vand.u32 %v606, 4294901760
        %v608 = vsub.f32 %v606, %v607
        %v609 = vand.u32 %v608, 4294901760
        %610 = vmatmul.mubr.f32.gmra.mxu0 %v609
        %v611 = vpop.f32.mrf.mxu0
        %v612 = vadd.f32 0.0, %v611
        %v613 = vpop.f32.mrf.mxu0
        %614 = vmatprep.mubr.f32.mxu0 0.0
        %v615 = vand.u32 %v494, 4294901760
        %v616 = vsub.f32 %v494, %v615
        %v617 = vand.u32 %v616, 4294901760
        %v618 = vsub.f32 %v616, %v617
        %v619 = vand.u32 %v618, 4294901760
        %620 = vmatmul.mubr.f32.gmra.mxu0 %v619
        %v621 = vpop.f32.mrf.mxu0
        %v622 = vadd.f32 0.0, %v621
        %v623 = vpop.f32.mrf.mxu0
        %624 = vmatprep.mubr.f32.mxu0 0.0
        %v625 = vand.u32 %v497, 4294901760
        %v626 = vsub.f32 %v497, %v625
        %v627 = vand.u32 %v626, 4294901760
        %v628 = vsub.f32 %v626, %v627
        %v629 = vand.u32 %v628, 4294901760
        %630 = vmatmul.mubr.f32.gmra.mxu0 %v629
        %v631 = vpop.f32.mrf.mxu0
        %v632 = vadd.f32 0.0, %v631
        %v633 = vpop.f32.mrf.mxu0
        %634 = vmatprep.mubr.f32.mxu0 0.0
        %v635 = vand.u32 %v500, 4294901760
        %v636 = vsub.f32 %v500, %v635
        %v637 = vand.u32 %v636, 4294901760
        %v638 = vsub.f32 %v636, %v637
        %v639 = vand.u32 %v638, 4294901760
        %640 = vmatmul.mubr.f32.gmra.mxu0 %v639
        %v641 = vpop.f32.mrf.mxu0
        %v642 = vadd.f32 0.0, %v641
        %v643 = vpop.f32.mrf.mxu0
        %644 = vmatprep.mubr.f32.mxu0 0.0
        %v645 = vand.u32 %v503, 4294901760
        %v646 = vsub.f32 %v503, %v645
        %v647 = vand.u32 %v646, 4294901760
        %v648 = vsub.f32 %v646, %v647
        %v649 = vand.u32 %v648, 4294901760
        %650 = vmatmul.mubr.f32.gmra.mxu0 %v649
        %v651 = vpop.f32.mrf.mxu0
        %v652 = vadd.f32 0.0, %v651
        %v653 = vpop.f32.mrf.mxu0
        %654 = vmatprep.mubr.f32.mxu0 0.0
        %v655 = vand.u32 %v506, 4294901760
        %v656 = vsub.f32 %v506, %v655
        %v657 = vand.u32 %v656, 4294901760
        %v658 = vsub.f32 %v656, %v657
        %v659 = vand.u32 %v658, 4294901760
        %660 = vmatmul.mubr.f32.gmra.mxu0 %v659
        %v661 = vpop.f32.mrf.mxu0
        %v662 = vadd.f32 0.0, %v661
        %v663 = vpop.f32.mrf.mxu0
        %664 = vmatprep.mubr.f32.mxu0 0.0
        %v665 = vand.u32 %v509, 4294901760
        %v666 = vsub.f32 %v509, %v665
        %v667 = vand.u32 %v666, 4294901760
        %v668 = vsub.f32 %v666, %v667
        %v669 = vand.u32 %v668, 4294901760
        %670 = vmatmul.mubr.f32.gmra.mxu0 %v669
        %v671 = vpop.f32.mrf.mxu0
        %v672 = vadd.f32 0.0, %v671
        %v673 = vpop.f32.mrf.mxu0
        %674 = vmatprep.mubr.f32.mxu0 0.0
        %v675 = vand.u32 %v512, 4294901760
        %v676 = vsub.f32 %v512, %v675
        %v677 = vand.u32 %v676, 4294901760
        %v678 = vsub.f32 %v676, %v677
        %v679 = vand.u32 %v678, 4294901760
        %680 = vmatmul.mubr.f32.gmra.mxu0 %v679
        %v681 = vpop.f32.mrf.mxu0
        %v682 = vadd.f32 0.0, %v681
        %v683 = vpop.f32.mrf.mxu0
        %684 = vmatprep.mubr.f32.mxu0 0.0
        %v685 = vand.u32 %v515, 4294901760
        %v686 = vsub.f32 %v515, %v685
        %v687 = vand.u32 %v686, 4294901760
        %v688 = vsub.f32 %v686, %v687
        %v689 = vand.u32 %v688, 4294901760
        %690 = vmatmul.mubr.f32.gmra.mxu0 %v689
        %v691 = vpop.f32.mrf.mxu0
        %v692 = vadd.f32 0.0, %v691
        %v693 = vpop.f32.mrf.mxu0
        %694 = vmatprep.mubr.f32.mxu0 0.0
        %v695 = vand.u32 %v518, 4294901760
        %v696 = vsub.f32 %v518, %v695
        %v697 = vand.u32 %v696, 4294901760
        %v698 = vsub.f32 %v696, %v697
        %v699 = vand.u32 %v698, 4294901760
        %700 = vmatmul.mubr.f32.gmra.mxu0 %v699
        %v701 = vpop.f32.mrf.mxu0
        %v702 = vadd.f32 0.0, %v701
        %v703 = vpop.f32.mrf.mxu0
        %704 = vmatprep.mubr.f32.mxu0 0.0
        %v705 = vand.u32 %v521, 4294901760
        %v706 = vsub.f32 %v521, %v705
        %v707 = vand.u32 %v706, 4294901760
        %v708 = vsub.f32 %v706, %v707
        %v709 = vand.u32 %v708, 4294901760
        %710 = vmatmul.mubr.f32.gmra.mxu0 %v709
        %v711 = vpop.f32.mrf.mxu0
        %v712 = vadd.f32 0.0, %v711
        %v713 = vpop.f32.mrf.mxu0
        %714 = vmatprep.mubr.f32.mxu0 0.0
        %v715 = vand.u32 %v524, 4294901760
        %v716 = vsub.f32 %v524, %v715
        %v717 = vand.u32 %v716, 4294901760
        %v718 = vsub.f32 %v716, %v717
        %v719 = vand.u32 %v718, 4294901760
        %720 = vmatmul.mubr.f32.gmra.mxu0 %v719
        %v721 = vpop.f32.mrf.mxu0
        %v722 = vadd.f32 0.0, %v721
        %v723 = vpop.f32.mrf.mxu0
        %724 = vmatprep.mubr.f32.mxu0 0.0
        %v725 = vand.u32 %v527, 4294901760
        %v726 = vsub.f32 %v527, %v725
        %v727 = vand.u32 %v726, 4294901760
        %v728 = vsub.f32 %v726, %v727
        %v729 = vand.u32 %v728, 4294901760
        %730 = vmatmul.mubr.f32.gmra.mxu0 %v729
        %v731 = vpop.f32.mrf.mxu0
        %v732 = vadd.f32 0.0, %v731
        %v733 = vpop.f32.mrf.mxu0
        %734 = vmatprep.mubr.f32.mxu0 0.0
        %v735 = vand.u32 %v530, 4294901760
        %v736 = vsub.f32 %v530, %v735
        %v737 = vand.u32 %v736, 4294901760
        %v738 = vsub.f32 %v736, %v737
        %v739 = vand.u32 %v738, 4294901760
        %740 = vmatmul.mubr.f32.gmra.mxu0 %v739
        %v741 = vpop.f32.mrf.mxu0
        %v742 = vadd.f32 0.0, %v741
        %v743 = vpop.f32.mrf.mxu0
        %744 = vmatprep.mubr.f32.mxu0 0.0
        %v745 = vand.u32 %v533, 4294901760
        %v746 = vsub.f32 %v533, %v745
        %v747 = vand.u32 %v746, 4294901760
        %v748 = vsub.f32 %v746, %v747
        %v749 = vand.u32 %v748, 4294901760
        %750 = vmatmul.mubr.f32.gmra.mxu0 %v749
        %v751 = vpop.f32.mrf.mxu0
        %v752 = vadd.f32 0.0, %v751
        %v753 = vpop.f32.mrf.mxu0
        %754 = vmatprep.mubr.f32.mxu0 0.0
        %v755 = vand.u32 %v536, 4294901760
        %v756 = vsub.f32 %v536, %v755
        %v757 = vand.u32 %v756, 4294901760
        %v758 = vsub.f32 %v756, %v757
        %v759 = vand.u32 %v758, 4294901760
        %760 = vmatmul.mubr.f32.gmra.mxu0 %v759
        %v761 = vpop.f32.mrf.mxu0
        %v762 = vadd.f32 0.0, %v761
        %v763 = vpop.f32.mrf.mxu0
        %764 = vdwg.mxu0
        %765 = vmatprep.subr.mxu0 0.0
        %766 = vmatpush1.msra.mxu0 0.0
        %767 = vmatprep.subr.mxu0 0.0
        %768 = vmatpush1.msra.mxu0 0.0
        %769 = vmatprep.subr.mxu0 0.0
        %770 = vmatpush1.msra.mxu0 0.0
        %771 = vmatprep.subr.mxu0 0.0
        %772 = vmatpush1.msra.mxu0 0.0
        %773 = vmatprep.subr.mxu0 0.0
        %774 = vmatpush1.msra.mxu0 0.0
        %775 = vmatprep.subr.mxu0 0.0
        %776 = vmatpush1.msra.mxu0 0.0
        %777 = vmatprep.subr.mxu0 0.0
        %778 = vmatpush1.msra.mxu0 0.0
        %779 = vmatprep.subr.mxu0 0.0
        %780 = vmatpush1.msra.mxu0 0.0
        %781 = vmatprep.subr.mxu0 0.0
        %782 = vmatpush1.msra.mxu0 0.0
        %783 = vmatprep.subr.mxu0 0.0
        %784 = vmatpush1.msra.mxu0 0.0
        %785 = vmatprep.subr.mxu0 0.0
        %786 = vmatpush1.msra.mxu0 0.0
        %787 = vmatprep.subr.mxu0 0.0
        %788 = vmatpush1.msra.mxu0 0.0
        %789 = vmatprep.subr.mxu0 0.0
        %790 = vmatpush1.msra.mxu0 0.0
        %791 = vmatprep.subr.mxu0 0.0
        %792 = vmatpush1.msra.mxu0 0.0
        %793 = vmatprep.subr.mxu0 0.0
        %v794 = vand.u32 %v342, 4294901760
        %v795 = vsub.f32 %v342, %v794
        %v796 = vand.u32 %v795, 4294901760
        %v797 = vsub.f32 %v795, %v796
        %v798 = vand.u32 %v797, 4294901760
        %799 = vmatpush1.msra.mxu0 %v798
        %800 = vmatprep.subr.mxu0 0.0
        %v801 = vand.u32 %v341, 4294901760
        %v802 = vsub.f32 %v341, %v801
        %v803 = vand.u32 %v802, 4294901760
        %v804 = vsub.f32 %v802, %v803
        %v805 = vand.u32 %v804, 4294901760
        %806 = vmatpush1.msra.mxu0 %v805
        %807 = vmatprep.subr.mxu0 0.0
        %808 = vmatpush2.msra.mxu0 0.0
        %809 = vmatprep.subr.mxu0 0.0
        %810 = vmatpush2.msra.mxu0 0.0
        %811 = vmatprep.subr.mxu0 0.0
        %812 = vmatpush2.msra.mxu0 0.0
        %813 = vmatprep.subr.mxu0 0.0
        %814 = vmatpush2.msra.mxu0 0.0
        %815 = vmatprep.subr.mxu0 0.0
        %816 = vmatpush2.msra.mxu0 0.0
        %817 = vmatprep.subr.mxu0 0.0
        %818 = vmatpush2.msra.mxu0 0.0
        %819 = vmatprep.subr.mxu0 0.0
        %820 = vmatpush2.msra.mxu0 0.0
        %821 = vmatprep.subr.mxu0 0.0
        %822 = vmatpush2.msra.mxu0 0.0
        %823 = vmatprep.subr.mxu0 0.0
        %824 = vmatpush2.msra.mxu0 0.0
        %825 = vmatprep.subr.mxu0 0.0
        %826 = vmatpush2.msra.mxu0 0.0
        %827 = vmatprep.subr.mxu0 0.0
        %828 = vmatpush2.msra.mxu0 0.0
        %829 = vmatprep.subr.mxu0 0.0
        %830 = vmatpush2.msra.mxu0 0.0
        %831 = vmatprep.subr.mxu0 0.0
        %832 = vmatpush2.msra.mxu0 0.0
        %833 = vmatprep.subr.mxu0 0.0
        %834 = vmatpush2.msra.mxu0 0.0
        %835 = vmatprep.subr.mxu0 0.0
        %836 = vmatpush2.msra.mxu0 0.0
        %837 = vmatprep.subr.mxu0 0.0
        %838 = vmatpush2.msra.mxu0 0.0
        %839 = vmatprep.mubr.f32.mxu0 0.0
        %v840 = vand.u32 %v491, 4294901760
        %841 = vmatmul.mubr.f32.gmra.mxu0 %v840
        %v842 = vpop.f32.mrf.mxu0
        %v843 = vadd.f32 %v612, %v842
        %v844 = vpop.f32.mrf.mxu0
        %845 = vmatprep.mubr.f32.mxu0 0.0
        %v846 = vand.u32 %v494, 4294901760
        %847 = vmatmul.mubr.f32.gmra.mxu0 %v846
        %v848 = vpop.f32.mrf.mxu0
        %v849 = vadd.f32 %v622, %v848
        %v850 = vpop.f32.mrf.mxu0
        %851 = vmatprep.mubr.f32.mxu0 0.0
        %v852 = vand.u32 %v497, 4294901760
        %853 = vmatmul.mubr.f32.gmra.mxu0 %v852
        %v854 = vpop.f32.mrf.mxu0
        %v855 = vadd.f32 %v632, %v854
        %v856 = vpop.f32.mrf.mxu0
        %857 = vmatprep.mubr.f32.mxu0 0.0
        %v858 = vand.u32 %v500, 4294901760
        %859 = vmatmul.mubr.f32.gmra.mxu0 %v858
        %v860 = vpop.f32.mrf.mxu0
        %v861 = vadd.f32 %v642, %v860
        %v862 = vpop.f32.mrf.mxu0
        %863 = vmatprep.mubr.f32.mxu0 0.0
        %v864 = vand.u32 %v503, 4294901760
        %865 = vmatmul.mubr.f32.gmra.mxu0 %v864
        %v866 = vpop.f32.mrf.mxu0
        %v867 = vadd.f32 %v652, %v866
        %v868 = vpop.f32.mrf.mxu0
        %869 = vmatprep.mubr.f32.mxu0 0.0
        %v870 = vand.u32 %v506, 4294901760
        %871 = vmatmul.mubr.f32.gmra.mxu0 %v870
        %v872 = vpop.f32.mrf.mxu0
        %v873 = vadd.f32 %v662, %v872
        %v874 = vpop.f32.mrf.mxu0
        %875 = vmatprep.mubr.f32.mxu0 0.0
        %v876 = vand.u32 %v509, 4294901760
        %877 = vmatmul.mubr.f32.gmra.mxu0 %v876
        %v878 = vpop.f32.mrf.mxu0
        %v879 = vadd.f32 %v672, %v878
        %v880 = vpop.f32.mrf.mxu0
        %881 = vmatprep.mubr.f32.mxu0 0.0
        %v882 = vand.u32 %v512, 4294901760
        %883 = vmatmul.mubr.f32.gmra.mxu0 %v882
        %v884 = vpop.f32.mrf.mxu0
        %v885 = vadd.f32 %v682, %v884
        %v886 = vpop.f32.mrf.mxu0
        %887 = vmatprep.mubr.f32.mxu0 0.0
        %v888 = vand.u32 %v515, 4294901760
        %889 = vmatmul.mubr.f32.gmra.mxu0 %v888
        %v890 = vpop.f32.mrf.mxu0
        %v891 = vadd.f32 %v692, %v890
        %v892 = vpop.f32.mrf.mxu0
        %893 = vmatprep.mubr.f32.mxu0 0.0
        %v894 = vand.u32 %v518, 4294901760
        %895 = vmatmul.mubr.f32.gmra.mxu0 %v894
        %v896 = vpop.f32.mrf.mxu0
        %v897 = vadd.f32 %v702, %v896
        %v898 = vpop.f32.mrf.mxu0
        %899 = vmatprep.mubr.f32.mxu0 0.0
        %v900 = vand.u32 %v521, 4294901760
        %901 = vmatmul.mubr.f32.gmra.mxu0 %v900
        %v902 = vpop.f32.mrf.mxu0
        %v903 = vadd.f32 %v712, %v902
        %v904 = vpop.f32.mrf.mxu0
        %905 = vmatprep.mubr.f32.mxu0 0.0
        %v906 = vand.u32 %v524, 4294901760
        %907 = vmatmul.mubr.f32.gmra.mxu0 %v906
        %v908 = vpop.f32.mrf.mxu0
        %v909 = vadd.f32 %v722, %v908
        %v910 = vpop.f32.mrf.mxu0
        %911 = vmatprep.mubr.f32.mxu0 0.0
        %v912 = vand.u32 %v527, 4294901760
        %913 = vmatmul.mubr.f32.gmra.mxu0 %v912
        %v914 = vpop.f32.mrf.mxu0
        %v915 = vadd.f32 %v732, %v914
        %v916 = vpop.f32.mrf.mxu0
        %917 = vmatprep.mubr.f32.mxu0 0.0
        %v918 = vand.u32 %v530, 4294901760
        %919 = vmatmul.mubr.f32.gmra.mxu0 %v918
        %v920 = vpop.f32.mrf.mxu0
        %v921 = vadd.f32 %v742, %v920
        %v922 = vpop.f32.mrf.mxu0
        %923 = vmatprep.mubr.f32.mxu0 0.0
        %v924 = vand.u32 %v533, 4294901760
        %925 = vmatmul.mubr.f32.gmra.mxu0 %v924
        %v926 = vpop.f32.mrf.mxu0
        %v927 = vadd.f32 %v752, %v926
        %v928 = vpop.f32.mrf.mxu0
        %929 = vmatprep.mubr.f32.mxu0 0.0
        %v930 = vand.u32 %v536, 4294901760
        %931 = vmatmul.mubr.f32.gmra.mxu0 %v930
        %v932 = vpop.f32.mrf.mxu0
        %v933 = vadd.f32 %v762, %v932
        %v934 = vpop.f32.mrf.mxu0
        %935 = vdwg.mxu0
        %936 = vmatprep.subr.mxu0 0.0
        %937 = vmatpush1.msra.mxu0 0.0
        %938 = vmatprep.subr.mxu0 0.0
        %939 = vmatpush1.msra.mxu0 0.0
        %940 = vmatprep.subr.mxu0 0.0
        %941 = vmatpush1.msra.mxu0 0.0
        %942 = vmatprep.subr.mxu0 0.0
        %943 = vmatpush1.msra.mxu0 0.0
        %944 = vmatprep.subr.mxu0 0.0
        %945 = vmatpush1.msra.mxu0 0.0
        %946 = vmatprep.subr.mxu0 0.0
        %947 = vmatpush1.msra.mxu0 0.0
        %948 = vmatprep.subr.mxu0 0.0
        %949 = vmatpush1.msra.mxu0 0.0
        %950 = vmatprep.subr.mxu0 0.0
        %951 = vmatpush1.msra.mxu0 0.0
        %952 = vmatprep.subr.mxu0 0.0
        %953 = vmatpush1.msra.mxu0 0.0
        %954 = vmatprep.subr.mxu0 0.0
        %955 = vmatpush1.msra.mxu0 0.0
        %956 = vmatprep.subr.mxu0 0.0
        %957 = vmatpush1.msra.mxu0 0.0
        %958 = vmatprep.subr.mxu0 0.0
        %959 = vmatpush1.msra.mxu0 0.0
        %960 = vmatprep.subr.mxu0 0.0
        %961 = vmatpush1.msra.mxu0 0.0
        %962 = vmatprep.subr.mxu0 0.0
        %963 = vmatpush1.msra.mxu0 0.0
        %964 = vmatprep.subr.mxu0 0.0
        %v965 = vand.u32 %v342, 4294901760
        %v966 = vsub.f32 %v342, %v965
        %967 = vmatpush1.msra.mxu0 %v966
        %968 = vmatprep.subr.mxu0 0.0
        %v969 = vand.u32 %v341, 4294901760
        %v970 = vsub.f32 %v341, %v969
        %971 = vmatpush1.msra.mxu0 %v970
        %972 = vmatprep.subr.mxu0 0.0
        %973 = vmatpush2.msra.mxu0 0.0
        %974 = vmatprep.subr.mxu0 0.0
        %975 = vmatpush2.msra.mxu0 0.0
        %976 = vmatprep.subr.mxu0 0.0
        %977 = vmatpush2.msra.mxu0 0.0
        %978 = vmatprep.subr.mxu0 0.0
        %979 = vmatpush2.msra.mxu0 0.0
        %980 = vmatprep.subr.mxu0 0.0
        %981 = vmatpush2.msra.mxu0 0.0
        %982 = vmatprep.subr.mxu0 0.0
        %983 = vmatpush2.msra.mxu0 0.0
        %984 = vmatprep.subr.mxu0 0.0
        %985 = vmatpush2.msra.mxu0 0.0
        %986 = vmatprep.subr.mxu0 0.0
        %987 = vmatpush2.msra.mxu0 0.0
        %988 = vmatprep.subr.mxu0 0.0
        %989 = vmatpush2.msra.mxu0 0.0
        %990 = vmatprep.subr.mxu0 0.0
        %991 = vmatpush2.msra.mxu0 0.0
        %992 = vmatprep.subr.mxu0 0.0
        %993 = vmatpush2.msra.mxu0 0.0
        %994 = vmatprep.subr.mxu0 0.0
        %995 = vmatpush2.msra.mxu0 0.0
        %996 = vmatprep.subr.mxu0 0.0
        %997 = vmatpush2.msra.mxu0 0.0
        %998 = vmatprep.subr.mxu0 0.0
        %999 = vmatpush2.msra.mxu0 0.0
        %1000 = vmatprep.subr.mxu0 0.0
        %1001 = vmatpush2.msra.mxu0 0.0
        %1002 = vmatprep.subr.mxu0 0.0
        %1003 = vmatpush2.msra.mxu0 0.0
        %1004 = vmatprep.mubr.f32.mxu0 0.0
        %v1005 = vand.u32 %v491, 4294901760
        %v1006 = vsub.f32 %v491, %v1005
        %1007 = vmatmul.mubr.f32.gmra.mxu0 %v1006
        %v1008 = vpop.f32.mrf.mxu0
        %v1009 = vadd.f32 %v843, %v1008
        %v1010 = vpop.f32.mrf.mxu0
        %1011 = vmatprep.mubr.f32.mxu0 0.0
        %v1012 = vand.u32 %v494, 4294901760
        %v1013 = vsub.f32 %v494, %v1012
        %1014 = vmatmul.mubr.f32.gmra.mxu0 %v1013
        %v1015 = vpop.f32.mrf.mxu0
        %v1016 = vadd.f32 %v849, %v1015
        %v1017 = vpop.f32.mrf.mxu0
        %1018 = vmatprep.mubr.f32.mxu0 0.0
        %v1019 = vand.u32 %v497, 4294901760
        %v1020 = vsub.f32 %v497, %v1019
        %1021 = vmatmul.mubr.f32.gmra.mxu0 %v1020
        %v1022 = vpop.f32.mrf.mxu0
        %v1023 = vadd.f32 %v855, %v1022
        %v1024 = vpop.f32.mrf.mxu0
        %1025 = vmatprep.mubr.f32.mxu0 0.0
        %v1026 = vand.u32 %v500, 4294901760
        %v1027 = vsub.f32 %v500, %v1026
        %1028 = vmatmul.mubr.f32.gmra.mxu0 %v1027
        %v1029 = vpop.f32.mrf.mxu0
        %v1030 = vadd.f32 %v861, %v1029
        %v1031 = vpop.f32.mrf.mxu0
        %1032 = vmatprep.mubr.f32.mxu0 0.0
        %v1033 = vand.u32 %v503, 4294901760
        %v1034 = vsub.f32 %v503, %v1033
        %1035 = vmatmul.mubr.f32.gmra.mxu0 %v1034
        %v1036 = vpop.f32.mrf.mxu0
        %v1037 = vadd.f32 %v867, %v1036
        %v1038 = vpop.f32.mrf.mxu0
        %1039 = vmatprep.mubr.f32.mxu0 0.0
        %v1040 = vand.u32 %v506, 4294901760
        %v1041 = vsub.f32 %v506, %v1040
        %1042 = vmatmul.mubr.f32.gmra.mxu0 %v1041
        %v1043 = vpop.f32.mrf.mxu0
        %v1044 = vadd.f32 %v873, %v1043
        %v1045 = vpop.f32.mrf.mxu0
        %1046 = vmatprep.mubr.f32.mxu0 0.0
        %v1047 = vand.u32 %v509, 4294901760
        %v1048 = vsub.f32 %v509, %v1047
        %1049 = vmatmul.mubr.f32.gmra.mxu0 %v1048
        %v1050 = vpop.f32.mrf.mxu0
        %v1051 = vadd.f32 %v879, %v1050
        %v1052 = vpop.f32.mrf.mxu0
        %1053 = vmatprep.mubr.f32.mxu0 0.0
        %v1054 = vand.u32 %v512, 4294901760
        %v1055 = vsub.f32 %v512, %v1054
        %1056 = vmatmul.mubr.f32.gmra.mxu0 %v1055
        %v1057 = vpop.f32.mrf.mxu0
        %v1058 = vadd.f32 %v885, %v1057
        %v1059 = vpop.f32.mrf.mxu0
        %1060 = vmatprep.mubr.f32.mxu0 0.0
        %v1061 = vand.u32 %v515, 4294901760
        %v1062 = vsub.f32 %v515, %v1061
        %1063 = vmatmul.mubr.f32.gmra.mxu0 %v1062
        %v1064 = vpop.f32.mrf.mxu0
        %v1065 = vadd.f32 %v891, %v1064
        %v1066 = vpop.f32.mrf.mxu0
        %1067 = vmatprep.mubr.f32.mxu0 0.0
        %v1068 = vand.u32 %v518, 4294901760
        %v1069 = vsub.f32 %v518, %v1068
        %1070 = vmatmul.mubr.f32.gmra.mxu0 %v1069
        %v1071 = vpop.f32.mrf.mxu0
        %v1072 = vadd.f32 %v897, %v1071
        %v1073 = vpop.f32.mrf.mxu0
        %1074 = vmatprep.mubr.f32.mxu0 0.0
        %v1075 = vand.u32 %v521, 4294901760
        %v1076 = vsub.f32 %v521, %v1075
        %1077 = vmatmul.mubr.f32.gmra.mxu0 %v1076
        %v1078 = vpop.f32.mrf.mxu0
        %v1079 = vadd.f32 %v903, %v1078
        %v1080 = vpop.f32.mrf.mxu0
        %1081 = vmatprep.mubr.f32.mxu0 0.0
        %v1082 = vand.u32 %v524, 4294901760
        %v1083 = vsub.f32 %v524, %v1082
        %1084 = vmatmul.mubr.f32.gmra.mxu0 %v1083
        %v1085 = vpop.f32.mrf.mxu0
        %v1086 = vadd.f32 %v909, %v1085
        %v1087 = vpop.f32.mrf.mxu0
        %1088 = vmatprep.mubr.f32.mxu0 0.0
        %v1089 = vand.u32 %v527, 4294901760
        %v1090 = vsub.f32 %v527, %v1089
        %1091 = vmatmul.mubr.f32.gmra.mxu0 %v1090
        %v1092 = vpop.f32.mrf.mxu0
        %v1093 = vadd.f32 %v915, %v1092
        %v1094 = vpop.f32.mrf.mxu0
        %1095 = vmatprep.mubr.f32.mxu0 0.0
        %v1096 = vand.u32 %v530, 4294901760
        %v1097 = vsub.f32 %v530, %v1096
        %1098 = vmatmul.mubr.f32.gmra.mxu0 %v1097
        %v1099 = vpop.f32.mrf.mxu0
        %v1100 = vadd.f32 %v921, %v1099
        %v1101 = vpop.f32.mrf.mxu0
        %1102 = vmatprep.mubr.f32.mxu0 0.0
        %v1103 = vand.u32 %v533, 4294901760
        %v1104 = vsub.f32 %v533, %v1103
        %1105 = vmatmul.mubr.f32.gmra.mxu0 %v1104
        %v1106 = vpop.f32.mrf.mxu0
        %v1107 = vadd.f32 %v927, %v1106
        %v1108 = vpop.f32.mrf.mxu0
        %1109 = vmatprep.mubr.f32.mxu0 0.0
        %v1110 = vand.u32 %v536, 4294901760
        %v1111 = vsub.f32 %v536, %v1110
        %1112 = vmatmul.mubr.f32.gmra.mxu0 %v1111
        %v1113 = vpop.f32.mrf.mxu0
        %v1114 = vadd.f32 %v933, %v1113
        %v1115 = vpop.f32.mrf.mxu0
        %1116 = vdwg.mxu0
        %1117 = vmatprep.subr.mxu0 0.0
        %1118 = vmatpush1.msra.mxu0 0.0
        %1119 = vmatprep.subr.mxu0 0.0
        %1120 = vmatpush1.msra.mxu0 0.0
        %1121 = vmatprep.subr.mxu0 0.0
        %1122 = vmatpush1.msra.mxu0 0.0
        %1123 = vmatprep.subr.mxu0 0.0
        %1124 = vmatpush1.msra.mxu0 0.0
        %1125 = vmatprep.subr.mxu0 0.0
        %1126 = vmatpush1.msra.mxu0 0.0
        %1127 = vmatprep.subr.mxu0 0.0
        %1128 = vmatpush1.msra.mxu0 0.0
        %1129 = vmatprep.subr.mxu0 0.0
        %1130 = vmatpush1.msra.mxu0 0.0
        %1131 = vmatprep.subr.mxu0 0.0
        %1132 = vmatpush1.msra.mxu0 0.0
        %1133 = vmatprep.subr.mxu0 0.0
        %1134 = vmatpush1.msra.mxu0 0.0
        %1135 = vmatprep.subr.mxu0 0.0
        %1136 = vmatpush1.msra.mxu0 0.0
        %1137 = vmatprep.subr.mxu0 0.0
        %1138 = vmatpush1.msra.mxu0 0.0
        %1139 = vmatprep.subr.mxu0 0.0
        %1140 = vmatpush1.msra.mxu0 0.0
        %1141 = vmatprep.subr.mxu0 0.0
        %1142 = vmatpush1.msra.mxu0 0.0
        %1143 = vmatprep.subr.mxu0 0.0
        %1144 = vmatpush1.msra.mxu0 0.0
        %1145 = vmatprep.subr.mxu0 0.0
        %v1146 = vand.u32 %v342, 4294901760
        %1147 = vmatpush1.msra.mxu0 %v1146
        %1148 = vmatprep.subr.mxu0 0.0
        %v1149 = vand.u32 %v341, 4294901760
        %1150 = vmatpush1.msra.mxu0 %v1149
        %1151 = vmatprep.subr.mxu0 0.0
        %1152 = vmatpush2.msra.mxu0 0.0
        %1153 = vmatprep.subr.mxu0 0.0
        %1154 = vmatpush2.msra.mxu0 0.0
        %1155 = vmatprep.subr.mxu0 0.0
        %1156 = vmatpush2.msra.mxu0 0.0
        %1157 = vmatprep.subr.mxu0 0.0
        %1158 = vmatpush2.msra.mxu0 0.0
        %1159 = vmatprep.subr.mxu0 0.0
        %1160 = vmatpush2.msra.mxu0 0.0
        %1161 = vmatprep.subr.mxu0 0.0
        %1162 = vmatpush2.msra.mxu0 0.0
        %1163 = vmatprep.subr.mxu0 0.0
        %1164 = vmatpush2.msra.mxu0 0.0
        %1165 = vmatprep.subr.mxu0 0.0
        %1166 = vmatpush2.msra.mxu0 0.0
        %1167 = vmatprep.subr.mxu0 0.0
        %1168 = vmatpush2.msra.mxu0 0.0
        %1169 = vmatprep.subr.mxu0 0.0
        %1170 = vmatpush2.msra.mxu0 0.0
        %1171 = vmatprep.subr.mxu0 0.0
        %1172 = vmatpush2.msra.mxu0 0.0
        %1173 = vmatprep.subr.mxu0 0.0
        %1174 = vmatpush2.msra.mxu0 0.0
        %1175 = vmatprep.subr.mxu0 0.0
        %1176 = vmatpush2.msra.mxu0 0.0
        %1177 = vmatprep.subr.mxu0 0.0
        %1178 = vmatpush2.msra.mxu0 0.0
        %1179 = vmatprep.subr.mxu0 0.0
        %1180 = vmatpush2.msra.mxu0 0.0
        %1181 = vmatprep.subr.mxu0 0.0
        %1182 = vmatpush2.msra.mxu0 0.0
        %1183 = vmatprep.mubr.f32.mxu0 0.0
        %v1184 = vand.u32 %v491, 4294901760
        %v1185 = vsub.f32 %v491, %v1184
        %v1186 = vand.u32 %v1185, 4294901760
        %1187 = vmatmul.mubr.f32.gmra.mxu0 %v1186
        %v1188 = vpop.f32.mrf.mxu0
        %v1189 = vadd.f32 %v1009, %v1188
        %v1190 = vpop.f32.mrf.mxu0
        %1191 = vmatprep.mubr.f32.mxu0 0.0
        %v1192 = vand.u32 %v494, 4294901760
        %v1193 = vsub.f32 %v494, %v1192
        %v1194 = vand.u32 %v1193, 4294901760
        %1195 = vmatmul.mubr.f32.gmra.mxu0 %v1194
        %v1196 = vpop.f32.mrf.mxu0
        %v1197 = vadd.f32 %v1016, %v1196
        %v1198 = vpop.f32.mrf.mxu0
        %1199 = vmatprep.mubr.f32.mxu0 0.0
        %v1200 = vand.u32 %v497, 4294901760
        %v1201 = vsub.f32 %v497, %v1200
        %v1202 = vand.u32 %v1201, 4294901760
        %1203 = vmatmul.mubr.f32.gmra.mxu0 %v1202
        %v1204 = vpop.f32.mrf.mxu0
        %v1205 = vadd.f32 %v1023, %v1204
        %v1206 = vpop.f32.mrf.mxu0
        %1207 = vmatprep.mubr.f32.mxu0 0.0
        %v1208 = vand.u32 %v500, 4294901760
        %v1209 = vsub.f32 %v500, %v1208
        %v1210 = vand.u32 %v1209, 4294901760
        %1211 = vmatmul.mubr.f32.gmra.mxu0 %v1210
        %v1212 = vpop.f32.mrf.mxu0
        %v1213 = vadd.f32 %v1030, %v1212
        %v1214 = vpop.f32.mrf.mxu0
        %1215 = vmatprep.mubr.f32.mxu0 0.0
        %v1216 = vand.u32 %v503, 4294901760
        %v1217 = vsub.f32 %v503, %v1216
        %v1218 = vand.u32 %v1217, 4294901760
        %1219 = vmatmul.mubr.f32.gmra.mxu0 %v1218
        %v1220 = vpop.f32.mrf.mxu0
        %v1221 = vadd.f32 %v1037, %v1220
        %v1222 = vpop.f32.mrf.mxu0
        %1223 = vmatprep.mubr.f32.mxu0 0.0
        %v1224 = vand.u32 %v506, 4294901760
        %v1225 = vsub.f32 %v506, %v1224
        %v1226 = vand.u32 %v1225, 4294901760
        %1227 = vmatmul.mubr.f32.gmra.mxu0 %v1226
        %v1228 = vpop.f32.mrf.mxu0
        %v1229 = vadd.f32 %v1044, %v1228
        %v1230 = vpop.f32.mrf.mxu0
        %1231 = vmatprep.mubr.f32.mxu0 0.0
        %v1232 = vand.u32 %v509, 4294901760
        %v1233 = vsub.f32 %v509, %v1232
        %v1234 = vand.u32 %v1233, 4294901760
        %1235 = vmatmul.mubr.f32.gmra.mxu0 %v1234
        %v1236 = vpop.f32.mrf.mxu0
        %v1237 = vadd.f32 %v1051, %v1236
        %v1238 = vpop.f32.mrf.mxu0
        %1239 = vmatprep.mubr.f32.mxu0 0.0
        %v1240 = vand.u32 %v512, 4294901760
        %v1241 = vsub.f32 %v512, %v1240
        %v1242 = vand.u32 %v1241, 4294901760
        %1243 = vmatmul.mubr.f32.gmra.mxu0 %v1242
        %v1244 = vpop.f32.mrf.mxu0
        %v1245 = vadd.f32 %v1058, %v1244
        %v1246 = vpop.f32.mrf.mxu0
        %1247 = vmatprep.mubr.f32.mxu0 0.0
        %v1248 = vand.u32 %v515, 4294901760
        %v1249 = vsub.f32 %v515, %v1248
        %v1250 = vand.u32 %v1249, 4294901760
        %1251 = vmatmul.mubr.f32.gmra.mxu0 %v1250
        %v1252 = vpop.f32.mrf.mxu0
        %v1253 = vadd.f32 %v1065, %v1252
        %v1254 = vpop.f32.mrf.mxu0
        %1255 = vmatprep.mubr.f32.mxu0 0.0
        %v1256 = vand.u32 %v518, 4294901760
        %v1257 = vsub.f32 %v518, %v1256
        %v1258 = vand.u32 %v1257, 4294901760
        %1259 = vmatmul.mubr.f32.gmra.mxu0 %v1258
        %v1260 = vpop.f32.mrf.mxu0
        %v1261 = vadd.f32 %v1072, %v1260
        %v1262 = vpop.f32.mrf.mxu0
        %1263 = vmatprep.mubr.f32.mxu0 0.0
        %v1264 = vand.u32 %v521, 4294901760
        %v1265 = vsub.f32 %v521, %v1264
        %v1266 = vand.u32 %v1265, 4294901760
        %1267 = vmatmul.mubr.f32.gmra.mxu0 %v1266
        %v1268 = vpop.f32.mrf.mxu0
        %v1269 = vadd.f32 %v1079, %v1268
        %v1270 = vpop.f32.mrf.mxu0
        %1271 = vmatprep.mubr.f32.mxu0 0.0
        %v1272 = vand.u32 %v524, 4294901760
        %v1273 = vsub.f32 %v524, %v1272
        %v1274 = vand.u32 %v1273, 4294901760
        %1275 = vmatmul.mubr.f32.gmra.mxu0 %v1274
        %v1276 = vpop.f32.mrf.mxu0
        %v1277 = vadd.f32 %v1086, %v1276
        %v1278 = vpop.f32.mrf.mxu0
        %1279 = vmatprep.mubr.f32.mxu0 0.0
        %v1280 = vand.u32 %v527, 4294901760
        %v1281 = vsub.f32 %v527, %v1280
        %v1282 = vand.u32 %v1281, 4294901760
        %1283 = vmatmul.mubr.f32.gmra.mxu0 %v1282
        %v1284 = vpop.f32.mrf.mxu0
        %v1285 = vadd.f32 %v1093, %v1284
        %v1286 = vpop.f32.mrf.mxu0
        %1287 = vmatprep.mubr.f32.mxu0 0.0
        %v1288 = vand.u32 %v530, 4294901760
        %v1289 = vsub.f32 %v530, %v1288
        %v1290 = vand.u32 %v1289, 4294901760
        %1291 = vmatmul.mubr.f32.gmra.mxu0 %v1290
        %v1292 = vpop.f32.mrf.mxu0
        %v1293 = vadd.f32 %v1100, %v1292
        %v1294 = vpop.f32.mrf.mxu0
        %1295 = vmatprep.mubr.f32.mxu0 0.0
        %v1296 = vand.u32 %v533, 4294901760
        %v1297 = vsub.f32 %v533, %v1296
        %v1298 = vand.u32 %v1297, 4294901760
        %1299 = vmatmul.mubr.f32.gmra.mxu0 %v1298
        %v1300 = vpop.f32.mrf.mxu0
        %v1301 = vadd.f32 %v1107, %v1300
        %v1302 = vpop.f32.mrf.mxu0
        %1303 = vmatprep.mubr.f32.mxu0 0.0
        %v1304 = vand.u32 %v536, 4294901760
        %v1305 = vsub.f32 %v536, %v1304
        %v1306 = vand.u32 %v1305, 4294901760
        %1307 = vmatmul.mubr.f32.gmra.mxu0 %v1306
        %v1308 = vpop.f32.mrf.mxu0
        %v1309 = vadd.f32 %v1114, %v1308
        %v1310 = vpop.f32.mrf.mxu0
        %1311 = vdwg.mxu0
        %1312 = vmatprep.subr.mxu0 0.0
        %1313 = vmatpush1.msra.mxu0 0.0
        %1314 = vmatprep.subr.mxu0 0.0
        %1315 = vmatpush1.msra.mxu0 0.0
        %1316 = vmatprep.subr.mxu0 0.0
        %1317 = vmatpush1.msra.mxu0 0.0
        %1318 = vmatprep.subr.mxu0 0.0
        %1319 = vmatpush1.msra.mxu0 0.0
        %1320 = vmatprep.subr.mxu0 0.0
        %1321 = vmatpush1.msra.mxu0 0.0
        %1322 = vmatprep.subr.mxu0 0.0
        %1323 = vmatpush1.msra.mxu0 0.0
        %1324 = vmatprep.subr.mxu0 0.0
        %1325 = vmatpush1.msra.mxu0 0.0
        %1326 = vmatprep.subr.mxu0 0.0
        %1327 = vmatpush1.msra.mxu0 0.0
        %1328 = vmatprep.subr.mxu0 0.0
        %1329 = vmatpush1.msra.mxu0 0.0
        %1330 = vmatprep.subr.mxu0 0.0
        %1331 = vmatpush1.msra.mxu0 0.0
        %1332 = vmatprep.subr.mxu0 0.0
        %1333 = vmatpush1.msra.mxu0 0.0
        %1334 = vmatprep.subr.mxu0 0.0
        %1335 = vmatpush1.msra.mxu0 0.0
        %1336 = vmatprep.subr.mxu0 0.0
        %1337 = vmatpush1.msra.mxu0 0.0
        %1338 = vmatprep.subr.mxu0 0.0
        %1339 = vmatpush1.msra.mxu0 0.0
        %1340 = vmatprep.subr.mxu0 0.0
        %v1341 = vand.u32 %v342, 4294901760
        %v1342 = vsub.f32 %v342, %v1341
        %v1343 = vand.u32 %v1342, 4294901760
        %1344 = vmatpush1.msra.mxu0 %v1343
        %1345 = vmatprep.subr.mxu0 0.0
        %v1346 = vand.u32 %v341, 4294901760
        %v1347 = vsub.f32 %v341, %v1346
        %v1348 = vand.u32 %v1347, 4294901760
        %1349 = vmatpush1.msra.mxu0 %v1348
        %1350 = vmatprep.subr.mxu0 0.0
        %1351 = vmatpush2.msra.mxu0 0.0
        %1352 = vmatprep.subr.mxu0 0.0
        %1353 = vmatpush2.msra.mxu0 0.0
        %1354 = vmatprep.subr.mxu0 0.0
        %1355 = vmatpush2.msra.mxu0 0.0
        %1356 = vmatprep.subr.mxu0 0.0
        %1357 = vmatpush2.msra.mxu0 0.0
        %1358 = vmatprep.subr.mxu0 0.0
        %1359 = vmatpush2.msra.mxu0 0.0
        %1360 = vmatprep.subr.mxu0 0.0
        %1361 = vmatpush2.msra.mxu0 0.0
        %1362 = vmatprep.subr.mxu0 0.0
        %1363 = vmatpush2.msra.mxu0 0.0
        %1364 = vmatprep.subr.mxu0 0.0
        %1365 = vmatpush2.msra.mxu0 0.0
        %1366 = vmatprep.subr.mxu0 0.0
        %1367 = vmatpush2.msra.mxu0 0.0
        %1368 = vmatprep.subr.mxu0 0.0
        %1369 = vmatpush2.msra.mxu0 0.0
        %1370 = vmatprep.subr.mxu0 0.0
        %1371 = vmatpush2.msra.mxu0 0.0
        %1372 = vmatprep.subr.mxu0 0.0
        %1373 = vmatpush2.msra.mxu0 0.0
        %1374 = vmatprep.subr.mxu0 0.0
        %1375 = vmatpush2.msra.mxu0 0.0
        %1376 = vmatprep.subr.mxu0 0.0
        %1377 = vmatpush2.msra.mxu0 0.0
        %1378 = vmatprep.subr.mxu0 0.0
        %1379 = vmatpush2.msra.mxu0 0.0
        %1380 = vmatprep.subr.mxu0 0.0
        %1381 = vmatpush2.msra.mxu0 0.0
        %1382 = vmatprep.mubr.f32.mxu0 0.0
        %v1383 = vand.u32 %v491, 4294901760
        %1384 = vmatmul.mubr.f32.gmra.mxu0 %v1383
        %v1385 = vpop.f32.mrf.mxu0
        %v1386 = vadd.f32 %v1189, %v1385
        %v1387 = vpop.f32.mrf.mxu0
        %1388 = vmatprep.mubr.f32.mxu0 0.0
        %v1389 = vand.u32 %v494, 4294901760
        %1390 = vmatmul.mubr.f32.gmra.mxu0 %v1389
        %v1391 = vpop.f32.mrf.mxu0
        %v1392 = vadd.f32 %v1197, %v1391
        %v1393 = vpop.f32.mrf.mxu0
        %1394 = vmatprep.mubr.f32.mxu0 0.0
        %v1395 = vand.u32 %v497, 4294901760
        %1396 = vmatmul.mubr.f32.gmra.mxu0 %v1395
        %v1397 = vpop.f32.mrf.mxu0
        %v1398 = vadd.f32 %v1205, %v1397
        %v1399 = vpop.f32.mrf.mxu0
        %1400 = vmatprep.mubr.f32.mxu0 0.0
        %v1401 = vand.u32 %v500, 4294901760
        %1402 = vmatmul.mubr.f32.gmra.mxu0 %v1401
        %v1403 = vpop.f32.mrf.mxu0
        %v1404 = vadd.f32 %v1213, %v1403
        %v1405 = vpop.f32.mrf.mxu0
        %1406 = vmatprep.mubr.f32.mxu0 0.0
        %v1407 = vand.u32 %v503, 4294901760
        %1408 = vmatmul.mubr.f32.gmra.mxu0 %v1407
        %v1409 = vpop.f32.mrf.mxu0
        %v1410 = vadd.f32 %v1221, %v1409
        %v1411 = vpop.f32.mrf.mxu0
        %1412 = vmatprep.mubr.f32.mxu0 0.0
        %v1413 = vand.u32 %v506, 4294901760
        %1414 = vmatmul.mubr.f32.gmra.mxu0 %v1413
        %v1415 = vpop.f32.mrf.mxu0
        %v1416 = vadd.f32 %v1229, %v1415
        %v1417 = vpop.f32.mrf.mxu0
        %1418 = vmatprep.mubr.f32.mxu0 0.0
        %v1419 = vand.u32 %v509, 4294901760
        %1420 = vmatmul.mubr.f32.gmra.mxu0 %v1419
        %v1421 = vpop.f32.mrf.mxu0
        %v1422 = vadd.f32 %v1237, %v1421
        %v1423 = vpop.f32.mrf.mxu0
        %1424 = vmatprep.mubr.f32.mxu0 0.0
        %v1425 = vand.u32 %v512, 4294901760
        %1426 = vmatmul.mubr.f32.gmra.mxu0 %v1425
        %v1427 = vpop.f32.mrf.mxu0
        %v1428 = vadd.f32 %v1245, %v1427
        %v1429 = vpop.f32.mrf.mxu0
        %1430 = vmatprep.mubr.f32.mxu0 0.0
        %v1431 = vand.u32 %v515, 4294901760
        %1432 = vmatmul.mubr.f32.gmra.mxu0 %v1431
        %v1433 = vpop.f32.mrf.mxu0
        %v1434 = vadd.f32 %v1253, %v1433
        %v1435 = vpop.f32.mrf.mxu0
        %1436 = vmatprep.mubr.f32.mxu0 0.0
        %v1437 = vand.u32 %v518, 4294901760
        %1438 = vmatmul.mubr.f32.gmra.mxu0 %v1437
        %v1439 = vpop.f32.mrf.mxu0
        %v1440 = vadd.f32 %v1261, %v1439
        %v1441 = vpop.f32.mrf.mxu0
        %1442 = vmatprep.mubr.f32.mxu0 0.0
        %v1443 = vand.u32 %v521, 4294901760
        %1444 = vmatmul.mubr.f32.gmra.mxu0 %v1443
        %v1445 = vpop.f32.mrf.mxu0
        %v1446 = vadd.f32 %v1269, %v1445
        %v1447 = vpop.f32.mrf.mxu0
        %1448 = vmatprep.mubr.f32.mxu0 0.0
        %v1449 = vand.u32 %v524, 4294901760
        %1450 = vmatmul.mubr.f32.gmra.mxu0 %v1449
        %v1451 = vpop.f32.mrf.mxu0
        %v1452 = vadd.f32 %v1277, %v1451
        %v1453 = vpop.f32.mrf.mxu0
        %1454 = vmatprep.mubr.f32.mxu0 0.0
        %v1455 = vand.u32 %v527, 4294901760
        %1456 = vmatmul.mubr.f32.gmra.mxu0 %v1455
        %v1457 = vpop.f32.mrf.mxu0
        %v1458 = vadd.f32 %v1285, %v1457
        %v1459 = vpop.f32.mrf.mxu0
        %1460 = vmatprep.mubr.f32.mxu0 0.0
        %v1461 = vand.u32 %v530, 4294901760
        %1462 = vmatmul.mubr.f32.gmra.mxu0 %v1461
        %v1463 = vpop.f32.mrf.mxu0
        %v1464 = vadd.f32 %v1293, %v1463
        %v1465 = vpop.f32.mrf.mxu0
        %1466 = vmatprep.mubr.f32.mxu0 0.0
        %v1467 = vand.u32 %v533, 4294901760
        %1468 = vmatmul.mubr.f32.gmra.mxu0 %v1467
        %v1469 = vpop.f32.mrf.mxu0
        %v1470 = vadd.f32 %v1301, %v1469
        %v1471 = vpop.f32.mrf.mxu0
        %1472 = vmatprep.mubr.f32.mxu0 0.0
        %v1473 = vand.u32 %v536, 4294901760
        %1474 = vmatmul.mubr.f32.gmra.mxu0 %v1473
        %v1475 = vpop.f32.mrf.mxu0
        %v1476 = vadd.f32 %v1309, %v1475
        %v1477 = vpop.f32.mrf.mxu0
        %1478 = vdwg.mxu0
        %1479 = vmatprep.subr.mxu0 0.0
        %1480 = vmatpush1.msra.mxu0 0.0
        %1481 = vmatprep.subr.mxu0 0.0
        %1482 = vmatpush1.msra.mxu0 0.0
        %1483 = vmatprep.subr.mxu0 0.0
        %1484 = vmatpush1.msra.mxu0 0.0
        %1485 = vmatprep.subr.mxu0 0.0
        %1486 = vmatpush1.msra.mxu0 0.0
        %1487 = vmatprep.subr.mxu0 0.0
        %1488 = vmatpush1.msra.mxu0 0.0
        %1489 = vmatprep.subr.mxu0 0.0
        %1490 = vmatpush1.msra.mxu0 0.0
        %1491 = vmatprep.subr.mxu0 0.0
        %1492 = vmatpush1.msra.mxu0 0.0
        %1493 = vmatprep.subr.mxu0 0.0
        %1494 = vmatpush1.msra.mxu0 0.0
        %1495 = vmatprep.subr.mxu0 0.0
        %1496 = vmatpush1.msra.mxu0 0.0
        %1497 = vmatprep.subr.mxu0 0.0
        %1498 = vmatpush1.msra.mxu0 0.0
        %1499 = vmatprep.subr.mxu0 0.0
        %1500 = vmatpush1.msra.mxu0 0.0
        %1501 = vmatprep.subr.mxu0 0.0
        %1502 = vmatpush1.msra.mxu0 0.0
        %1503 = vmatprep.subr.mxu0 0.0
        %1504 = vmatpush1.msra.mxu0 0.0
        %1505 = vmatprep.subr.mxu0 0.0
        %1506 = vmatpush1.msra.mxu0 0.0
        %1507 = vmatprep.subr.mxu0 0.0
        %v1508 = vand.u32 %v342, 4294901760
        %1509 = vmatpush1.msra.mxu0 %v1508
        %1510 = vmatprep.subr.mxu0 0.0
        %v1511 = vand.u32 %v341, 4294901760
        %1512 = vmatpush1.msra.mxu0 %v1511
        %1513 = vmatprep.subr.mxu0 0.0
        %1514 = vmatpush2.msra.mxu0 0.0
        %1515 = vmatprep.subr.mxu0 0.0
        %1516 = vmatpush2.msra.mxu0 0.0
        %1517 = vmatprep.subr.mxu0 0.0
        %1518 = vmatpush2.msra.mxu0 0.0
        %1519 = vmatprep.subr.mxu0 0.0
        %1520 = vmatpush2.msra.mxu0 0.0
        %1521 = vmatprep.subr.mxu0 0.0
        %1522 = vmatpush2.msra.mxu0 0.0
        %1523 = vmatprep.subr.mxu0 0.0
        %1524 = vmatpush2.msra.mxu0 0.0
        %1525 = vmatprep.subr.mxu0 0.0
        %1526 = vmatpush2.msra.mxu0 0.0
        %1527 = vmatprep.subr.mxu0 0.0
        %1528 = vmatpush2.msra.mxu0 0.0
        %1529 = vmatprep.subr.mxu0 0.0
        %1530 = vmatpush2.msra.mxu0 0.0
        %1531 = vmatprep.subr.mxu0 0.0
        %1532 = vmatpush2.msra.mxu0 0.0
        %1533 = vmatprep.subr.mxu0 0.0
        %1534 = vmatpush2.msra.mxu0 0.0
        %1535 = vmatprep.subr.mxu0 0.0
        %1536 = vmatpush2.msra.mxu0 0.0
        %1537 = vmatprep.subr.mxu0 0.0
        %1538 = vmatpush2.msra.mxu0 0.0
        %1539 = vmatprep.subr.mxu0 0.0
        %1540 = vmatpush2.msra.mxu0 0.0
        %1541 = vmatprep.subr.mxu0 0.0
        %1542 = vmatpush2.msra.mxu0 0.0
        %1543 = vmatprep.subr.mxu0 0.0
        %1544 = vmatpush2.msra.mxu0 0.0
        %1545 = vmatprep.mubr.f32.mxu0 0.0
        %v1546 = vand.u32 %v491, 4294901760
        %1547 = vmatmul.mubr.f32.gmra.mxu0 %v1546
        %v1548 = vpop.f32.mrf.mxu0
        %v1549 = vadd.f32 %v1386, %v1548
        %v1550 = vpop.f32.mrf.mxu0
        %1551 = vmatprep.mubr.f32.mxu0 0.0
        %v1552 = vand.u32 %v494, 4294901760
        %1553 = vmatmul.mubr.f32.gmra.mxu0 %v1552
        %v1554 = vpop.f32.mrf.mxu0
        %v1555 = vadd.f32 %v1392, %v1554
        %v1556 = vpop.f32.mrf.mxu0
        %1557 = vmatprep.mubr.f32.mxu0 0.0
        %v1558 = vand.u32 %v497, 4294901760
        %1559 = vmatmul.mubr.f32.gmra.mxu0 %v1558
        %v1560 = vpop.f32.mrf.mxu0
        %v1561 = vadd.f32 %v1398, %v1560
        %v1562 = vpop.f32.mrf.mxu0
        %1563 = vmatprep.mubr.f32.mxu0 0.0
        %v1564 = vand.u32 %v500, 4294901760
        %1565 = vmatmul.mubr.f32.gmra.mxu0 %v1564
        %v1566 = vpop.f32.mrf.mxu0
        %v1567 = vadd.f32 %v1404, %v1566
        %v1568 = vpop.f32.mrf.mxu0
        %1569 = vmatprep.mubr.f32.mxu0 0.0
        %v1570 = vand.u32 %v503, 4294901760
        %1571 = vmatmul.mubr.f32.gmra.mxu0 %v1570
        %v1572 = vpop.f32.mrf.mxu0
        %v1573 = vadd.f32 %v1410, %v1572
        %v1574 = vpop.f32.mrf.mxu0
        %1575 = vmatprep.mubr.f32.mxu0 0.0
        %v1576 = vand.u32 %v506, 4294901760
        %1577 = vmatmul.mubr.f32.gmra.mxu0 %v1576
        %v1578 = vpop.f32.mrf.mxu0
        %v1579 = vadd.f32 %v1416, %v1578
        %v1580 = vpop.f32.mrf.mxu0
        %1581 = vmatprep.mubr.f32.mxu0 0.0
        %v1582 = vand.u32 %v509, 4294901760
        %1583 = vmatmul.mubr.f32.gmra.mxu0 %v1582
        %v1584 = vpop.f32.mrf.mxu0
        %v1585 = vadd.f32 %v1422, %v1584
        %v1586 = vpop.f32.mrf.mxu0
        %1587 = vmatprep.mubr.f32.mxu0 0.0
        %v1588 = vand.u32 %v512, 4294901760
        %1589 = vmatmul.mubr.f32.gmra.mxu0 %v1588
        %v1590 = vpop.f32.mrf.mxu0
        %v1591 = vadd.f32 %v1428, %v1590
        %v1592 = vpop.f32.mrf.mxu0
        %1593 = vmatprep.mubr.f32.mxu0 0.0
        %v1594 = vand.u32 %v515, 4294901760
        %1595 = vmatmul.mubr.f32.gmra.mxu0 %v1594
        %v1596 = vpop.f32.mrf.mxu0
        %v1597 = vadd.f32 %v1434, %v1596
        %v1598 = vpop.f32.mrf.mxu0
        %1599 = vmatprep.mubr.f32.mxu0 0.0
        %v1600 = vand.u32 %v518, 4294901760
        %1601 = vmatmul.mubr.f32.gmra.mxu0 %v1600
        %v1602 = vpop.f32.mrf.mxu0
        %v1603 = vadd.f32 %v1440, %v1602
        %v1604 = vpop.f32.mrf.mxu0
        %1605 = vmatprep.mubr.f32.mxu0 0.0
        %v1606 = vand.u32 %v521, 4294901760
        %1607 = vmatmul.mubr.f32.gmra.mxu0 %v1606
        %v1608 = vpop.f32.mrf.mxu0
        %v1609 = vadd.f32 %v1446, %v1608
        %v1610 = vpop.f32.mrf.mxu0
        %1611 = vmatprep.mubr.f32.mxu0 0.0
        %v1612 = vand.u32 %v524, 4294901760
        %1613 = vmatmul.mubr.f32.gmra.mxu0 %v1612
        %v1614 = vpop.f32.mrf.mxu0
        %v1615 = vadd.f32 %v1452, %v1614
        %v1616 = vpop.f32.mrf.mxu0
        %1617 = vmatprep.mubr.f32.mxu0 0.0
        %v1618 = vand.u32 %v527, 4294901760
        %1619 = vmatmul.mubr.f32.gmra.mxu0 %v1618
        %v1620 = vpop.f32.mrf.mxu0
        %v1621 = vadd.f32 %v1458, %v1620
        %v1622 = vpop.f32.mrf.mxu0
        %1623 = vmatprep.mubr.f32.mxu0 0.0
        %v1624 = vand.u32 %v530, 4294901760
        %1625 = vmatmul.mubr.f32.gmra.mxu0 %v1624
        %v1626 = vpop.f32.mrf.mxu0
        %v1627 = vadd.f32 %v1464, %v1626
        %v1628 = vpop.f32.mrf.mxu0
        %1629 = vmatprep.mubr.f32.mxu0 0.0
        %v1630 = vand.u32 %v533, 4294901760
        %1631 = vmatmul.mubr.f32.gmra.mxu0 %v1630
        %v1632 = vpop.f32.mrf.mxu0
        %v1633 = vadd.f32 %v1470, %v1632
        %v1634 = vpop.f32.mrf.mxu0
        %1635 = vmatprep.mubr.f32.mxu0 0.0
        %v1636 = vand.u32 %v536, 4294901760
        %1637 = vmatmul.mubr.f32.gmra.mxu0 %v1636
        %v1638 = vpop.f32.mrf.mxu0
        %v1639 = vadd.f32 %v1476, %v1638
        %v1640 = vpop.f32.mrf.mxu0
        %1641 = vdwg.mxu0
        %vm1642 = vcmask 261120
        %v1644 = vsel %vm1642, %v1549, 0
        %v1647 = vsel %vm1642, %v1555, 0
        %v1650 = vsel %vm1642, %v1561, 0
        %v1653 = vsel %vm1642, %v1567, 0
        %v1656 = vsel %vm1642, %v1573, 0
        %v1659 = vsel %vm1642, %v1579, 0
        %v1662 = vsel %vm1642, %v1585, 0
        %v1665 = vsel %vm1642, %v1591, 0
        %v1668 = vsel %vm1642, %v1597, 0
        %v1671 = vsel %vm1642, %v1603, 0
        %v1674 = vsel %vm1642, %v1609, 0
        %v1677 = vsel %vm1642, %v1615, 0
        %v1680 = vsel %vm1642, %v1621, 0
        %v1683 = vsel %vm1642, %v1627, 0
        %v1686 = vsel %vm1642, %v1633, 0
        %v1689 = vsel %vm1642, %v1639, 0
        %v1692 = vsel %vm1642, %v341, 0
        %v1695 = vsel %vm1642, %v342, 0
        %1697 = vmatprep.subr.mxu0 0.0
        %1698 = vmatpush1.xpose.msra.mxu0 0.0
        %1699 = vmatprep.subr.mxu0 0.0
        %1700 = vmatpush1.xpose.msra.mxu0 0.0
        %1701 = vmatprep.subr.mxu0 0.0
        %1702 = vmatpush1.xpose.msra.mxu0 0.0
        %1703 = vmatprep.subr.mxu0 0.0
        %1704 = vmatpush1.xpose.msra.mxu0 0.0
        %1705 = vmatprep.subr.mxu0 0.0
        %1706 = vmatpush1.xpose.msra.mxu0 0.0
        %1707 = vmatprep.subr.mxu0 0.0
        %1708 = vmatpush1.xpose.msra.mxu0 0.0
        %1709 = vmatprep.subr.mxu0 0.0
        %1710 = vmatpush1.xpose.msra.mxu0 0.0
        %1711 = vmatprep.subr.mxu0 0.0
        %1712 = vmatpush1.xpose.msra.mxu0 0.0
        %1713 = vmatprep.subr.mxu0 0.0
        %1714 = vmatpush1.xpose.msra.mxu0 0.0
        %1715 = vmatprep.subr.mxu0 0.0
        %1716 = vmatpush1.xpose.msra.mxu0 0.0
        %1717 = vmatprep.subr.mxu0 0.0
        %1718 = vmatpush1.xpose.msra.mxu0 0.0
        %1719 = vmatprep.subr.mxu0 0.0
        %1720 = vmatpush1.xpose.msra.mxu0 0.0
        %1721 = vmatprep.subr.mxu0 0.0
        %1722 = vmatpush1.xpose.msra.mxu0 0.0
        %1723 = vmatprep.subr.mxu0 0.0
        %1724 = vmatpush1.xpose.msra.mxu0 0.0
        %1725 = vmatprep.subr.mxu0 0.0
        %v1726 = vand.u32 %v1695, 4294901760
        %1727 = vmatpush1.xpose.msra.mxu0 %v1726
        %1728 = vmatprep.subr.mxu0 0.0
        %v1729 = vand.u32 %v1692, 4294901760
        %1730 = vmatpush1.xpose.msra.mxu0 %v1729
        %1731 = vmatprep.subr.mxu0 0.0
        %1732 = vmatpush2.xpose.msra.mxu0 0.0
        %1733 = vmatprep.subr.mxu0 0.0
        %1734 = vmatpush2.xpose.msra.mxu0 0.0
        %1735 = vmatprep.subr.mxu0 0.0
        %1736 = vmatpush2.xpose.msra.mxu0 0.0
        %1737 = vmatprep.subr.mxu0 0.0
        %1738 = vmatpush2.xpose.msra.mxu0 0.0
        %1739 = vmatprep.subr.mxu0 0.0
        %1740 = vmatpush2.xpose.msra.mxu0 0.0
        %1741 = vmatprep.subr.mxu0 0.0
        %1742 = vmatpush2.xpose.msra.mxu0 0.0
        %1743 = vmatprep.subr.mxu0 0.0
        %1744 = vmatpush2.xpose.msra.mxu0 0.0
        %1745 = vmatprep.subr.mxu0 0.0
        %1746 = vmatpush2.xpose.msra.mxu0 0.0
        %1747 = vmatprep.subr.mxu0 0.0
        %1748 = vmatpush2.xpose.msra.mxu0 0.0
        %1749 = vmatprep.subr.mxu0 0.0
        %1750 = vmatpush2.xpose.msra.mxu0 0.0
        %1751 = vmatprep.subr.mxu0 0.0
        %1752 = vmatpush2.xpose.msra.mxu0 0.0
        %1753 = vmatprep.subr.mxu0 0.0
        %1754 = vmatpush2.xpose.msra.mxu0 0.0
        %1755 = vmatprep.subr.mxu0 0.0
        %1756 = vmatpush2.xpose.msra.mxu0 0.0
        %1757 = vmatprep.subr.mxu0 0.0
        %1758 = vmatpush2.xpose.msra.mxu0 0.0
        %1759 = vmatprep.subr.mxu0 0.0
        %1760 = vmatpush2.xpose.msra.mxu0 0.0
        %1761 = vmatprep.subr.mxu0 0.0
        %1762 = vmatpush2.xpose.msra.mxu0 0.0
        %1763 = vmatprep.mubr.f32.mxu0 0.0
        %v1764 = vand.u32 %v1644, 4294901760
        %v1765 = vsub.f32 %v1644, %v1764
        %v1766 = vand.u32 %v1765, 4294901760
        %v1767 = vsub.f32 %v1765, %v1766
        %v1768 = vand.u32 %v1767, 4294901760
        %1769 = vmatmul.mubr.f32.gmra.mxu0 %v1768
        %v1770 = vpop.f32.mrf.mxu0
        %v1771 = vadd.f32 0.0, %v1770
        %v1772 = vpop.f32.mrf.mxu0
        %1773 = vmatprep.mubr.f32.mxu0 0.0
        %v1774 = vand.u32 %v1647, 4294901760
        %v1775 = vsub.f32 %v1647, %v1774
        %v1776 = vand.u32 %v1775, 4294901760
        %v1777 = vsub.f32 %v1775, %v1776
        %v1778 = vand.u32 %v1777, 4294901760
        %1779 = vmatmul.mubr.f32.gmra.mxu0 %v1778
        %v1780 = vpop.f32.mrf.mxu0
        %v1781 = vadd.f32 0.0, %v1780
        %v1782 = vpop.f32.mrf.mxu0
        %1783 = vmatprep.mubr.f32.mxu0 0.0
        %v1784 = vand.u32 %v1650, 4294901760
        %v1785 = vsub.f32 %v1650, %v1784
        %v1786 = vand.u32 %v1785, 4294901760
        %v1787 = vsub.f32 %v1785, %v1786
        %v1788 = vand.u32 %v1787, 4294901760
        %1789 = vmatmul.mubr.f32.gmra.mxu0 %v1788
        %v1790 = vpop.f32.mrf.mxu0
        %v1791 = vadd.f32 0.0, %v1790
        %v1792 = vpop.f32.mrf.mxu0
        %1793 = vmatprep.mubr.f32.mxu0 0.0
        %v1794 = vand.u32 %v1653, 4294901760
        %v1795 = vsub.f32 %v1653, %v1794
        %v1796 = vand.u32 %v1795, 4294901760
        %v1797 = vsub.f32 %v1795, %v1796
        %v1798 = vand.u32 %v1797, 4294901760
        %1799 = vmatmul.mubr.f32.gmra.mxu0 %v1798
        %v1800 = vpop.f32.mrf.mxu0
        %v1801 = vadd.f32 0.0, %v1800
        %v1802 = vpop.f32.mrf.mxu0
        %1803 = vmatprep.mubr.f32.mxu0 0.0
        %v1804 = vand.u32 %v1656, 4294901760
        %v1805 = vsub.f32 %v1656, %v1804
        %v1806 = vand.u32 %v1805, 4294901760
        %v1807 = vsub.f32 %v1805, %v1806
        %v1808 = vand.u32 %v1807, 4294901760
        %1809 = vmatmul.mubr.f32.gmra.mxu0 %v1808
        %v1810 = vpop.f32.mrf.mxu0
        %v1811 = vadd.f32 0.0, %v1810
        %v1812 = vpop.f32.mrf.mxu0
        %1813 = vmatprep.mubr.f32.mxu0 0.0
        %v1814 = vand.u32 %v1659, 4294901760
        %v1815 = vsub.f32 %v1659, %v1814
        %v1816 = vand.u32 %v1815, 4294901760
        %v1817 = vsub.f32 %v1815, %v1816
        %v1818 = vand.u32 %v1817, 4294901760
        %1819 = vmatmul.mubr.f32.gmra.mxu0 %v1818
        %v1820 = vpop.f32.mrf.mxu0
        %v1821 = vadd.f32 0.0, %v1820
        %v1822 = vpop.f32.mrf.mxu0
        %1823 = vmatprep.mubr.f32.mxu0 0.0
        %v1824 = vand.u32 %v1662, 4294901760
        %v1825 = vsub.f32 %v1662, %v1824
        %v1826 = vand.u32 %v1825, 4294901760
        %v1827 = vsub.f32 %v1825, %v1826
        %v1828 = vand.u32 %v1827, 4294901760
        %1829 = vmatmul.mubr.f32.gmra.mxu0 %v1828
        %v1830 = vpop.f32.mrf.mxu0
        %v1831 = vadd.f32 0.0, %v1830
        %v1832 = vpop.f32.mrf.mxu0
        %1833 = vmatprep.mubr.f32.mxu0 0.0
        %v1834 = vand.u32 %v1665, 4294901760
        %v1835 = vsub.f32 %v1665, %v1834
        %v1836 = vand.u32 %v1835, 4294901760
        %v1837 = vsub.f32 %v1835, %v1836
        %v1838 = vand.u32 %v1837, 4294901760
        %1839 = vmatmul.mubr.f32.gmra.mxu0 %v1838
        %v1840 = vpop.f32.mrf.mxu0
        %v1841 = vadd.f32 0.0, %v1840
        %v1842 = vpop.f32.mrf.mxu0
        %1843 = vmatprep.mubr.f32.mxu0 0.0
        %v1844 = vand.u32 %v1668, 4294901760
        %v1845 = vsub.f32 %v1668, %v1844
        %v1846 = vand.u32 %v1845, 4294901760
        %v1847 = vsub.f32 %v1845, %v1846
        %v1848 = vand.u32 %v1847, 4294901760
        %1849 = vmatmul.mubr.f32.gmra.mxu0 %v1848
        %v1850 = vpop.f32.mrf.mxu0
        %v1851 = vadd.f32 0.0, %v1850
        %v1852 = vpop.f32.mrf.mxu0
        %1853 = vmatprep.mubr.f32.mxu0 0.0
        %v1854 = vand.u32 %v1671, 4294901760
        %v1855 = vsub.f32 %v1671, %v1854
        %v1856 = vand.u32 %v1855, 4294901760
        %v1857 = vsub.f32 %v1855, %v1856
        %v1858 = vand.u32 %v1857, 4294901760
        %1859 = vmatmul.mubr.f32.gmra.mxu0 %v1858
        %v1860 = vpop.f32.mrf.mxu0
        %v1861 = vadd.f32 0.0, %v1860
        %v1862 = vpop.f32.mrf.mxu0
        %1863 = vmatprep.mubr.f32.mxu0 0.0
        %v1864 = vand.u32 %v1674, 4294901760
        %v1865 = vsub.f32 %v1674, %v1864
        %v1866 = vand.u32 %v1865, 4294901760
        %v1867 = vsub.f32 %v1865, %v1866
        %v1868 = vand.u32 %v1867, 4294901760
        %1869 = vmatmul.mubr.f32.gmra.mxu0 %v1868
        %v1870 = vpop.f32.mrf.mxu0
        %v1871 = vadd.f32 0.0, %v1870
        %v1872 = vpop.f32.mrf.mxu0
        %1873 = vmatprep.mubr.f32.mxu0 0.0
        %v1874 = vand.u32 %v1677, 4294901760
        %v1875 = vsub.f32 %v1677, %v1874
        %v1876 = vand.u32 %v1875, 4294901760
        %v1877 = vsub.f32 %v1875, %v1876
        %v1878 = vand.u32 %v1877, 4294901760
        %1879 = vmatmul.mubr.f32.gmra.mxu0 %v1878
        %v1880 = vpop.f32.mrf.mxu0
        %v1881 = vadd.f32 0.0, %v1880
        %v1882 = vpop.f32.mrf.mxu0
        %1883 = vmatprep.mubr.f32.mxu0 0.0
        %v1884 = vand.u32 %v1680, 4294901760
        %v1885 = vsub.f32 %v1680, %v1884
        %v1886 = vand.u32 %v1885, 4294901760
        %v1887 = vsub.f32 %v1885, %v1886
        %v1888 = vand.u32 %v1887, 4294901760
        %1889 = vmatmul.mubr.f32.gmra.mxu0 %v1888
        %v1890 = vpop.f32.mrf.mxu0
        %v1891 = vadd.f32 0.0, %v1890
        %v1892 = vpop.f32.mrf.mxu0
        %1893 = vmatprep.mubr.f32.mxu0 0.0
        %v1894 = vand.u32 %v1683, 4294901760
        %v1895 = vsub.f32 %v1683, %v1894
        %v1896 = vand.u32 %v1895, 4294901760
        %v1897 = vsub.f32 %v1895, %v1896
        %v1898 = vand.u32 %v1897, 4294901760
        %1899 = vmatmul.mubr.f32.gmra.mxu0 %v1898
        %v1900 = vpop.f32.mrf.mxu0
        %v1901 = vadd.f32 0.0, %v1900
        %v1902 = vpop.f32.mrf.mxu0
        %1903 = vmatprep.mubr.f32.mxu0 0.0
        %v1904 = vand.u32 %v1686, 4294901760
        %v1905 = vsub.f32 %v1686, %v1904
        %v1906 = vand.u32 %v1905, 4294901760
        %v1907 = vsub.f32 %v1905, %v1906
        %v1908 = vand.u32 %v1907, 4294901760
        %1909 = vmatmul.mubr.f32.gmra.mxu0 %v1908
        %v1910 = vpop.f32.mrf.mxu0
        %v1911 = vadd.f32 0.0, %v1910
        %v1912 = vpop.f32.mrf.mxu0
        %1913 = vmatprep.mubr.f32.mxu0 0.0
        %v1914 = vand.u32 %v1689, 4294901760
        %v1915 = vsub.f32 %v1689, %v1914
        %v1916 = vand.u32 %v1915, 4294901760
        %v1917 = vsub.f32 %v1915, %v1916
        %v1918 = vand.u32 %v1917, 4294901760
        %1919 = vmatmul.mubr.f32.gmra.mxu0 %v1918
        %v1920 = vpop.f32.mrf.mxu0
        %v1921 = vadd.f32 0.0, %v1920
        %v1922 = vpop.f32.mrf.mxu0
        %1923 = vdwg.mxu0
        %1924 = vmatprep.subr.mxu0 0.0
        %1925 = vmatpush1.xpose.msra.mxu0 0.0
        %1926 = vmatprep.subr.mxu0 0.0
        %1927 = vmatpush1.xpose.msra.mxu0 0.0
        %1928 = vmatprep.subr.mxu0 0.0
        %1929 = vmatpush1.xpose.msra.mxu0 0.0
        %1930 = vmatprep.subr.mxu0 0.0
        %1931 = vmatpush1.xpose.msra.mxu0 0.0
        %1932 = vmatprep.subr.mxu0 0.0
        %1933 = vmatpush1.xpose.msra.mxu0 0.0
        %1934 = vmatprep.subr.mxu0 0.0
        %1935 = vmatpush1.xpose.msra.mxu0 0.0
        %1936 = vmatprep.subr.mxu0 0.0
        %1937 = vmatpush1.xpose.msra.mxu0 0.0
        %1938 = vmatprep.subr.mxu0 0.0
        %1939 = vmatpush1.xpose.msra.mxu0 0.0
        %1940 = vmatprep.subr.mxu0 0.0
        %1941 = vmatpush1.xpose.msra.mxu0 0.0
        %1942 = vmatprep.subr.mxu0 0.0
        %1943 = vmatpush1.xpose.msra.mxu0 0.0
        %1944 = vmatprep.subr.mxu0 0.0
        %1945 = vmatpush1.xpose.msra.mxu0 0.0
        %1946 = vmatprep.subr.mxu0 0.0
        %1947 = vmatpush1.xpose.msra.mxu0 0.0
        %1948 = vmatprep.subr.mxu0 0.0
        %1949 = vmatpush1.xpose.msra.mxu0 0.0
        %1950 = vmatprep.subr.mxu0 0.0
        %1951 = vmatpush1.xpose.msra.mxu0 0.0
        %1952 = vmatprep.subr.mxu0 0.0
        %v1953 = vand.u32 %v1695, 4294901760
        %v1954 = vsub.f32 %v1695, %v1953
        %v1955 = vand.u32 %v1954, 4294901760
        %v1956 = vsub.f32 %v1954, %v1955
        %v1957 = vand.u32 %v1956, 4294901760
        %1958 = vmatpush1.xpose.msra.mxu0 %v1957
        %1959 = vmatprep.subr.mxu0 0.0
        %v1960 = vand.u32 %v1692, 4294901760
        %v1961 = vsub.f32 %v1692, %v1960
        %v1962 = vand.u32 %v1961, 4294901760
        %v1963 = vsub.f32 %v1961, %v1962
        %v1964 = vand.u32 %v1963, 4294901760
        %1965 = vmatpush1.xpose.msra.mxu0 %v1964
        %1966 = vmatprep.subr.mxu0 0.0
        %1967 = vmatpush2.xpose.msra.mxu0 0.0
        %1968 = vmatprep.subr.mxu0 0.0
        %1969 = vmatpush2.xpose.msra.mxu0 0.0
        %1970 = vmatprep.subr.mxu0 0.0
        %1971 = vmatpush2.xpose.msra.mxu0 0.0
        %1972 = vmatprep.subr.mxu0 0.0
        %1973 = vmatpush2.xpose.msra.mxu0 0.0
        %1974 = vmatprep.subr.mxu0 0.0
        %1975 = vmatpush2.xpose.msra.mxu0 0.0
        %1976 = vmatprep.subr.mxu0 0.0
        %1977 = vmatpush2.xpose.msra.mxu0 0.0
        %1978 = vmatprep.subr.mxu0 0.0
        %1979 = vmatpush2.xpose.msra.mxu0 0.0
        %1980 = vmatprep.subr.mxu0 0.0
        %1981 = vmatpush2.xpose.msra.mxu0 0.0
        %1982 = vmatprep.subr.mxu0 0.0
        %1983 = vmatpush2.xpose.msra.mxu0 0.0
        %1984 = vmatprep.subr.mxu0 0.0
        %1985 = vmatpush2.xpose.msra.mxu0 0.0
        %1986 = vmatprep.subr.mxu0 0.0
        %1987 = vmatpush2.xpose.msra.mxu0 0.0
        %1988 = vmatprep.subr.mxu0 0.0
        %1989 = vmatpush2.xpose.msra.mxu0 0.0
        %1990 = vmatprep.subr.mxu0 0.0
        %1991 = vmatpush2.xpose.msra.mxu0 0.0
        %1992 = vmatprep.subr.mxu0 0.0
        %1993 = vmatpush2.xpose.msra.mxu0 0.0
        %1994 = vmatprep.subr.mxu0 0.0
        %1995 = vmatpush2.xpose.msra.mxu0 0.0
        %1996 = vmatprep.subr.mxu0 0.0
        %1997 = vmatpush2.xpose.msra.mxu0 0.0
        %1998 = vmatprep.mubr.f32.mxu0 0.0
        %v1999 = vand.u32 %v1644, 4294901760
        %2000 = vmatmul.mubr.f32.gmra.mxu0 %v1999
        %v2001 = vpop.f32.mrf.mxu0
        %v2002 = vadd.f32 %v1771, %v2001
        %v2003 = vpop.f32.mrf.mxu0
        %2004 = vmatprep.mubr.f32.mxu0 0.0
        %v2005 = vand.u32 %v1647, 4294901760
        %2006 = vmatmul.mubr.f32.gmra.mxu0 %v2005
        %v2007 = vpop.f32.mrf.mxu0
        %v2008 = vadd.f32 %v1781, %v2007
        %v2009 = vpop.f32.mrf.mxu0
        %2010 = vmatprep.mubr.f32.mxu0 0.0
        %v2011 = vand.u32 %v1650, 4294901760
        %2012 = vmatmul.mubr.f32.gmra.mxu0 %v2011
        %v2013 = vpop.f32.mrf.mxu0
        %v2014 = vadd.f32 %v1791, %v2013
        %v2015 = vpop.f32.mrf.mxu0
        %2016 = vmatprep.mubr.f32.mxu0 0.0
        %v2017 = vand.u32 %v1653, 4294901760
        %2018 = vmatmul.mubr.f32.gmra.mxu0 %v2017
        %v2019 = vpop.f32.mrf.mxu0
        %v2020 = vadd.f32 %v1801, %v2019
        %v2021 = vpop.f32.mrf.mxu0
        %2022 = vmatprep.mubr.f32.mxu0 0.0
        %v2023 = vand.u32 %v1656, 4294901760
        %2024 = vmatmul.mubr.f32.gmra.mxu0 %v2023
        %v2025 = vpop.f32.mrf.mxu0
        %v2026 = vadd.f32 %v1811, %v2025
        %v2027 = vpop.f32.mrf.mxu0
        %2028 = vmatprep.mubr.f32.mxu0 0.0
        %v2029 = vand.u32 %v1659, 4294901760
        %2030 = vmatmul.mubr.f32.gmra.mxu0 %v2029
        %v2031 = vpop.f32.mrf.mxu0
        %v2032 = vadd.f32 %v1821, %v2031
        %v2033 = vpop.f32.mrf.mxu0
        %2034 = vmatprep.mubr.f32.mxu0 0.0
        %v2035 = vand.u32 %v1662, 4294901760
        %2036 = vmatmul.mubr.f32.gmra.mxu0 %v2035
        %v2037 = vpop.f32.mrf.mxu0
        %v2038 = vadd.f32 %v1831, %v2037
        %v2039 = vpop.f32.mrf.mxu0
        %2040 = vmatprep.mubr.f32.mxu0 0.0
        %v2041 = vand.u32 %v1665, 4294901760
        %2042 = vmatmul.mubr.f32.gmra.mxu0 %v2041
        %v2043 = vpop.f32.mrf.mxu0
        %v2044 = vadd.f32 %v1841, %v2043
        %v2045 = vpop.f32.mrf.mxu0
        %2046 = vmatprep.mubr.f32.mxu0 0.0
        %v2047 = vand.u32 %v1668, 4294901760
        %2048 = vmatmul.mubr.f32.gmra.mxu0 %v2047
        %v2049 = vpop.f32.mrf.mxu0
        %v2050 = vadd.f32 %v1851, %v2049
        %v2051 = vpop.f32.mrf.mxu0
        %2052 = vmatprep.mubr.f32.mxu0 0.0
        %v2053 = vand.u32 %v1671, 4294901760
        %2054 = vmatmul.mubr.f32.gmra.mxu0 %v2053
        %v2055 = vpop.f32.mrf.mxu0
        %v2056 = vadd.f32 %v1861, %v2055
        %v2057 = vpop.f32.mrf.mxu0
        %2058 = vmatprep.mubr.f32.mxu0 0.0
        %v2059 = vand.u32 %v1674, 4294901760
        %2060 = vmatmul.mubr.f32.gmra.mxu0 %v2059
        %v2061 = vpop.f32.mrf.mxu0
        %v2062 = vadd.f32 %v1871, %v2061
        %v2063 = vpop.f32.mrf.mxu0
        %2064 = vmatprep.mubr.f32.mxu0 0.0
        %v2065 = vand.u32 %v1677, 4294901760
        %2066 = vmatmul.mubr.f32.gmra.mxu0 %v2065
        %v2067 = vpop.f32.mrf.mxu0
        %v2068 = vadd.f32 %v1881, %v2067
        %v2069 = vpop.f32.mrf.mxu0
        %2070 = vmatprep.mubr.f32.mxu0 0.0
        %v2071 = vand.u32 %v1680, 4294901760
        %2072 = vmatmul.mubr.f32.gmra.mxu0 %v2071
        %v2073 = vpop.f32.mrf.mxu0
        %v2074 = vadd.f32 %v1891, %v2073
        %v2075 = vpop.f32.mrf.mxu0
        %2076 = vmatprep.mubr.f32.mxu0 0.0
        %v2077 = vand.u32 %v1683, 4294901760
        %2078 = vmatmul.mubr.f32.gmra.mxu0 %v2077
        %v2079 = vpop.f32.mrf.mxu0
        %v2080 = vadd.f32 %v1901, %v2079
        %v2081 = vpop.f32.mrf.mxu0
        %2082 = vmatprep.mubr.f32.mxu0 0.0
        %v2083 = vand.u32 %v1686, 4294901760
        %2084 = vmatmul.mubr.f32.gmra.mxu0 %v2083
        %v2085 = vpop.f32.mrf.mxu0
        %v2086 = vadd.f32 %v1911, %v2085
        %v2087 = vpop.f32.mrf.mxu0
        %2088 = vmatprep.mubr.f32.mxu0 0.0
        %v2089 = vand.u32 %v1689, 4294901760
        %2090 = vmatmul.mubr.f32.gmra.mxu0 %v2089
        %v2091 = vpop.f32.mrf.mxu0
        %v2092 = vadd.f32 %v1921, %v2091
        %v2093 = vpop.f32.mrf.mxu0
        %2094 = vdwg.mxu0
        %2095 = vmatprep.subr.mxu0 0.0
        %2096 = vmatpush1.xpose.msra.mxu0 0.0
        %2097 = vmatprep.subr.mxu0 0.0
        %2098 = vmatpush1.xpose.msra.mxu0 0.0
        %2099 = vmatprep.subr.mxu0 0.0
        %2100 = vmatpush1.xpose.msra.mxu0 0.0
        %2101 = vmatprep.subr.mxu0 0.0
        %2102 = vmatpush1.xpose.msra.mxu0 0.0
        %2103 = vmatprep.subr.mxu0 0.0
        %2104 = vmatpush1.xpose.msra.mxu0 0.0
        %2105 = vmatprep.subr.mxu0 0.0
        %2106 = vmatpush1.xpose.msra.mxu0 0.0
        %2107 = vmatprep.subr.mxu0 0.0
        %2108 = vmatpush1.xpose.msra.mxu0 0.0
        %2109 = vmatprep.subr.mxu0 0.0
        %2110 = vmatpush1.xpose.msra.mxu0 0.0
        %2111 = vmatprep.subr.mxu0 0.0
        %2112 = vmatpush1.xpose.msra.mxu0 0.0
        %2113 = vmatprep.subr.mxu0 0.0
        %2114 = vmatpush1.xpose.msra.mxu0 0.0
        %2115 = vmatprep.subr.mxu0 0.0
        %2116 = vmatpush1.xpose.msra.mxu0 0.0
        %2117 = vmatprep.subr.mxu0 0.0
        %2118 = vmatpush1.xpose.msra.mxu0 0.0
        %2119 = vmatprep.subr.mxu0 0.0
        %2120 = vmatpush1.xpose.msra.mxu0 0.0
        %2121 = vmatprep.subr.mxu0 0.0
        %2122 = vmatpush1.xpose.msra.mxu0 0.0
        %2123 = vmatprep.subr.mxu0 0.0
        %v2124 = vand.u32 %v1695, 4294901760
        %v2125 = vsub.f32 %v1695, %v2124
        %2126 = vmatpush1.xpose.msra.mxu0 %v2125
        %2127 = vmatprep.subr.mxu0 0.0
        %v2128 = vand.u32 %v1692, 4294901760
        %v2129 = vsub.f32 %v1692, %v2128
        %2130 = vmatpush1.xpose.msra.mxu0 %v2129
        %2131 = vmatprep.subr.mxu0 0.0
        %2132 = vmatpush2.xpose.msra.mxu0 0.0
        %2133 = vmatprep.subr.mxu0 0.0
        %2134 = vmatpush2.xpose.msra.mxu0 0.0
        %2135 = vmatprep.subr.mxu0 0.0
        %2136 = vmatpush2.xpose.msra.mxu0 0.0
        %2137 = vmatprep.subr.mxu0 0.0
        %2138 = vmatpush2.xpose.msra.mxu0 0.0
        %2139 = vmatprep.subr.mxu0 0.0
        %2140 = vmatpush2.xpose.msra.mxu0 0.0
        %2141 = vmatprep.subr.mxu0 0.0
        %2142 = vmatpush2.xpose.msra.mxu0 0.0
        %2143 = vmatprep.subr.mxu0 0.0
        %2144 = vmatpush2.xpose.msra.mxu0 0.0
        %2145 = vmatprep.subr.mxu0 0.0
        %2146 = vmatpush2.xpose.msra.mxu0 0.0
        %2147 = vmatprep.subr.mxu0 0.0
        %2148 = vmatpush2.xpose.msra.mxu0 0.0
        %2149 = vmatprep.subr.mxu0 0.0
        %2150 = vmatpush2.xpose.msra.mxu0 0.0
        %2151 = vmatprep.subr.mxu0 0.0
        %2152 = vmatpush2.xpose.msra.mxu0 0.0
        %2153 = vmatprep.subr.mxu0 0.0
        %2154 = vmatpush2.xpose.msra.mxu0 0.0
        %2155 = vmatprep.subr.mxu0 0.0
        %2156 = vmatpush2.xpose.msra.mxu0 0.0
        %2157 = vmatprep.subr.mxu0 0.0
        %2158 = vmatpush2.xpose.msra.mxu0 0.0
        %2159 = vmatprep.subr.mxu0 0.0
        %2160 = vmatpush2.xpose.msra.mxu0 0.0
        %2161 = vmatprep.subr.mxu0 0.0
        %2162 = vmatpush2.xpose.msra.mxu0 0.0
        %2163 = vmatprep.mubr.f32.mxu0 0.0
        %v2164 = vand.u32 %v1644, 4294901760
        %v2165 = vsub.f32 %v1644, %v2164
        %2166 = vmatmul.mubr.f32.gmra.mxu0 %v2165
        %v2167 = vpop.f32.mrf.mxu0
        %v2168 = vadd.f32 %v2002, %v2167
        %v2169 = vpop.f32.mrf.mxu0
        %2170 = vmatprep.mubr.f32.mxu0 0.0
        %v2171 = vand.u32 %v1647, 4294901760
        %v2172 = vsub.f32 %v1647, %v2171
        %2173 = vmatmul.mubr.f32.gmra.mxu0 %v2172
        %v2174 = vpop.f32.mrf.mxu0
        %v2175 = vadd.f32 %v2008, %v2174
        %v2176 = vpop.f32.mrf.mxu0
        %2177 = vmatprep.mubr.f32.mxu0 0.0
        %v2178 = vand.u32 %v1650, 4294901760
        %v2179 = vsub.f32 %v1650, %v2178
        %2180 = vmatmul.mubr.f32.gmra.mxu0 %v2179
        %v2181 = vpop.f32.mrf.mxu0
        %v2182 = vadd.f32 %v2014, %v2181
        %v2183 = vpop.f32.mrf.mxu0
        %2184 = vmatprep.mubr.f32.mxu0 0.0
        %v2185 = vand.u32 %v1653, 4294901760
        %v2186 = vsub.f32 %v1653, %v2185
        %2187 = vmatmul.mubr.f32.gmra.mxu0 %v2186
        %v2188 = vpop.f32.mrf.mxu0
        %v2189 = vadd.f32 %v2020, %v2188
        %v2190 = vpop.f32.mrf.mxu0
        %2191 = vmatprep.mubr.f32.mxu0 0.0
        %v2192 = vand.u32 %v1656, 4294901760
        %v2193 = vsub.f32 %v1656, %v2192
        %2194 = vmatmul.mubr.f32.gmra.mxu0 %v2193
        %v2195 = vpop.f32.mrf.mxu0
        %v2196 = vadd.f32 %v2026, %v2195
        %v2197 = vpop.f32.mrf.mxu0
        %2198 = vmatprep.mubr.f32.mxu0 0.0
        %v2199 = vand.u32 %v1659, 4294901760
        %v2200 = vsub.f32 %v1659, %v2199
        %2201 = vmatmul.mubr.f32.gmra.mxu0 %v2200
        %v2202 = vpop.f32.mrf.mxu0
        %v2203 = vadd.f32 %v2032, %v2202
        %v2204 = vpop.f32.mrf.mxu0
        %2205 = vmatprep.mubr.f32.mxu0 0.0
        %v2206 = vand.u32 %v1662, 4294901760
        %v2207 = vsub.f32 %v1662, %v2206
        %2208 = vmatmul.mubr.f32.gmra.mxu0 %v2207
        %v2209 = vpop.f32.mrf.mxu0
        %v2210 = vadd.f32 %v2038, %v2209
        %v2211 = vpop.f32.mrf.mxu0
        %2212 = vmatprep.mubr.f32.mxu0 0.0
        %v2213 = vand.u32 %v1665, 4294901760
        %v2214 = vsub.f32 %v1665, %v2213
        %2215 = vmatmul.mubr.f32.gmra.mxu0 %v2214
        %v2216 = vpop.f32.mrf.mxu0
        %v2217 = vadd.f32 %v2044, %v2216
        %v2218 = vpop.f32.mrf.mxu0
        %2219 = vmatprep.mubr.f32.mxu0 0.0
        %v2220 = vand.u32 %v1668, 4294901760
        %v2221 = vsub.f32 %v1668, %v2220
        %2222 = vmatmul.mubr.f32.gmra.mxu0 %v2221
        %v2223 = vpop.f32.mrf.mxu0
        %v2224 = vadd.f32 %v2050, %v2223
        %v2225 = vpop.f32.mrf.mxu0
        %2226 = vmatprep.mubr.f32.mxu0 0.0
        %v2227 = vand.u32 %v1671, 4294901760
        %v2228 = vsub.f32 %v1671, %v2227
        %2229 = vmatmul.mubr.f32.gmra.mxu0 %v2228
        %v2230 = vpop.f32.mrf.mxu0
        %v2231 = vadd.f32 %v2056, %v2230
        %v2232 = vpop.f32.mrf.mxu0
        %2233 = vmatprep.mubr.f32.mxu0 0.0
        %v2234 = vand.u32 %v1674, 4294901760
        %v2235 = vsub.f32 %v1674, %v2234
        %2236 = vmatmul.mubr.f32.gmra.mxu0 %v2235
        %v2237 = vpop.f32.mrf.mxu0
        %v2238 = vadd.f32 %v2062, %v2237
        %v2239 = vpop.f32.mrf.mxu0
        %2240 = vmatprep.mubr.f32.mxu0 0.0
        %v2241 = vand.u32 %v1677, 4294901760
        %v2242 = vsub.f32 %v1677, %v2241
        %2243 = vmatmul.mubr.f32.gmra.mxu0 %v2242
        %v2244 = vpop.f32.mrf.mxu0
        %v2245 = vadd.f32 %v2068, %v2244
        %v2246 = vpop.f32.mrf.mxu0
        %2247 = vmatprep.mubr.f32.mxu0 0.0
        %v2248 = vand.u32 %v1680, 4294901760
        %v2249 = vsub.f32 %v1680, %v2248
        %2250 = vmatmul.mubr.f32.gmra.mxu0 %v2249
        %v2251 = vpop.f32.mrf.mxu0
        %v2252 = vadd.f32 %v2074, %v2251
        %v2253 = vpop.f32.mrf.mxu0
        %2254 = vmatprep.mubr.f32.mxu0 0.0
        %v2255 = vand.u32 %v1683, 4294901760
        %v2256 = vsub.f32 %v1683, %v2255
        %2257 = vmatmul.mubr.f32.gmra.mxu0 %v2256
        %v2258 = vpop.f32.mrf.mxu0
        %v2259 = vadd.f32 %v2080, %v2258
        %v2260 = vpop.f32.mrf.mxu0
        %2261 = vmatprep.mubr.f32.mxu0 0.0
        %v2262 = vand.u32 %v1686, 4294901760
        %v2263 = vsub.f32 %v1686, %v2262
        %2264 = vmatmul.mubr.f32.gmra.mxu0 %v2263
        %v2265 = vpop.f32.mrf.mxu0
        %v2266 = vadd.f32 %v2086, %v2265
        %v2267 = vpop.f32.mrf.mxu0
        %2268 = vmatprep.mubr.f32.mxu0 0.0
        %v2269 = vand.u32 %v1689, 4294901760
        %v2270 = vsub.f32 %v1689, %v2269
        %2271 = vmatmul.mubr.f32.gmra.mxu0 %v2270
        %v2272 = vpop.f32.mrf.mxu0
        %v2273 = vadd.f32 %v2092, %v2272
        %v2274 = vpop.f32.mrf.mxu0
        %2275 = vdwg.mxu0
        %2276 = vmatprep.subr.mxu0 0.0
        %2277 = vmatpush1.xpose.msra.mxu0 0.0
        %2278 = vmatprep.subr.mxu0 0.0
        %2279 = vmatpush1.xpose.msra.mxu0 0.0
        %2280 = vmatprep.subr.mxu0 0.0
        %2281 = vmatpush1.xpose.msra.mxu0 0.0
        %2282 = vmatprep.subr.mxu0 0.0
        %2283 = vmatpush1.xpose.msra.mxu0 0.0
        %2284 = vmatprep.subr.mxu0 0.0
        %2285 = vmatpush1.xpose.msra.mxu0 0.0
        %2286 = vmatprep.subr.mxu0 0.0
        %2287 = vmatpush1.xpose.msra.mxu0 0.0
        %2288 = vmatprep.subr.mxu0 0.0
        %2289 = vmatpush1.xpose.msra.mxu0 0.0
        %2290 = vmatprep.subr.mxu0 0.0
        %2291 = vmatpush1.xpose.msra.mxu0 0.0
        %2292 = vmatprep.subr.mxu0 0.0
        %2293 = vmatpush1.xpose.msra.mxu0 0.0
        %2294 = vmatprep.subr.mxu0 0.0
        %2295 = vmatpush1.xpose.msra.mxu0 0.0
        %2296 = vmatprep.subr.mxu0 0.0
        %2297 = vmatpush1.xpose.msra.mxu0 0.0
        %2298 = vmatprep.subr.mxu0 0.0
        %2299 = vmatpush1.xpose.msra.mxu0 0.0
        %2300 = vmatprep.subr.mxu0 0.0
        %2301 = vmatpush1.xpose.msra.mxu0 0.0
        %2302 = vmatprep.subr.mxu0 0.0
        %2303 = vmatpush1.xpose.msra.mxu0 0.0
        %2304 = vmatprep.subr.mxu0 0.0
        %v2305 = vand.u32 %v1695, 4294901760
        %2306 = vmatpush1.xpose.msra.mxu0 %v2305
        %2307 = vmatprep.subr.mxu0 0.0
        %v2308 = vand.u32 %v1692, 4294901760
        %2309 = vmatpush1.xpose.msra.mxu0 %v2308
        %2310 = vmatprep.subr.mxu0 0.0
        %2311 = vmatpush2.xpose.msra.mxu0 0.0
        %2312 = vmatprep.subr.mxu0 0.0
        %2313 = vmatpush2.xpose.msra.mxu0 0.0
        %2314 = vmatprep.subr.mxu0 0.0
        %2315 = vmatpush2.xpose.msra.mxu0 0.0
        %2316 = vmatprep.subr.mxu0 0.0
        %2317 = vmatpush2.xpose.msra.mxu0 0.0
        %2318 = vmatprep.subr.mxu0 0.0
        %2319 = vmatpush2.xpose.msra.mxu0 0.0
        %2320 = vmatprep.subr.mxu0 0.0
        %2321 = vmatpush2.xpose.msra.mxu0 0.0
        %2322 = vmatprep.subr.mxu0 0.0
        %2323 = vmatpush2.xpose.msra.mxu0 0.0
        %2324 = vmatprep.subr.mxu0 0.0
        %2325 = vmatpush2.xpose.msra.mxu0 0.0
        %2326 = vmatprep.subr.mxu0 0.0
        %2327 = vmatpush2.xpose.msra.mxu0 0.0
        %2328 = vmatprep.subr.mxu0 0.0
        %2329 = vmatpush2.xpose.msra.mxu0 0.0
        %2330 = vmatprep.subr.mxu0 0.0
        %2331 = vmatpush2.xpose.msra.mxu0 0.0
        %2332 = vmatprep.subr.mxu0 0.0
        %2333 = vmatpush2.xpose.msra.mxu0 0.0
        %2334 = vmatprep.subr.mxu0 0.0
        %2335 = vmatpush2.xpose.msra.mxu0 0.0
        %2336 = vmatprep.subr.mxu0 0.0
        %2337 = vmatpush2.xpose.msra.mxu0 0.0
        %2338 = vmatprep.subr.mxu0 0.0
        %2339 = vmatpush2.xpose.msra.mxu0 0.0
        %2340 = vmatprep.subr.mxu0 0.0
        %2341 = vmatpush2.xpose.msra.mxu0 0.0
        %2342 = vmatprep.mubr.f32.mxu0 0.0
        %v2343 = vand.u32 %v1644, 4294901760
        %v2344 = vsub.f32 %v1644, %v2343
        %v2345 = vand.u32 %v2344, 4294901760
        %2346 = vmatmul.mubr.f32.gmra.mxu0 %v2345
        %v2347 = vpop.f32.mrf.mxu0
        %v2348 = vadd.f32 %v2168, %v2347
        %v2349 = vpop.f32.mrf.mxu0
        %2350 = vmatprep.mubr.f32.mxu0 0.0
        %v2351 = vand.u32 %v1647, 4294901760
        %v2352 = vsub.f32 %v1647, %v2351
        %v2353 = vand.u32 %v2352, 4294901760
        %2354 = vmatmul.mubr.f32.gmra.mxu0 %v2353
        %v2355 = vpop.f32.mrf.mxu0
        %v2356 = vadd.f32 %v2175, %v2355
        %v2357 = vpop.f32.mrf.mxu0
        %2358 = vmatprep.mubr.f32.mxu0 0.0
        %v2359 = vand.u32 %v1650, 4294901760
        %v2360 = vsub.f32 %v1650, %v2359
        %v2361 = vand.u32 %v2360, 4294901760
        %2362 = vmatmul.mubr.f32.gmra.mxu0 %v2361
        %v2363 = vpop.f32.mrf.mxu0
        %v2364 = vadd.f32 %v2182, %v2363
        %v2365 = vpop.f32.mrf.mxu0
        %2366 = vmatprep.mubr.f32.mxu0 0.0
        %v2367 = vand.u32 %v1653, 4294901760
        %v2368 = vsub.f32 %v1653, %v2367
        %v2369 = vand.u32 %v2368, 4294901760
        %2370 = vmatmul.mubr.f32.gmra.mxu0 %v2369
        %v2371 = vpop.f32.mrf.mxu0
        %v2372 = vadd.f32 %v2189, %v2371
        %v2373 = vpop.f32.mrf.mxu0
        %2374 = vmatprep.mubr.f32.mxu0 0.0
        %v2375 = vand.u32 %v1656, 4294901760
        %v2376 = vsub.f32 %v1656, %v2375
        %v2377 = vand.u32 %v2376, 4294901760
        %2378 = vmatmul.mubr.f32.gmra.mxu0 %v2377
        %v2379 = vpop.f32.mrf.mxu0
        %v2380 = vadd.f32 %v2196, %v2379
        %v2381 = vpop.f32.mrf.mxu0
        %2382 = vmatprep.mubr.f32.mxu0 0.0
        %v2383 = vand.u32 %v1659, 4294901760
        %v2384 = vsub.f32 %v1659, %v2383
        %v2385 = vand.u32 %v2384, 4294901760
        %2386 = vmatmul.mubr.f32.gmra.mxu0 %v2385
        %v2387 = vpop.f32.mrf.mxu0
        %v2388 = vadd.f32 %v2203, %v2387
        %v2389 = vpop.f32.mrf.mxu0
        %2390 = vmatprep.mubr.f32.mxu0 0.0
        %v2391 = vand.u32 %v1662, 4294901760
        %v2392 = vsub.f32 %v1662, %v2391
        %v2393 = vand.u32 %v2392, 4294901760
        %2394 = vmatmul.mubr.f32.gmra.mxu0 %v2393
        %v2395 = vpop.f32.mrf.mxu0
        %v2396 = vadd.f32 %v2210, %v2395
        %v2397 = vpop.f32.mrf.mxu0
        %2398 = vmatprep.mubr.f32.mxu0 0.0
        %v2399 = vand.u32 %v1665, 4294901760
        %v2400 = vsub.f32 %v1665, %v2399
        %v2401 = vand.u32 %v2400, 4294901760
        %2402 = vmatmul.mubr.f32.gmra.mxu0 %v2401
        %v2403 = vpop.f32.mrf.mxu0
        %v2404 = vadd.f32 %v2217, %v2403
        %v2405 = vpop.f32.mrf.mxu0
        %2406 = vmatprep.mubr.f32.mxu0 0.0
        %v2407 = vand.u32 %v1668, 4294901760
        %v2408 = vsub.f32 %v1668, %v2407
        %v2409 = vand.u32 %v2408, 4294901760
        %2410 = vmatmul.mubr.f32.gmra.mxu0 %v2409
        %v2411 = vpop.f32.mrf.mxu0
        %v2412 = vadd.f32 %v2224, %v2411
        %v2413 = vpop.f32.mrf.mxu0
        %2414 = vmatprep.mubr.f32.mxu0 0.0
        %v2415 = vand.u32 %v1671, 4294901760
        %v2416 = vsub.f32 %v1671, %v2415
        %v2417 = vand.u32 %v2416, 4294901760
        %2418 = vmatmul.mubr.f32.gmra.mxu0 %v2417
        %v2419 = vpop.f32.mrf.mxu0
        %v2420 = vadd.f32 %v2231, %v2419
        %v2421 = vpop.f32.mrf.mxu0
        %2422 = vmatprep.mubr.f32.mxu0 0.0
        %v2423 = vand.u32 %v1674, 4294901760
        %v2424 = vsub.f32 %v1674, %v2423
        %v2425 = vand.u32 %v2424, 4294901760
        %2426 = vmatmul.mubr.f32.gmra.mxu0 %v2425
        %v2427 = vpop.f32.mrf.mxu0
        %v2428 = vadd.f32 %v2238, %v2427
        %v2429 = vpop.f32.mrf.mxu0
        %2430 = vmatprep.mubr.f32.mxu0 0.0
        %v2431 = vand.u32 %v1677, 4294901760
        %v2432 = vsub.f32 %v1677, %v2431
        %v2433 = vand.u32 %v2432, 4294901760
        %2434 = vmatmul.mubr.f32.gmra.mxu0 %v2433
        %v2435 = vpop.f32.mrf.mxu0
        %v2436 = vadd.f32 %v2245, %v2435
        %v2437 = vpop.f32.mrf.mxu0
        %2438 = vmatprep.mubr.f32.mxu0 0.0
        %v2439 = vand.u32 %v1680, 4294901760
        %v2440 = vsub.f32 %v1680, %v2439
        %v2441 = vand.u32 %v2440, 4294901760
        %2442 = vmatmul.mubr.f32.gmra.mxu0 %v2441
        %v2443 = vpop.f32.mrf.mxu0
        %v2444 = vadd.f32 %v2252, %v2443
        %v2445 = vpop.f32.mrf.mxu0
        %2446 = vmatprep.mubr.f32.mxu0 0.0
        %v2447 = vand.u32 %v1683, 4294901760
        %v2448 = vsub.f32 %v1683, %v2447
        %v2449 = vand.u32 %v2448, 4294901760
        %2450 = vmatmul.mubr.f32.gmra.mxu0 %v2449
        %v2451 = vpop.f32.mrf.mxu0
        %v2452 = vadd.f32 %v2259, %v2451
        %v2453 = vpop.f32.mrf.mxu0
        %2454 = vmatprep.mubr.f32.mxu0 0.0
        %v2455 = vand.u32 %v1686, 4294901760
        %v2456 = vsub.f32 %v1686, %v2455
        %v2457 = vand.u32 %v2456, 4294901760
        %2458 = vmatmul.mubr.f32.gmra.mxu0 %v2457
        %v2459 = vpop.f32.mrf.mxu0
        %v2460 = vadd.f32 %v2266, %v2459
        %v2461 = vpop.f32.mrf.mxu0
        %2462 = vmatprep.mubr.f32.mxu0 0.0
        %v2463 = vand.u32 %v1689, 4294901760
        %v2464 = vsub.f32 %v1689, %v2463
        %v2465 = vand.u32 %v2464, 4294901760
        %2466 = vmatmul.mubr.f32.gmra.mxu0 %v2465
        %v2467 = vpop.f32.mrf.mxu0
        %v2468 = vadd.f32 %v2273, %v2467
        %v2469 = vpop.f32.mrf.mxu0
        %2470 = vdwg.mxu0
        %2471 = vmatprep.subr.mxu0 0.0
        %2472 = vmatpush1.xpose.msra.mxu0 0.0
        %2473 = vmatprep.subr.mxu0 0.0
        %2474 = vmatpush1.xpose.msra.mxu0 0.0
        %2475 = vmatprep.subr.mxu0 0.0
        %2476 = vmatpush1.xpose.msra.mxu0 0.0
        %2477 = vmatprep.subr.mxu0 0.0
        %2478 = vmatpush1.xpose.msra.mxu0 0.0
        %2479 = vmatprep.subr.mxu0 0.0
        %2480 = vmatpush1.xpose.msra.mxu0 0.0
        %2481 = vmatprep.subr.mxu0 0.0
        %2482 = vmatpush1.xpose.msra.mxu0 0.0
        %2483 = vmatprep.subr.mxu0 0.0
        %2484 = vmatpush1.xpose.msra.mxu0 0.0
        %2485 = vmatprep.subr.mxu0 0.0
        %2486 = vmatpush1.xpose.msra.mxu0 0.0
        %2487 = vmatprep.subr.mxu0 0.0
        %2488 = vmatpush1.xpose.msra.mxu0 0.0
        %2489 = vmatprep.subr.mxu0 0.0
        %2490 = vmatpush1.xpose.msra.mxu0 0.0
        %2491 = vmatprep.subr.mxu0 0.0
        %2492 = vmatpush1.xpose.msra.mxu0 0.0
        %2493 = vmatprep.subr.mxu0 0.0
        %2494 = vmatpush1.xpose.msra.mxu0 0.0
        %2495 = vmatprep.subr.mxu0 0.0
        %2496 = vmatpush1.xpose.msra.mxu0 0.0
        %2497 = vmatprep.subr.mxu0 0.0
        %2498 = vmatpush1.xpose.msra.mxu0 0.0
        %2499 = vmatprep.subr.mxu0 0.0
        %v2500 = vand.u32 %v1695, 4294901760
        %v2501 = vsub.f32 %v1695, %v2500
        %v2502 = vand.u32 %v2501, 4294901760
        %2503 = vmatpush1.xpose.msra.mxu0 %v2502
        %2504 = vmatprep.subr.mxu0 0.0
        %v2505 = vand.u32 %v1692, 4294901760
        %v2506 = vsub.f32 %v1692, %v2505
        %v2507 = vand.u32 %v2506, 4294901760
        %2508 = vmatpush1.xpose.msra.mxu0 %v2507
        %2509 = vmatprep.subr.mxu0 0.0
        %2510 = vmatpush2.xpose.msra.mxu0 0.0
        %2511 = vmatprep.subr.mxu0 0.0
        %2512 = vmatpush2.xpose.msra.mxu0 0.0
        %2513 = vmatprep.subr.mxu0 0.0
        %2514 = vmatpush2.xpose.msra.mxu0 0.0
        %2515 = vmatprep.subr.mxu0 0.0
        %2516 = vmatpush2.xpose.msra.mxu0 0.0
        %2517 = vmatprep.subr.mxu0 0.0
        %2518 = vmatpush2.xpose.msra.mxu0 0.0
        %2519 = vmatprep.subr.mxu0 0.0
        %2520 = vmatpush2.xpose.msra.mxu0 0.0
        %2521 = vmatprep.subr.mxu0 0.0
        %2522 = vmatpush2.xpose.msra.mxu0 0.0
        %2523 = vmatprep.subr.mxu0 0.0
        %2524 = vmatpush2.xpose.msra.mxu0 0.0
        %2525 = vmatprep.subr.mxu0 0.0
        %2526 = vmatpush2.xpose.msra.mxu0 0.0
        %2527 = vmatprep.subr.mxu0 0.0
        %2528 = vmatpush2.xpose.msra.mxu0 0.0
        %2529 = vmatprep.subr.mxu0 0.0
        %2530 = vmatpush2.xpose.msra.mxu0 0.0
        %2531 = vmatprep.subr.mxu0 0.0
        %2532 = vmatpush2.xpose.msra.mxu0 0.0
        %2533 = vmatprep.subr.mxu0 0.0
        %2534 = vmatpush2.xpose.msra.mxu0 0.0
        %2535 = vmatprep.subr.mxu0 0.0
        %2536 = vmatpush2.xpose.msra.mxu0 0.0
        %2537 = vmatprep.subr.mxu0 0.0
        %2538 = vmatpush2.xpose.msra.mxu0 0.0
        %2539 = vmatprep.subr.mxu0 0.0
        %2540 = vmatpush2.xpose.msra.mxu0 0.0
        %2541 = vmatprep.mubr.f32.mxu0 0.0
        %v2542 = vand.u32 %v1644, 4294901760
        %2543 = vmatmul.mubr.f32.gmra.mxu0 %v2542
        %v2544 = vpop.f32.mrf.mxu0
        %v2545 = vadd.f32 %v2348, %v2544
        %v2546 = vpop.f32.mrf.mxu0
        %2547 = vmatprep.mubr.f32.mxu0 0.0
        %v2548 = vand.u32 %v1647, 4294901760
        %2549 = vmatmul.mubr.f32.gmra.mxu0 %v2548
        %v2550 = vpop.f32.mrf.mxu0
        %v2551 = vadd.f32 %v2356, %v2550
        %v2552 = vpop.f32.mrf.mxu0
        %2553 = vmatprep.mubr.f32.mxu0 0.0
        %v2554 = vand.u32 %v1650, 4294901760
        %2555 = vmatmul.mubr.f32.gmra.mxu0 %v2554
        %v2556 = vpop.f32.mrf.mxu0
        %v2557 = vadd.f32 %v2364, %v2556
        %v2558 = vpop.f32.mrf.mxu0
        %2559 = vmatprep.mubr.f32.mxu0 0.0
        %v2560 = vand.u32 %v1653, 4294901760
        %2561 = vmatmul.mubr.f32.gmra.mxu0 %v2560
        %v2562 = vpop.f32.mrf.mxu0
        %v2563 = vadd.f32 %v2372, %v2562
        %v2564 = vpop.f32.mrf.mxu0
        %2565 = vmatprep.mubr.f32.mxu0 0.0
        %v2566 = vand.u32 %v1656, 4294901760
        %2567 = vmatmul.mubr.f32.gmra.mxu0 %v2566
        %v2568 = vpop.f32.mrf.mxu0
        %v2569 = vadd.f32 %v2380, %v2568
        %v2570 = vpop.f32.mrf.mxu0
        %2571 = vmatprep.mubr.f32.mxu0 0.0
        %v2572 = vand.u32 %v1659, 4294901760
        %2573 = vmatmul.mubr.f32.gmra.mxu0 %v2572
        %v2574 = vpop.f32.mrf.mxu0
        %v2575 = vadd.f32 %v2388, %v2574
        %v2576 = vpop.f32.mrf.mxu0
        %2577 = vmatprep.mubr.f32.mxu0 0.0
        %v2578 = vand.u32 %v1662, 4294901760
        %2579 = vmatmul.mubr.f32.gmra.mxu0 %v2578
        %v2580 = vpop.f32.mrf.mxu0
        %v2581 = vadd.f32 %v2396, %v2580
        %v2582 = vpop.f32.mrf.mxu0
        %2583 = vmatprep.mubr.f32.mxu0 0.0
        %v2584 = vand.u32 %v1665, 4294901760
        %2585 = vmatmul.mubr.f32.gmra.mxu0 %v2584
        %v2586 = vpop.f32.mrf.mxu0
        %v2587 = vadd.f32 %v2404, %v2586
        %v2588 = vpop.f32.mrf.mxu0
        %2589 = vmatprep.mubr.f32.mxu0 0.0
        %v2590 = vand.u32 %v1668, 4294901760
        %2591 = vmatmul.mubr.f32.gmra.mxu0 %v2590
        %v2592 = vpop.f32.mrf.mxu0
        %v2593 = vadd.f32 %v2412, %v2592
        %v2594 = vpop.f32.mrf.mxu0
        %2595 = vmatprep.mubr.f32.mxu0 0.0
        %v2596 = vand.u32 %v1671, 4294901760
        %2597 = vmatmul.mubr.f32.gmra.mxu0 %v2596
        %v2598 = vpop.f32.mrf.mxu0
        %v2599 = vadd.f32 %v2420, %v2598
        %v2600 = vpop.f32.mrf.mxu0
        %2601 = vmatprep.mubr.f32.mxu0 0.0
        %v2602 = vand.u32 %v1674, 4294901760
        %2603 = vmatmul.mubr.f32.gmra.mxu0 %v2602
        %v2604 = vpop.f32.mrf.mxu0
        %v2605 = vadd.f32 %v2428, %v2604
        %v2606 = vpop.f32.mrf.mxu0
        %2607 = vmatprep.mubr.f32.mxu0 0.0
        %v2608 = vand.u32 %v1677, 4294901760
        %2609 = vmatmul.mubr.f32.gmra.mxu0 %v2608
        %v2610 = vpop.f32.mrf.mxu0
        %v2611 = vadd.f32 %v2436, %v2610
        %v2612 = vpop.f32.mrf.mxu0
        %2613 = vmatprep.mubr.f32.mxu0 0.0
        %v2614 = vand.u32 %v1680, 4294901760
        %2615 = vmatmul.mubr.f32.gmra.mxu0 %v2614
        %v2616 = vpop.f32.mrf.mxu0
        %v2617 = vadd.f32 %v2444, %v2616
        %v2618 = vpop.f32.mrf.mxu0
        %2619 = vmatprep.mubr.f32.mxu0 0.0
        %v2620 = vand.u32 %v1683, 4294901760
        %2621 = vmatmul.mubr.f32.gmra.mxu0 %v2620
        %v2622 = vpop.f32.mrf.mxu0
        %v2623 = vadd.f32 %v2452, %v2622
        %v2624 = vpop.f32.mrf.mxu0
        %2625 = vmatprep.mubr.f32.mxu0 0.0
        %v2626 = vand.u32 %v1686, 4294901760
        %2627 = vmatmul.mubr.f32.gmra.mxu0 %v2626
        %v2628 = vpop.f32.mrf.mxu0
        %v2629 = vadd.f32 %v2460, %v2628
        %v2630 = vpop.f32.mrf.mxu0
        %2631 = vmatprep.mubr.f32.mxu0 0.0
        %v2632 = vand.u32 %v1689, 4294901760
        %2633 = vmatmul.mubr.f32.gmra.mxu0 %v2632
        %v2634 = vpop.f32.mrf.mxu0
        %v2635 = vadd.f32 %v2468, %v2634
        %v2636 = vpop.f32.mrf.mxu0
        %2637 = vdwg.mxu0
        %2638 = vmatprep.subr.mxu0 0.0
        %2639 = vmatpush1.xpose.msra.mxu0 0.0
        %2640 = vmatprep.subr.mxu0 0.0
        %2641 = vmatpush1.xpose.msra.mxu0 0.0
        %2642 = vmatprep.subr.mxu0 0.0
        %2643 = vmatpush1.xpose.msra.mxu0 0.0
        %2644 = vmatprep.subr.mxu0 0.0
        %2645 = vmatpush1.xpose.msra.mxu0 0.0
        %2646 = vmatprep.subr.mxu0 0.0
        %2647 = vmatpush1.xpose.msra.mxu0 0.0
        %2648 = vmatprep.subr.mxu0 0.0
        %2649 = vmatpush1.xpose.msra.mxu0 0.0
        %2650 = vmatprep.subr.mxu0 0.0
        %2651 = vmatpush1.xpose.msra.mxu0 0.0
        %2652 = vmatprep.subr.mxu0 0.0
        %2653 = vmatpush1.xpose.msra.mxu0 0.0
        %2654 = vmatprep.subr.mxu0 0.0
        %2655 = vmatpush1.xpose.msra.mxu0 0.0
        %2656 = vmatprep.subr.mxu0 0.0
        %2657 = vmatpush1.xpose.msra.mxu0 0.0
        %2658 = vmatprep.subr.mxu0 0.0
        %2659 = vmatpush1.xpose.msra.mxu0 0.0
        %2660 = vmatprep.subr.mxu0 0.0
        %2661 = vmatpush1.xpose.msra.mxu0 0.0
        %2662 = vmatprep.subr.mxu0 0.0
        %2663 = vmatpush1.xpose.msra.mxu0 0.0
        %2664 = vmatprep.subr.mxu0 0.0
        %2665 = vmatpush1.xpose.msra.mxu0 0.0
        %2666 = vmatprep.subr.mxu0 0.0
        %v2667 = vand.u32 %v1695, 4294901760
        %2668 = vmatpush1.xpose.msra.mxu0 %v2667
        %2669 = vmatprep.subr.mxu0 0.0
        %v2670 = vand.u32 %v1692, 4294901760
        %2671 = vmatpush1.xpose.msra.mxu0 %v2670
        %2672 = vmatprep.subr.mxu0 0.0
        %2673 = vmatpush2.xpose.msra.mxu0 0.0
        %2674 = vmatprep.subr.mxu0 0.0
        %2675 = vmatpush2.xpose.msra.mxu0 0.0
        %2676 = vmatprep.subr.mxu0 0.0
        %2677 = vmatpush2.xpose.msra.mxu0 0.0
        %2678 = vmatprep.subr.mxu0 0.0
        %2679 = vmatpush2.xpose.msra.mxu0 0.0
        %2680 = vmatprep.subr.mxu0 0.0
        %2681 = vmatpush2.xpose.msra.mxu0 0.0
        %2682 = vmatprep.subr.mxu0 0.0
        %2683 = vmatpush2.xpose.msra.mxu0 0.0
        %2684 = vmatprep.subr.mxu0 0.0
        %2685 = vmatpush2.xpose.msra.mxu0 0.0
        %2686 = vmatprep.subr.mxu0 0.0
        %2687 = vmatpush2.xpose.msra.mxu0 0.0
        %2688 = vmatprep.subr.mxu0 0.0
        %2689 = vmatpush2.xpose.msra.mxu0 0.0
        %2690 = vmatprep.subr.mxu0 0.0
        %2691 = vmatpush2.xpose.msra.mxu0 0.0
        %2692 = vmatprep.subr.mxu0 0.0
        %2693 = vmatpush2.xpose.msra.mxu0 0.0
        %2694 = vmatprep.subr.mxu0 0.0
        %2695 = vmatpush2.xpose.msra.mxu0 0.0
        %2696 = vmatprep.subr.mxu0 0.0
        %2697 = vmatpush2.xpose.msra.mxu0 0.0
        %2698 = vmatprep.subr.mxu0 0.0
        %2699 = vmatpush2.xpose.msra.mxu0 0.0
        %2700 = vmatprep.subr.mxu0 0.0
        %2701 = vmatpush2.xpose.msra.mxu0 0.0
        %2702 = vmatprep.subr.mxu0 0.0
        %2703 = vmatpush2.xpose.msra.mxu0 0.0
        %2704 = vmatprep.mubr.f32.mxu0 0.0
        %v2705 = vand.u32 %v1644, 4294901760
        %2706 = vmatmul.mubr.f32.gmra.mxu0 %v2705
        %v2707 = vpop.f32.mrf.mxu0
        %v2708 = vadd.f32 %v2545, %v2707
        %v2709 = vpop.f32.mrf.mxu0
        %2710 = vmatprep.mubr.f32.mxu0 0.0
        %v2711 = vand.u32 %v1647, 4294901760
        %2712 = vmatmul.mubr.f32.gmra.mxu0 %v2711
        %v2713 = vpop.f32.mrf.mxu0
        %v2714 = vadd.f32 %v2551, %v2713
        %v2715 = vpop.f32.mrf.mxu0
        %2716 = vmatprep.mubr.f32.mxu0 0.0
        %v2717 = vand.u32 %v1650, 4294901760
        %2718 = vmatmul.mubr.f32.gmra.mxu0 %v2717
        %v2719 = vpop.f32.mrf.mxu0
        %v2720 = vadd.f32 %v2557, %v2719
        %v2721 = vpop.f32.mrf.mxu0
        %2722 = vmatprep.mubr.f32.mxu0 0.0
        %v2723 = vand.u32 %v1653, 4294901760
        %2724 = vmatmul.mubr.f32.gmra.mxu0 %v2723
        %v2725 = vpop.f32.mrf.mxu0
        %v2726 = vadd.f32 %v2563, %v2725
        %v2727 = vpop.f32.mrf.mxu0
        %2728 = vmatprep.mubr.f32.mxu0 0.0
        %v2729 = vand.u32 %v1656, 4294901760
        %2730 = vmatmul.mubr.f32.gmra.mxu0 %v2729
        %v2731 = vpop.f32.mrf.mxu0
        %v2732 = vadd.f32 %v2569, %v2731
        %v2733 = vpop.f32.mrf.mxu0
        %2734 = vmatprep.mubr.f32.mxu0 0.0
        %v2735 = vand.u32 %v1659, 4294901760
        %2736 = vmatmul.mubr.f32.gmra.mxu0 %v2735
        %v2737 = vpop.f32.mrf.mxu0
        %v2738 = vadd.f32 %v2575, %v2737
        %v2739 = vpop.f32.mrf.mxu0
        %2740 = vmatprep.mubr.f32.mxu0 0.0
        %v2741 = vand.u32 %v1662, 4294901760
        %2742 = vmatmul.mubr.f32.gmra.mxu0 %v2741
        %v2743 = vpop.f32.mrf.mxu0
        %v2744 = vadd.f32 %v2581, %v2743
        %v2745 = vpop.f32.mrf.mxu0
        %2746 = vmatprep.mubr.f32.mxu0 0.0
        %v2747 = vand.u32 %v1665, 4294901760
        %2748 = vmatmul.mubr.f32.gmra.mxu0 %v2747
        %v2749 = vpop.f32.mrf.mxu0
        %v2750 = vadd.f32 %v2587, %v2749
        %v2751 = vpop.f32.mrf.mxu0
        %2752 = vmatprep.mubr.f32.mxu0 0.0
        %v2753 = vand.u32 %v1668, 4294901760
        %2754 = vmatmul.mubr.f32.gmra.mxu0 %v2753
        %v2755 = vpop.f32.mrf.mxu0
        %v2756 = vadd.f32 %v2593, %v2755
        %v2757 = vpop.f32.mrf.mxu0
        %2758 = vmatprep.mubr.f32.mxu0 0.0
        %v2759 = vand.u32 %v1671, 4294901760
        %2760 = vmatmul.mubr.f32.gmra.mxu0 %v2759
        %v2761 = vpop.f32.mrf.mxu0
        %v2762 = vadd.f32 %v2599, %v2761
        %v2763 = vpop.f32.mrf.mxu0
        %2764 = vmatprep.mubr.f32.mxu0 0.0
        %v2765 = vand.u32 %v1674, 4294901760
        %2766 = vmatmul.mubr.f32.gmra.mxu0 %v2765
        %v2767 = vpop.f32.mrf.mxu0
        %v2768 = vadd.f32 %v2605, %v2767
        %v2769 = vpop.f32.mrf.mxu0
        %2770 = vmatprep.mubr.f32.mxu0 0.0
        %v2771 = vand.u32 %v1677, 4294901760
        %2772 = vmatmul.mubr.f32.gmra.mxu0 %v2771
        %v2773 = vpop.f32.mrf.mxu0
        %v2774 = vadd.f32 %v2611, %v2773
        %v2775 = vpop.f32.mrf.mxu0
        %2776 = vmatprep.mubr.f32.mxu0 0.0
        %v2777 = vand.u32 %v1680, 4294901760
        %2778 = vmatmul.mubr.f32.gmra.mxu0 %v2777
        %v2779 = vpop.f32.mrf.mxu0
        %v2780 = vadd.f32 %v2617, %v2779
        %v2781 = vpop.f32.mrf.mxu0
        %2782 = vmatprep.mubr.f32.mxu0 0.0
        %v2783 = vand.u32 %v1683, 4294901760
        %2784 = vmatmul.mubr.f32.gmra.mxu0 %v2783
        %v2785 = vpop.f32.mrf.mxu0
        %v2786 = vadd.f32 %v2623, %v2785
        %v2787 = vpop.f32.mrf.mxu0
        %2788 = vmatprep.mubr.f32.mxu0 0.0
        %v2789 = vand.u32 %v1686, 4294901760
        %2790 = vmatmul.mubr.f32.gmra.mxu0 %v2789
        %v2791 = vpop.f32.mrf.mxu0
        %v2792 = vadd.f32 %v2629, %v2791
        %v2793 = vpop.f32.mrf.mxu0
        %2794 = vmatprep.mubr.f32.mxu0 0.0
        %v2795 = vand.u32 %v1689, 4294901760
        %2796 = vmatmul.mubr.f32.gmra.mxu0 %v2795
        %v2797 = vpop.f32.mrf.mxu0
        %v2798 = vadd.f32 %v2635, %v2797
        %v2799 = vpop.f32.mrf.mxu0
        %2800 = vdwg.mxu0
        %2801 = vset.pattern.permute.xlu0 0
        %2802 = vperm.xlu0 %2801, %v359
        %v2803 = vpop.permute.xlu0 %2802
        %2804 = vset.pattern.permute.xlu0 0
        %2805 = vperm.xlu0 %2804, %v360
        %v2806 = vpop.permute.xlu0 %2805
        %2807 = vset.pattern.permute.xlu0 0
        %2808 = vperm.xlu0 %2807, %v361
        %v2809 = vpop.permute.xlu0 %2808
        %2810 = vset.pattern.permute.xlu0 0
        %2811 = vperm.xlu0 %2810, %v362
        %v2812 = vpop.permute.xlu0 %2811
        %2813 = vset.pattern.permute.xlu0 0
        %2814 = vperm.xlu0 %2813, %v363
        %v2815 = vpop.permute.xlu0 %2814
        %2816 = vset.pattern.permute.xlu0 0
        %2817 = vperm.xlu0 %2816, %v364
        %v2818 = vpop.permute.xlu0 %2817
        %2819 = vset.pattern.permute.xlu0 0
        %2820 = vperm.xlu0 %2819, %v365
        %v2821 = vpop.permute.xlu0 %2820
        %2822 = vset.pattern.permute.xlu0 0
        %2823 = vperm.xlu0 %2822, %v366
        %v2824 = vpop.permute.xlu0 %2823
        %2825 = vset.pattern.permute.xlu0 0
        %2826 = vperm.xlu0 %2825, %v367
        %v2827 = vpop.permute.xlu0 %2826
        %2828 = vset.pattern.permute.xlu0 0
        %2829 = vperm.xlu0 %2828, %v368
        %v2830 = vpop.permute.xlu0 %2829
        %2831 = vset.pattern.permute.xlu0 0
        %2832 = vperm.xlu0 %2831, %v369
        %v2833 = vpop.permute.xlu0 %2832
        %2834 = vset.pattern.permute.xlu0 0
        %2835 = vperm.xlu0 %2834, %v370
        %v2836 = vpop.permute.xlu0 %2835
        %2837 = vset.pattern.permute.xlu0 0
        %2838 = vperm.xlu0 %2837, %v371
        %v2839 = vpop.permute.xlu0 %2838
        %2840 = vset.pattern.permute.xlu0 0
        %2841 = vperm.xlu0 %2840, %v372
        %v2842 = vpop.permute.xlu0 %2841
        %2843 = vset.pattern.permute.xlu0 0
        %2844 = vperm.xlu0 %2843, %v373
        %v2845 = vpop.permute.xlu0 %2844
        %2846 = vset.pattern.permute.xlu0 0
        %2847 = vperm.xlu0 %2846, %v374
        %v2848 = vpop.permute.xlu0 %2847
        %vm2849 = vcmp.eq.s32.totalorder %v392, %v2803
        %vm2850 = vcmp.eq.s32.totalorder %v392, %v2806
        %vm2851 = vcmp.eq.s32.totalorder %v392, %v2809
        %vm2852 = vcmp.eq.s32.totalorder %v392, %v2812
        %vm2853 = vcmp.eq.s32.totalorder %v392, %v2815
        %vm2854 = vcmp.eq.s32.totalorder %v392, %v2818
        %vm2855 = vcmp.eq.s32.totalorder %v392, %v2821
        %vm2856 = vcmp.eq.s32.totalorder %v392, %v2824
        %vm2857 = vcmp.eq.s32.totalorder %v392, %v2827
        %vm2858 = vcmp.eq.s32.totalorder %v392, %v2830
        %vm2859 = vcmp.eq.s32.totalorder %v392, %v2833
        %vm2860 = vcmp.eq.s32.totalorder %v392, %v2836
        %vm2861 = vcmp.eq.s32.totalorder %v392, %v2839
        %vm2862 = vcmp.eq.s32.totalorder %v392, %v2842
        %vm2863 = vcmp.eq.s32.totalorder %v392, %v2845
        %vm2864 = vcmp.eq.s32.totalorder %v392, %v2848
        %v2865 = vsel %vm2849, 1, 0
        %v2866 = vsel %vm2850, 1, 0
        %v2867 = vsel %vm2851, 1, 0
        %v2868 = vsel %vm2852, 1, 0
        %v2869 = vsel %vm2853, 1, 0
        %v2870 = vsel %vm2854, 1, 0
        %v2871 = vsel %vm2855, 1, 0
        %v2872 = vsel %vm2856, 1, 0
        %v2873 = vsel %vm2857, 1, 0
        %v2874 = vsel %vm2858, 1, 0
        %v2875 = vsel %vm2859, 1, 0
        %v2876 = vsel %vm2860, 1, 0
        %v2877 = vsel %vm2861, 1, 0
        %v2878 = vsel %vm2862, 1, 0
        %v2879 = vsel %vm2863, 1, 0
        %v2880 = vsel %vm2864, 1, 0
        %v2881 = vcvt.s32.f32 %v2865
        %v2882 = vcvt.s32.f32 %v2866
        %v2883 = vcvt.s32.f32 %v2867
        %v2884 = vcvt.s32.f32 %v2868
        %v2885 = vcvt.s32.f32 %v2869
        %v2886 = vcvt.s32.f32 %v2870
        %v2887 = vcvt.s32.f32 %v2871
        %v2888 = vcvt.s32.f32 %v2872
        %v2889 = vcvt.s32.f32 %v2873
        %v2890 = vcvt.s32.f32 %v2874
        %v2891 = vcvt.s32.f32 %v2875
        %v2892 = vcvt.s32.f32 %v2876
        %v2893 = vcvt.s32.f32 %v2877
        %v2894 = vcvt.s32.f32 %v2878
        %v2895 = vcvt.s32.f32 %v2879
        %v2896 = vcvt.s32.f32 %v2880
        %v2897 = vmul.f32 %v2708, %v2881
        %v2898 = vmul.f32 %v2714, %v2882
        %v2899 = vmul.f32 %v2720, %v2883
        %v2900 = vmul.f32 %v2726, %v2884
        %v2901 = vmul.f32 %v2732, %v2885
        %v2902 = vmul.f32 %v2738, %v2886
        %v2903 = vmul.f32 %v2744, %v2887
        %v2904 = vmul.f32 %v2750, %v2888
        %v2905 = vmul.f32 %v2756, %v2889
        %v2906 = vmul.f32 %v2762, %v2890
        %v2907 = vmul.f32 %v2768, %v2891
        %v2908 = vmul.f32 %v2774, %v2892
        %v2909 = vmul.f32 %v2780, %v2893
        %v2910 = vmul.f32 %v2786, %v2894
        %v2911 = vmul.f32 %v2792, %v2895
        %v2912 = vmul.f32 %v2798, %v2896
        %v2913 = vsel %vm489, %v2897, 0.0
        %2914 = vadd.xlane.f32.xlu0 %v2913
        %v2915 = vpop.xlane.xlu0 %2914
        %v2916 = vsel %vm489, %v2898, 0.0
        %2917 = vadd.xlane.f32.xlu0 %v2916
        %v2918 = vpop.xlane.xlu0 %2917
        %v2919 = vsel %vm489, %v2899, 0.0
        %2920 = vadd.xlane.f32.xlu0 %v2919
        %v2921 = vpop.xlane.xlu0 %2920
        %v2922 = vsel %vm489, %v2900, 0.0
        %2923 = vadd.xlane.f32.xlu0 %v2922
        %v2924 = vpop.xlane.xlu0 %2923
        %v2925 = vsel %vm489, %v2901, 0.0
        %2926 = vadd.xlane.f32.xlu0 %v2925
        %v2927 = vpop.xlane.xlu0 %2926
        %v2928 = vsel %vm489, %v2902, 0.0
        %2929 = vadd.xlane.f32.xlu0 %v2928
        %v2930 = vpop.xlane.xlu0 %2929
        %v2931 = vsel %vm489, %v2903, 0.0
        %2932 = vadd.xlane.f32.xlu0 %v2931
        %v2933 = vpop.xlane.xlu0 %2932
        %v2934 = vsel %vm489, %v2904, 0.0
        %2935 = vadd.xlane.f32.xlu0 %v2934
        %v2936 = vpop.xlane.xlu0 %2935
        %v2937 = vsel %vm489, %v2905, 0.0
        %2938 = vadd.xlane.f32.xlu0 %v2937
        %v2939 = vpop.xlane.xlu0 %2938
        %v2940 = vsel %vm489, %v2906, 0.0
        %2941 = vadd.xlane.f32.xlu0 %v2940
        %v2942 = vpop.xlane.xlu0 %2941
        %v2943 = vsel %vm489, %v2907, 0.0
        %2944 = vadd.xlane.f32.xlu0 %v2943
        %v2945 = vpop.xlane.xlu0 %2944
        %v2946 = vsel %vm489, %v2908, 0.0
        %2947 = vadd.xlane.f32.xlu0 %v2946
        %v2948 = vpop.xlane.xlu0 %2947
        %v2949 = vsel %vm489, %v2909, 0.0
        %2950 = vadd.xlane.f32.xlu0 %v2949
        %v2951 = vpop.xlane.xlu0 %2950
        %v2952 = vsel %vm489, %v2910, 0.0
        %2953 = vadd.xlane.f32.xlu0 %v2952
        %v2954 = vpop.xlane.xlu0 %2953
        %v2955 = vsel %vm489, %v2911, 0.0
        %2956 = vadd.xlane.f32.xlu0 %v2955
        %v2957 = vpop.xlane.xlu0 %2956
        %v2958 = vsel %vm489, %v2912, 0.0
        %2959 = vadd.xlane.f32.xlu0 %v2958
        %v2960 = vpop.xlane.xlu0 %2959
        %2961 = vset.pattern.permute.xlu0 0
        %2962 = vperm.xlu0 %2961, %v375
        %v2963 = vpop.permute.xlu0 %2962
        %2964 = vset.pattern.permute.xlu0 0
        %2965 = vperm.xlu0 %2964, %v376
        %v2966 = vpop.permute.xlu0 %2965
        %2967 = vset.pattern.permute.xlu0 0
        %2968 = vperm.xlu0 %2967, %v377
        %v2969 = vpop.permute.xlu0 %2968
        %2970 = vset.pattern.permute.xlu0 0
        %2971 = vperm.xlu0 %2970, %v378
        %v2972 = vpop.permute.xlu0 %2971
        %2973 = vset.pattern.permute.xlu0 0
        %2974 = vperm.xlu0 %2973, %v379
        %v2975 = vpop.permute.xlu0 %2974
        %2976 = vset.pattern.permute.xlu0 0
        %2977 = vperm.xlu0 %2976, %v380
        %v2978 = vpop.permute.xlu0 %2977
        %2979 = vset.pattern.permute.xlu0 0
        %2980 = vperm.xlu0 %2979, %v381
        %v2981 = vpop.permute.xlu0 %2980
        %2982 = vset.pattern.permute.xlu0 0
        %2983 = vperm.xlu0 %2982, %v382
        %v2984 = vpop.permute.xlu0 %2983
        %2985 = vset.pattern.permute.xlu0 0
        %2986 = vperm.xlu0 %2985, %v383
        %v2987 = vpop.permute.xlu0 %2986
        %2988 = vset.pattern.permute.xlu0 0
        %2989 = vperm.xlu0 %2988, %v384
        %v2990 = vpop.permute.xlu0 %2989
        %2991 = vset.pattern.permute.xlu0 0
        %2992 = vperm.xlu0 %2991, %v385
        %v2993 = vpop.permute.xlu0 %2992
        %2994 = vset.pattern.permute.xlu0 0
        %2995 = vperm.xlu0 %2994, %v386
        %v2996 = vpop.permute.xlu0 %2995
        %2997 = vset.pattern.permute.xlu0 0
        %2998 = vperm.xlu0 %2997, %v387
        %v2999 = vpop.permute.xlu0 %2998
        %3000 = vset.pattern.permute.xlu0 0
        %3001 = vperm.xlu0 %3000, %v388
        %v3002 = vpop.permute.xlu0 %3001
        %3003 = vset.pattern.permute.xlu0 0
        %3004 = vperm.xlu0 %3003, %v389
        %v3005 = vpop.permute.xlu0 %3004
        %3006 = vset.pattern.permute.xlu0 0
        %3007 = vperm.xlu0 %3006, %v390
        %v3008 = vpop.permute.xlu0 %3007
        %vm3009 = vcmp.eq.s32.totalorder %v392, %v2963
        %vm3010 = vcmp.eq.s32.totalorder %v392, %v2966
        %vm3011 = vcmp.eq.s32.totalorder %v392, %v2969
        %vm3012 = vcmp.eq.s32.totalorder %v392, %v2972
        %vm3013 = vcmp.eq.s32.totalorder %v392, %v2975
        %vm3014 = vcmp.eq.s32.totalorder %v392, %v2978
        %vm3015 = vcmp.eq.s32.totalorder %v392, %v2981
        %vm3016 = vcmp.eq.s32.totalorder %v392, %v2984
        %vm3017 = vcmp.eq.s32.totalorder %v392, %v2987
        %vm3018 = vcmp.eq.s32.totalorder %v392, %v2990
        %vm3019 = vcmp.eq.s32.totalorder %v392, %v2993
        %vm3020 = vcmp.eq.s32.totalorder %v392, %v2996
        %vm3021 = vcmp.eq.s32.totalorder %v392, %v2999
        %vm3022 = vcmp.eq.s32.totalorder %v392, %v3002
        %vm3023 = vcmp.eq.s32.totalorder %v392, %v3005
        %vm3024 = vcmp.eq.s32.totalorder %v392, %v3008
        %3025 = vset.pattern.permute.xlu0 1
        %3026 = vperm.xlu0 %3025, %v375
        %v3027 = vpop.permute.xlu0 %3026
        %3028 = vset.pattern.permute.xlu0 1
        %3029 = vperm.xlu0 %3028, %v376
        %v3030 = vpop.permute.xlu0 %3029
        %3031 = vset.pattern.permute.xlu0 1
        %3032 = vperm.xlu0 %3031, %v377
        %v3033 = vpop.permute.xlu0 %3032
        %3034 = vset.pattern.permute.xlu0 1
        %3035 = vperm.xlu0 %3034, %v378
        %v3036 = vpop.permute.xlu0 %3035
        %3037 = vset.pattern.permute.xlu0 1
        %3038 = vperm.xlu0 %3037, %v379
        %v3039 = vpop.permute.xlu0 %3038
        %3040 = vset.pattern.permute.xlu0 1
        %3041 = vperm.xlu0 %3040, %v380
        %v3042 = vpop.permute.xlu0 %3041
        %3043 = vset.pattern.permute.xlu0 1
        %3044 = vperm.xlu0 %3043, %v381
        %v3045 = vpop.permute.xlu0 %3044
        %3046 = vset.pattern.permute.xlu0 1
        %3047 = vperm.xlu0 %3046, %v382
        %v3048 = vpop.permute.xlu0 %3047
        %3049 = vset.pattern.permute.xlu0 1
        %3050 = vperm.xlu0 %3049, %v383
        %v3051 = vpop.permute.xlu0 %3050
        %3052 = vset.pattern.permute.xlu0 1
        %3053 = vperm.xlu0 %3052, %v384
        %v3054 = vpop.permute.xlu0 %3053
        %3055 = vset.pattern.permute.xlu0 1
        %3056 = vperm.xlu0 %3055, %v385
        %v3057 = vpop.permute.xlu0 %3056
        %3058 = vset.pattern.permute.xlu0 1
        %3059 = vperm.xlu0 %3058, %v386
        %v3060 = vpop.permute.xlu0 %3059
        %3061 = vset.pattern.permute.xlu0 1
        %3062 = vperm.xlu0 %3061, %v387
        %v3063 = vpop.permute.xlu0 %3062
        %3064 = vset.pattern.permute.xlu0 1
        %3065 = vperm.xlu0 %3064, %v388
        %v3066 = vpop.permute.xlu0 %3065
        %3067 = vset.pattern.permute.xlu0 1
        %3068 = vperm.xlu0 %3067, %v389
        %v3069 = vpop.permute.xlu0 %3068
        %3070 = vset.pattern.permute.xlu0 1
        %3071 = vperm.xlu0 %3070, %v390
        %v3072 = vpop.permute.xlu0 %3071
        %vm3073 = vcmp.eq.s32.totalorder %v392, %v3027
        %vm3074 = vcmp.eq.s32.totalorder %v392, %v3030
        %vm3075 = vcmp.eq.s32.totalorder %v392, %v3033
        %vm3076 = vcmp.eq.s32.totalorder %v392, %v3036
        %vm3077 = vcmp.eq.s32.totalorder %v392, %v3039
        %vm3078 = vcmp.eq.s32.totalorder %v392, %v3042
        %vm3079 = vcmp.eq.s32.totalorder %v392, %v3045
        %vm3080 = vcmp.eq.s32.totalorder %v392, %v3048
        %vm3081 = vcmp.eq.s32.totalorder %v392, %v3051
        %vm3082 = vcmp.eq.s32.totalorder %v392, %v3054
        %vm3083 = vcmp.eq.s32.totalorder %v392, %v3057
        %vm3084 = vcmp.eq.s32.totalorder %v392, %v3060
        %vm3085 = vcmp.eq.s32.totalorder %v392, %v3063
        %vm3086 = vcmp.eq.s32.totalorder %v392, %v3066
        %vm3087 = vcmp.eq.s32.totalorder %v392, %v3069
        %vm3088 = vcmp.eq.s32.totalorder %v392, %v3072
        %vm3089 = vmor %vm3009, %vm3073
        %vm3090 = vmor %vm3010, %vm3074
        %vm3091 = vmor %vm3011, %vm3075
        %vm3092 = vmor %vm3012, %vm3076
        %vm3093 = vmor %vm3013, %vm3077
        %vm3094 = vmor %vm3014, %vm3078
        %vm3095 = vmor %vm3015, %vm3079
        %vm3096 = vmor %vm3016, %vm3080
        %vm3097 = vmor %vm3017, %vm3081
        %vm3098 = vmor %vm3018, %vm3082
        %vm3099 = vmor %vm3019, %vm3083
        %vm3100 = vmor %vm3020, %vm3084
        %vm3101 = vmor %vm3021, %vm3085
        %vm3102 = vmor %vm3022, %vm3086
        %vm3103 = vmor %vm3023, %vm3087
        %vm3104 = vmor %vm3024, %vm3088
        %3105 = vset.pattern.permute.xlu0 2
        %3106 = vperm.xlu0 %3105, %v375
        %v3107 = vpop.permute.xlu0 %3106
        %3108 = vset.pattern.permute.xlu0 2
        %3109 = vperm.xlu0 %3108, %v376
        %v3110 = vpop.permute.xlu0 %3109
        %3111 = vset.pattern.permute.xlu0 2
        %3112 = vperm.xlu0 %3111, %v377
        %v3113 = vpop.permute.xlu0 %3112
        %3114 = vset.pattern.permute.xlu0 2
        %3115 = vperm.xlu0 %3114, %v378
        %v3116 = vpop.permute.xlu0 %3115
        %3117 = vset.pattern.permute.xlu0 2
        %3118 = vperm.xlu0 %3117, %v379
        %v3119 = vpop.permute.xlu0 %3118
        %3120 = vset.pattern.permute.xlu0 2
        %3121 = vperm.xlu0 %3120, %v380
        %v3122 = vpop.permute.xlu0 %3121
        %3123 = vset.pattern.permute.xlu0 2
        %3124 = vperm.xlu0 %3123, %v381
        %v3125 = vpop.permute.xlu0 %3124
        %3126 = vset.pattern.permute.xlu0 2
        %3127 = vperm.xlu0 %3126, %v382
        %v3128 = vpop.permute.xlu0 %3127
        %3129 = vset.pattern.permute.xlu0 2
        %3130 = vperm.xlu0 %3129, %v383
        %v3131 = vpop.permute.xlu0 %3130
        %3132 = vset.pattern.permute.xlu0 2
        %3133 = vperm.xlu0 %3132, %v384
        %v3134 = vpop.permute.xlu0 %3133
        %3135 = vset.pattern.permute.xlu0 2
        %3136 = vperm.xlu0 %3135, %v385
        %v3137 = vpop.permute.xlu0 %3136
        %3138 = vset.pattern.permute.xlu0 2
        %3139 = vperm.xlu0 %3138, %v386
        %v3140 = vpop.permute.xlu0 %3139
        %3141 = vset.pattern.permute.xlu0 2
        %3142 = vperm.xlu0 %3141, %v387
        %v3143 = vpop.permute.xlu0 %3142
        %3144 = vset.pattern.permute.xlu0 2
        %3145 = vperm.xlu0 %3144, %v388
        %v3146 = vpop.permute.xlu0 %3145
        %3147 = vset.pattern.permute.xlu0 2
        %3148 = vperm.xlu0 %3147, %v389
        %v3149 = vpop.permute.xlu0 %3148
        %3150 = vset.pattern.permute.xlu0 2
        %3151 = vperm.xlu0 %3150, %v390
        %v3152 = vpop.permute.xlu0 %3151
        %vm3153 = vcmp.eq.s32.totalorder %v392, %v3107
        %vm3154 = vcmp.eq.s32.totalorder %v392, %v3110
        %vm3155 = vcmp.eq.s32.totalorder %v392, %v3113
        %vm3156 = vcmp.eq.s32.totalorder %v392, %v3116
        %vm3157 = vcmp.eq.s32.totalorder %v392, %v3119
        %vm3158 = vcmp.eq.s32.totalorder %v392, %v3122
        %vm3159 = vcmp.eq.s32.totalorder %v392, %v3125
        %vm3160 = vcmp.eq.s32.totalorder %v392, %v3128
        %vm3161 = vcmp.eq.s32.totalorder %v392, %v3131
        %vm3162 = vcmp.eq.s32.totalorder %v392, %v3134
        %vm3163 = vcmp.eq.s32.totalorder %v392, %v3137
        %vm3164 = vcmp.eq.s32.totalorder %v392, %v3140
        %vm3165 = vcmp.eq.s32.totalorder %v392, %v3143
        %vm3166 = vcmp.eq.s32.totalorder %v392, %v3146
        %vm3167 = vcmp.eq.s32.totalorder %v392, %v3149
        %vm3168 = vcmp.eq.s32.totalorder %v392, %v3152
        %vm3169 = vmor %vm3089, %vm3153
        %vm3170 = vmor %vm3090, %vm3154
        %vm3171 = vmor %vm3091, %vm3155
        %vm3172 = vmor %vm3092, %vm3156
        %vm3173 = vmor %vm3093, %vm3157
        %vm3174 = vmor %vm3094, %vm3158
        %vm3175 = vmor %vm3095, %vm3159
        %vm3176 = vmor %vm3096, %vm3160
        %vm3177 = vmor %vm3097, %vm3161
        %vm3178 = vmor %vm3098, %vm3162
        %vm3179 = vmor %vm3099, %vm3163
        %vm3180 = vmor %vm3100, %vm3164
        %vm3181 = vmor %vm3101, %vm3165
        %vm3182 = vmor %vm3102, %vm3166
        %vm3183 = vmor %vm3103, %vm3167
        %vm3184 = vmor %vm3104, %vm3168
        %v3185 = vsub.f32 %v2708, %v2915
        %v3186 = vsub.f32 %v2714, %v2918
        %v3187 = vsub.f32 %v2720, %v2921
        %v3188 = vsub.f32 %v2726, %v2924
        %v3189 = vsub.f32 %v2732, %v2927
        %v3190 = vsub.f32 %v2738, %v2930
        %v3191 = vsub.f32 %v2744, %v2933
        %v3192 = vsub.f32 %v2750, %v2936
        %v3193 = vsub.f32 %v2756, %v2939
        %v3194 = vsub.f32 %v2762, %v2942
        %v3195 = vsub.f32 %v2768, %v2945
        %v3196 = vsub.f32 %v2774, %v2948
        %v3197 = vsub.f32 %v2780, %v2951
        %v3198 = vsub.f32 %v2786, %v2954
        %v3199 = vsub.f32 %v2792, %v2957
        %v3200 = vsub.f32 %v2798, %v2960
        %v3201 = vmul.f32 %v3185, 0.0625
        %v3202 = vmul.f32 %v3186, 0.0625
        %v3203 = vmul.f32 %v3187, 0.0625
        %v3204 = vmul.f32 %v3188, 0.0625
        %v3205 = vmul.f32 %v3189, 0.0625
        %v3206 = vmul.f32 %v3190, 0.0625
        %v3207 = vmul.f32 %v3191, 0.0625
        %v3208 = vmul.f32 %v3192, 0.0625
        %v3209 = vmul.f32 %v3193, 0.0625
        %v3210 = vmul.f32 %v3194, 0.0625
        %v3211 = vmul.f32 %v3195, 0.0625
        %v3212 = vmul.f32 %v3196, 0.0625
        %v3213 = vmul.f32 %v3197, 0.0625
        %v3214 = vmul.f32 %v3198, 0.0625
        %v3215 = vmul.f32 %v3199, 0.0625
        %v3216 = vmul.f32 %v3200, 0.0625
        %v3217 = vsel %vm3169, %v3201, -inf
        %v3218 = vsel %vm3170, %v3202, -inf
        %v3219 = vsel %vm3171, %v3203, -inf
        %v3220 = vsel %vm3172, %v3204, -inf
        %v3221 = vsel %vm3173, %v3205, -inf
        %v3222 = vsel %vm3174, %v3206, -inf
        %v3223 = vsel %vm3175, %v3207, -inf
        %v3224 = vsel %vm3176, %v3208, -inf
        %v3225 = vsel %vm3177, %v3209, -inf
        %v3226 = vsel %vm3178, %v3210, -inf
        %v3227 = vsel %vm3179, %v3211, -inf
        %v3228 = vsel %vm3180, %v3212, -inf
        %v3229 = vsel %vm3181, %v3213, -inf
        %v3230 = vsel %vm3182, %v3214, -inf
        %v3231 = vsel %vm3183, %v3215, -inf
        %v3232 = vsel %vm3184, %v3216, -inf
        %v3233 = vsel %vm489, %v3217, -inf
        %3234 = vmax.xlane.f32.xlu0 %v3233
        %v3235 = vpop.xlane.xlu0 %3234
        %v3236 = vsel %vm489, %v3218, -inf
        %3237 = vmax.xlane.f32.xlu0 %v3236
        %v3238 = vpop.xlane.xlu0 %3237
        %v3239 = vsel %vm489, %v3219, -inf
        %3240 = vmax.xlane.f32.xlu0 %v3239
        %v3241 = vpop.xlane.xlu0 %3240
        %v3242 = vsel %vm489, %v3220, -inf
        %3243 = vmax.xlane.f32.xlu0 %v3242
        %v3244 = vpop.xlane.xlu0 %3243
        %v3245 = vsel %vm489, %v3221, -inf
        %3246 = vmax.xlane.f32.xlu0 %v3245
        %v3247 = vpop.xlane.xlu0 %3246
        %v3248 = vsel %vm489, %v3222, -inf
        %3249 = vmax.xlane.f32.xlu0 %v3248
        %v3250 = vpop.xlane.xlu0 %3249
        %v3251 = vsel %vm489, %v3223, -inf
        %3252 = vmax.xlane.f32.xlu0 %v3251
        %v3253 = vpop.xlane.xlu0 %3252
        %v3254 = vsel %vm489, %v3224, -inf
        %3255 = vmax.xlane.f32.xlu0 %v3254
        %v3256 = vpop.xlane.xlu0 %3255
        %v3257 = vsel %vm489, %v3225, -inf
        %3258 = vmax.xlane.f32.xlu0 %v3257
        %v3259 = vpop.xlane.xlu0 %3258
        %v3260 = vsel %vm489, %v3226, -inf
        %3261 = vmax.xlane.f32.xlu0 %v3260
        %v3262 = vpop.xlane.xlu0 %3261
        %v3263 = vsel %vm489, %v3227, -inf
        %3264 = vmax.xlane.f32.xlu0 %v3263
        %v3265 = vpop.xlane.xlu0 %3264
        %v3266 = vsel %vm489, %v3228, -inf
        %3267 = vmax.xlane.f32.xlu0 %v3266
        %v3268 = vpop.xlane.xlu0 %3267
        %v3269 = vsel %vm489, %v3229, -inf
        %3270 = vmax.xlane.f32.xlu0 %v3269
        %v3271 = vpop.xlane.xlu0 %3270
        %v3272 = vsel %vm489, %v3230, -inf
        %3273 = vmax.xlane.f32.xlu0 %v3272
        %v3274 = vpop.xlane.xlu0 %3273
        %v3275 = vsel %vm489, %v3231, -inf
        %3276 = vmax.xlane.f32.xlu0 %v3275
        %v3277 = vpop.xlane.xlu0 %3276
        %v3278 = vsel %vm489, %v3232, -inf
        %3279 = vmax.xlane.f32.xlu0 %v3278
        %v3280 = vpop.xlane.xlu0 %3279
        %v3281 = vmax.f32 %v3235, 0.0
        %v3282 = vmax.f32 %v3238, 0.0
        %v3283 = vmax.f32 %v3241, 0.0
        %v3284 = vmax.f32 %v3244, 0.0
        %v3285 = vmax.f32 %v3247, 0.0
        %v3286 = vmax.f32 %v3250, 0.0
        %v3287 = vmax.f32 %v3253, 0.0
        %v3288 = vmax.f32 %v3256, 0.0
        %v3289 = vmax.f32 %v3259, 0.0
        %v3290 = vmax.f32 %v3262, 0.0
        %v3291 = vmax.f32 %v3265, 0.0
        %v3292 = vmax.f32 %v3268, 0.0
        %v3293 = vmax.f32 %v3271, 0.0
        %v3294 = vmax.f32 %v3274, 0.0
        %v3295 = vmax.f32 %v3277, 0.0
        %v3296 = vmax.f32 %v3280, 0.0
        %v3297 = vsub.f32 %v3217, %v3281
        %v3298 = vsub.f32 %v3218, %v3282
        %v3299 = vsub.f32 %v3219, %v3283
        %v3300 = vsub.f32 %v3220, %v3284
        %v3301 = vsub.f32 %v3221, %v3285
        %v3302 = vsub.f32 %v3222, %v3286
        %v3303 = vsub.f32 %v3223, %v3287
        %v3304 = vsub.f32 %v3224, %v3288
        %v3305 = vsub.f32 %v3225, %v3289
        %v3306 = vsub.f32 %v3226, %v3290
        %v3307 = vsub.f32 %v3227, %v3291
        %v3308 = vsub.f32 %v3228, %v3292
        %v3309 = vsub.f32 %v3229, %v3293
        %v3310 = vsub.f32 %v3230, %v3294
        %v3311 = vsub.f32 %v3231, %v3295
        %v3312 = vsub.f32 %v3232, %v3296
        %v3313 = vmul.f32 %v3297, 1.442695
        %v3314 = vpow.pop %v3313
        %v3315 = vmul.f32 %v3298, 1.442695
        %v3316 = vpow.pop %v3315
        %v3317 = vmul.f32 %v3299, 1.442695
        %v3318 = vpow.pop %v3317
        %v3319 = vmul.f32 %v3300, 1.442695
        %v3320 = vpow.pop %v3319
        %v3321 = vmul.f32 %v3301, 1.442695
        %v3322 = vpow.pop %v3321
        %v3323 = vmul.f32 %v3302, 1.442695
        %v3324 = vpow.pop %v3323
        %v3325 = vmul.f32 %v3303, 1.442695
        %v3326 = vpow.pop %v3325
        %v3327 = vmul.f32 %v3304, 1.442695
        %v3328 = vpow.pop %v3327
        %v3329 = vmul.f32 %v3305, 1.442695
        %v3330 = vpow.pop %v3329
        %v3331 = vmul.f32 %v3306, 1.442695
        %v3332 = vpow.pop %v3331
        %v3333 = vmul.f32 %v3307, 1.442695
        %v3334 = vpow.pop %v3333
        %v3335 = vmul.f32 %v3308, 1.442695
        %v3336 = vpow.pop %v3335
        %v3337 = vmul.f32 %v3309, 1.442695
        %v3338 = vpow.pop %v3337
        %v3339 = vmul.f32 %v3310, 1.442695
        %v3340 = vpow.pop %v3339
        %v3341 = vmul.f32 %v3311, 1.442695
        %v3342 = vpow.pop %v3341
        %v3343 = vmul.f32 %v3312, 1.442695
        %v3344 = vpow.pop %v3343
        %v3345 = vsel %vm489, %v3314, 0.0
        %3346 = vadd.xlane.f32.xlu0 %v3345
        %v3347 = vpop.xlane.xlu0 %3346
        %v3348 = vsel %vm489, %v3316, 0.0
        %3349 = vadd.xlane.f32.xlu0 %v3348
        %v3350 = vpop.xlane.xlu0 %3349
        %v3351 = vsel %vm489, %v3318, 0.0
        %3352 = vadd.xlane.f32.xlu0 %v3351
        %v3353 = vpop.xlane.xlu0 %3352
        %v3354 = vsel %vm489, %v3320, 0.0
        %3355 = vadd.xlane.f32.xlu0 %v3354
        %v3356 = vpop.xlane.xlu0 %3355
        %v3357 = vsel %vm489, %v3322, 0.0
        %3358 = vadd.xlane.f32.xlu0 %v3357
        %v3359 = vpop.xlane.xlu0 %3358
        %v3360 = vsel %vm489, %v3324, 0.0
        %3361 = vadd.xlane.f32.xlu0 %v3360
        %v3362 = vpop.xlane.xlu0 %3361
        %v3363 = vsel %vm489, %v3326, 0.0
        %3364 = vadd.xlane.f32.xlu0 %v3363
        %v3365 = vpop.xlane.xlu0 %3364
        %v3366 = vsel %vm489, %v3328, 0.0
        %3367 = vadd.xlane.f32.xlu0 %v3366
        %v3368 = vpop.xlane.xlu0 %3367
        %v3369 = vsel %vm489, %v3330, 0.0
        %3370 = vadd.xlane.f32.xlu0 %v3369
        %v3371 = vpop.xlane.xlu0 %3370
        %v3372 = vsel %vm489, %v3332, 0.0
        %3373 = vadd.xlane.f32.xlu0 %v3372
        %v3374 = vpop.xlane.xlu0 %3373
        %v3375 = vsel %vm489, %v3334, 0.0
        %3376 = vadd.xlane.f32.xlu0 %v3375
        %v3377 = vpop.xlane.xlu0 %3376
        %v3378 = vsel %vm489, %v3336, 0.0
        %3379 = vadd.xlane.f32.xlu0 %v3378
        %v3380 = vpop.xlane.xlu0 %3379
        %v3381 = vsel %vm489, %v3338, 0.0
        %3382 = vadd.xlane.f32.xlu0 %v3381
        %v3383 = vpop.xlane.xlu0 %3382
        %v3384 = vsel %vm489, %v3340, 0.0
        %3385 = vadd.xlane.f32.xlu0 %v3384
        %v3386 = vpop.xlane.xlu0 %3385
        %v3387 = vsel %vm489, %v3342, 0.0
        %3388 = vadd.xlane.f32.xlu0 %v3387
        %v3389 = vpop.xlane.xlu0 %3388
        %v3390 = vsel %vm489, %v3344, 0.0
        %3391 = vadd.xlane.f32.xlu0 %v3390
        %v3392 = vpop.xlane.xlu0 %3391
        %v3393 = vsub.f32 0.0, %v3281
        %v3394 = vsub.f32 0.0, %v3282
        %v3395 = vsub.f32 0.0, %v3283
        %v3396 = vsub.f32 0.0, %v3284
        %v3397 = vsub.f32 0.0, %v3285
        %v3398 = vsub.f32 0.0, %v3286
        %v3399 = vsub.f32 0.0, %v3287
        %v3400 = vsub.f32 0.0, %v3288
        %v3401 = vsub.f32 0.0, %v3289
        %v3402 = vsub.f32 0.0, %v3290
        %v3403 = vsub.f32 0.0, %v3291
        %v3404 = vsub.f32 0.0, %v3292
        %v3405 = vsub.f32 0.0, %v3293
        %v3406 = vsub.f32 0.0, %v3294
        %v3407 = vsub.f32 0.0, %v3295
        %v3408 = vsub.f32 0.0, %v3296
        %v3409 = vmul.f32 %v3393, 1.442695
        %v3410 = vpow.pop %v3409
        %v3411 = vmul.f32 %v3394, 1.442695
        %v3412 = vpow.pop %v3411
        %v3413 = vmul.f32 %v3395, 1.442695
        %v3414 = vpow.pop %v3413
        %v3415 = vmul.f32 %v3396, 1.442695
        %v3416 = vpow.pop %v3415
        %v3417 = vmul.f32 %v3397, 1.442695
        %v3418 = vpow.pop %v3417
        %v3419 = vmul.f32 %v3398, 1.442695
        %v3420 = vpow.pop %v3419
        %v3421 = vmul.f32 %v3399, 1.442695
        %v3422 = vpow.pop %v3421
        %v3423 = vmul.f32 %v3400, 1.442695
        %v3424 = vpow.pop %v3423
        %v3425 = vmul.f32 %v3401, 1.442695
        %v3426 = vpow.pop %v3425
        %v3427 = vmul.f32 %v3402, 1.442695
        %v3428 = vpow.pop %v3427
        %v3429 = vmul.f32 %v3403, 1.442695
        %v3430 = vpow.pop %v3429
        %v3431 = vmul.f32 %v3404, 1.442695
        %v3432 = vpow.pop %v3431
        %v3433 = vmul.f32 %v3405, 1.442695
        %v3434 = vpow.pop %v3433
        %v3435 = vmul.f32 %v3406, 1.442695
        %v3436 = vpow.pop %v3435
        %v3437 = vmul.f32 %v3407, 1.442695
        %v3438 = vpow.pop %v3437
        %v3439 = vmul.f32 %v3408, 1.442695
        %v3440 = vpow.pop %v3439
        %v3441 = vadd.f32 %v3347, %v3410
        %v3442 = vadd.f32 %v3350, %v3412
        %v3443 = vadd.f32 %v3353, %v3414
        %v3444 = vadd.f32 %v3356, %v3416
        %v3445 = vadd.f32 %v3359, %v3418
        %v3446 = vadd.f32 %v3362, %v3420
        %v3447 = vadd.f32 %v3365, %v3422
        %v3448 = vadd.f32 %v3368, %v3424
        %v3449 = vadd.f32 %v3371, %v3426
        %v3450 = vadd.f32 %v3374, %v3428
        %v3451 = vadd.f32 %v3377, %v3430
        %v3452 = vadd.f32 %v3380, %v3432
        %v3453 = vadd.f32 %v3383, %v3434
        %v3454 = vadd.f32 %v3386, %v3436
        %v3455 = vadd.f32 %v3389, %v3438
        %v3456 = vadd.f32 %v3392, %v3440
        %v3457 = vlog2.pop %v3441
        %v3458 = vmul.f32 %v3457, 0.6931472
        %v3459 = vlog2.pop %v3442
        %v3460 = vmul.f32 %v3459, 0.6931472
        %v3461 = vlog2.pop %v3443
        %v3462 = vmul.f32 %v3461, 0.6931472
        %v3463 = vlog2.pop %v3444
        %v3464 = vmul.f32 %v3463, 0.6931472
        %v3465 = vlog2.pop %v3445
        %v3466 = vmul.f32 %v3465, 0.6931472
        %v3467 = vlog2.pop %v3446
        %v3468 = vmul.f32 %v3467, 0.6931472
        %v3469 = vlog2.pop %v3447
        %v3470 = vmul.f32 %v3469, 0.6931472
        %v3471 = vlog2.pop %v3448
        %v3472 = vmul.f32 %v3471, 0.6931472
        %v3473 = vlog2.pop %v3449
        %v3474 = vmul.f32 %v3473, 0.6931472
        %v3475 = vlog2.pop %v3450
        %v3476 = vmul.f32 %v3475, 0.6931472
        %v3477 = vlog2.pop %v3451
        %v3478 = vmul.f32 %v3477, 0.6931472
        %v3479 = vlog2.pop %v3452
        %v3480 = vmul.f32 %v3479, 0.6931472
        %v3481 = vlog2.pop %v3453
        %v3482 = vmul.f32 %v3481, 0.6931472
        %v3483 = vlog2.pop %v3454
        %v3484 = vmul.f32 %v3483, 0.6931472
        %v3485 = vlog2.pop %v3455
        %v3486 = vmul.f32 %v3485, 0.6931472
        %v3487 = vlog2.pop %v3456
        %v3488 = vmul.f32 %v3487, 0.6931472
        %v3489 = vadd.f32 %v3281, %v3458
        %v3490 = vadd.f32 %v3282, %v3460
        %v3491 = vadd.f32 %v3283, %v3462
        %v3492 = vadd.f32 %v3284, %v3464
        %v3493 = vadd.f32 %v3285, %v3466
        %v3494 = vadd.f32 %v3286, %v3468
        %v3495 = vadd.f32 %v3287, %v3470
        %v3496 = vadd.f32 %v3288, %v3472
        %v3497 = vadd.f32 %v3289, %v3474
        %v3498 = vadd.f32 %v3290, %v3476
        %v3499 = vadd.f32 %v3291, %v3478
        %v3500 = vadd.f32 %v3292, %v3480
        %v3501 = vadd.f32 %v3293, %v3482
        %v3502 = vadd.f32 %v3294, %v3484
        %v3503 = vadd.f32 %v3295, %v3486
        %v3504 = vadd.f32 %v3296, %v3488
        %v3505 = vld [vmem:[#allocation3] sm:$0x1]
        %v3506 = vadd.f32 %v3489, %v3490
        %v3507 = vadd.f32 %v3506, %v3491
        %v3508 = vadd.f32 %v3507, %v3492
        %v3509 = vadd.f32 %v3508, %v3493
        %v3510 = vadd.f32 %v3509, %v3494
        %v3511 = vadd.f32 %v3510, %v3495
        %v3512 = vadd.f32 %v3511, %v3496
        %v3513 = vadd.f32 %v3512, %v3497
        %v3514 = vadd.f32 %v3513, %v3498
        %v3515 = vadd.f32 %v3514, %v3499
        %v3516 = vadd.f32 %v3515, %v3500
        %v3517 = vadd.f32 %v3516, %v3501
        %v3518 = vadd.f32 %v3517, %v3502
        %v3519 = vadd.f32 %v3518, %v3503
        %v3520 = vadd.f32 %v3519, %v3504
        %v3521 = vrot.slane %v3520, 4
        %v3522 = vadd.f32 %v3520, %v3521
        %v3523 = vrot.slane %v3522, 2
        %v3524 = vadd.f32 %v3522, %v3523
        %v3525 = vrot.slane %v3524, 1
        %v3526 = vadd.f32 %v3524, %v3525
        %v3527 = vmul.f32 %v3526, 0.25
        %v3528 = vadd.f32 %v3505, %v3527
        %vm3529 = vcmask 0
        %3530 = vst.msk [vmem:[#allocation3] sm:$0x1] %vm3529, %v3528
        // Predicated region
        $region71: #{tpu_custom_call.1} parent=31 // pred_check
          %p3531 = pneg %p248
        $region72: #{tpu_custom_call.1} parent=31 // pred_check_branch
          %3533 = sbr.rel (%p3531) target = $region74
        $region73: #{tpu_custom_call.1} parent=31 // pred_region
          %vm3534 = vcmp.eq.s32.totalorder %v392, 0
          %v3535 = vld [vmem:[#allocation3] sm:$0x1]
          %3537 = vset.pattern.permute.xlu0 0
          %3538 = vperm.xlu0 %3537, %v3535
          %v3539 = vpop.permute.xlu0 %3538
          %v3541 = vlaneseq
          %v3542 = vshrl.u32 %v3541, 7
          %v3543 = vsub.s32 0, %v3542
          %v3544 = vrot.slane %v3539, %v3543
          %v3545 = vsel %vm3534, %v3544, 0.0
          %3546 = vst [vmem:[%s223] sm:$0x1] %v3545
        $region74: #{tpu_custom_call.1} parent=31 // pred_fallthru
          _
        %s3547 = sand.u32 %s122, 1
        %s3548 = scalar_lea.sflag [#allocation6], %s3547
        %s3549 = sand.u32 %s122, 1
        %s3550 = scalar_lea.vmem [#allocation5], %s3549
        // Predicated region
        $region75: #{tpu_custom_call.1} parent=31 // pred_check
          %p3551 = pneg %p132
        $region76: #{tpu_custom_call.1} parent=31 // pred_check_branch
          %3553 = sbr.rel (%p3551) target = $region78
        $region77: #{tpu_custom_call.1} parent=31 // pred_region
          %s3555 = ssub.s32 16, 16
          %3556 = vsyncadd %s3548, %s3555
          %s3557 = smul.addr %s22, 16
          %s3558 = scalar_lea.hbm %s4, %s3557
          %s3560 = sshll.u32 %s3550, 4
          %s3561 = int_to_ptr.vmem [resolvable:$true] %s3560
          %3563 = dma.vmem_to_hbm [thread:$0]  %s3561, 16, %s3558, %s3548
        $region78: #{tpu_custom_call.1} parent=31 // pred_fallthru
          _
      $region32: #{tpu_custom_call.1} parent=5 // pred_fallthru
        _
      %p3564 = scmp.le.s32.totalorder 2, %s13
      // Predicated region
      $region79: #{tpu_custom_call.1} parent=5 // pred_check
        %p3565 = pneg %p3564
      $region80: #{tpu_custom_call.1} parent=5 // pred_check_branch
        %3567 = sbr.rel (%p3565) target = $region82
      $region81: #{tpu_custom_call.1} parent=5 // pred_region
        %s3568 = ssub.s32 %s13, 2
        // Predicated region
        $region83: #{tpu_custom_call.1} parent=81 // pred_check
          %p3569 = pneg %p138
        $region84: #{tpu_custom_call.1} parent=81 // pred_check_branch
          %3571 = sbr.rel (%p3569) target = $region86
        $region85: #{tpu_custom_call.1} parent=81 // pred_region
          %s3572 = sand.u32 %s123, 1
          %s3573 = scalar_lea.sflag [#allocation6], %s3572
          %s3574 = sand.u32 %s123, 1
          %s3575 = scalar_lea.vmem [#allocation5], %s3574
          %3576 = dma.done %s3573, 16
        $region86: #{tpu_custom_call.1} parent=81 // pred_fallthru
          _
      $region82: #{tpu_custom_call.1} parent=5 // pred_fallthru
        _
    $region6: #{tpu_custom_call.1} parent=1 // loop_footer
      %s17 = sadd.s32 1, %s13
    $region7: #{tpu_custom_call.1} parent=1 // loop_footer_branch
      %12 = sbr.rel target = $region3
    $region8: #{tpu_custom_call.1} parent=1 // loop_exit
      _
    %3577 = vsyncpa [#allocation6], 1
    %s3578 = scalar_lea.sflag [#allocation6], 1
    %3579 = vsyncpa %s3578, 1
  %3580 = vsyncmov [#allocation4]
  %s3581 = vpop.sfrf %3580
  %p3582 = scmp.eq.s32.totalorder %s3581, 0
  %p3583 = pneg %p3582
  %3585 = shalt.err (%p3583)

</llo_original>
